<compile_context>
chip_gen: v7x
topology: tpu7x:2x2x1
jax: 0.10.0
libtpu: 0.0.40
codegen_flags: <defaults>
</compile_context>

<pallas_src>
import functools

import jax
import jax.numpy as jnp
import numpy as np
from jax.experimental import pallas as pl
from jax.experimental.pallas import tpu as pltpu

KSIZE = 7                  # spatial-attention kernel size
PAD = 3                    # padding for kernel_size=7
NTAP = KSIZE * KSIZE       # 49 taps


def _cbam_kernel(x_ref, w1_ref, w2_ref, wmask_ref, out_ref, *, W):
    """One batch tile.

    x_ref    : (Bt, C, HW)       VMEM  lane-dense input block
    w1_ref   : (Cr, C)           VMEM  fc1 weight (1x1 conv, no bias)
    w2_ref   : (C, Cr)           VMEM  fc2 weight (1x1 conv, no bias)
    wmask_ref: (NTAP, 2*HW)      VMEM  per-tap [w_avg*valid | w_max*valid] rows
    out_ref  : (Bt, C, HW)       VMEM  output block (also used as staging)
    """
    Bt, C, HW = x_ref.shape
    HW2 = 2 * HW

    x = x_ref[...]
    if x.dtype != jnp.float32:               # trace-time branch; no-op for f32
        x = x.astype(jnp.float32)

    # ---------------- Channel attention (tiny shared MLP, VPU) ----------------
    avg_p = jnp.mean(x, axis=2)                              # (Bt, C)   lane reduce
    max_p = jnp.max(x, axis=2)                               # (Bt, C)
    pooled = jnp.concatenate([avg_p, max_p], axis=0)         # (2*Bt, C) fused paths

    w1 = w1_ref[...]                                         # (Cr, C)
    w2 = w2_ref[...]                                         # (C, Cr)
    h = jnp.sum(pooled[:, None, :] * w1[None, :, :], axis=-1)    # (2*Bt, Cr)
    h = jnp.maximum(h, 0.0)                                  # ReLU per path
    o = jnp.sum(h[:, None, :] * w2[None, :, :], axis=-1)     # (2*Bt, C)
    ca = jax.nn.sigmoid(o[:Bt] + o[Bt:])                     # (Bt, C)

    x1 = x * ca[:, :, None]                                  # (Bt, C, HW)

    # Channel-pool BEFORE staging so x1 is dead during the 49-tap conv.
    avg_c = jnp.mean(x1, axis=1)                             # (Bt, HW) sublane reduce
    max_c = jnp.max(x1, axis=1)                              # (Bt, HW)

    # Stage the channel-attended activations in the output buffer instead of
    # keeping the big (Bt, C, HW) temporary alive across the spatial conv.
    out_ref[...] = x1.astype(out_ref.dtype)

    # ---------------- Spatial attention: 7x7 conv on the packed maps ----------
    # packed = [avg | max] along lanes; HW is lane-aligned so the join is free
    # and a single roll shifts both maps at once.
    packed = jnp.concatenate([avg_c, max_c], axis=-1)        # (Bt, 2*HW)

    acc = jnp.zeros((Bt, HW2), jnp.float32)
    for kh in range(KSIZE):
        for kw in range(KSIZE):
            t = kh * KSIZE + kw
            s = (kh - PAD) * W + (kw - PAD)                  # flat tap offset
            # pltpu.roll follows jnp.roll semantics (out[i] = in[(i - shift) % n]);
            # shift = -s brings element (i + s) to lane i.
            shifted = packed if s == 0 else pltpu.roll(packed, (-s) % HW2, 1)
            # wmask[t] = conv_weight[tap] * zero-pad validity.  It is zero on
            # every lane where the roll wrapped across the image / map
            # boundary, so the wrapped values never contribute.
            acc = acc + shifted * wmask_ref[t]
    conv = acc[:, :HW] + acc[:, HW:]                         # avg part + max part
    sa = jax.nn.sigmoid(conv)                                # (Bt, HW)

    out_ref[...] = (out_ref[...] * sa[:, None, :]).astype(out_ref.dtype)


def _pick_batch_tile(B, C, HW, vmem_cap):
    """VMEM-aware batch tile.

    No forced grid >= 2 (extra steps are pure per-step overhead on single-TC
    v5e/v6e); prefers an even division of B but tolerates a ragged last tile
    (batch rows are independent, so out-of-range rows only produce dropped
    outputs)."""
    budget = min(vmem_cap // 2, 24 << 20)        # conservative across generations
    per_img = C * HW * 4                         # one image block, f32
    # ~ in + out double-buffered (4x) + one live f32 temporary (x1) per image
    cap = max(1, int(budget // (5 * per_img)))
    bt = min(B, cap)
    best_div = max((d for d in range(1, bt + 1) if B % d == 0), default=1)
    if 2 * best_div >= bt:                       # even split without losing much
        bt = best_div
    return bt


@jax.jit
def cbam_block_pallas(x, w1, w2, wsp):
    """x: (B, C, H, W); w1: (Cr, C) fc1; w2: (C, Cr) fc2; wsp: (2, 7, 7) SA conv."""
    B, C, H, W = x.shape
    Cr = w1.shape[0]
    HW = H * W
    # TODO(synk): fall back to halo-slice taps when H*W is not lane-aligned.
    assert HW % 128 == 0, "flat spatial size must be a multiple of 128"

    try:
        vmem_cap = int(pltpu.get_tpu_info().vmem_capacity_bytes)
    except Exception:
        vmem_cap = 64 << 20                      # v7x floor
    Bt = _pick_batch_tile(B, C, HW, vmem_cap)
    num_blocks = pl.cdiv(B, Bt)

    x2d = x.reshape(B, C, HW)                    # free row-major reshape

    # Per-tap validity of the zero-padded 7x7 conv (row & column in range),
    # with the conv weights folded in:  wmask[t] = [w_avg[t]*valid | w_max[t]*valid].
    r = np.arange(H).reshape(H, 1)
    c = np.arange(W).reshape(1, W)
    valid_np = np.zeros((NTAP, HW), np.float32)
    for kh in range(KSIZE):
        for kw in range(KSIZE):
            v = ((r + kh - PAD >= 0) & (r + kh - PAD < H) &
                 (c + kw - PAD >= 0) & (c + kw - PAD < W))
            valid_np[kh * KSIZE + kw] = v.reshape(-1).astype(np.float32)
    valid = jnp.asarray(valid_np)                                    # (49, HW)
    w_a = wsp[0].reshape(NTAP, 1).astype(jnp.float32)                # (49, 1)
    w_m = wsp[1].reshape(NTAP, 1).astype(jnp.float32)
    wmask = jnp.concatenate([valid * w_a, valid * w_m], axis=-1)     # (49, 2*HW)

    # Scoped-VMEM limit derived from the actual footprint (with headroom).
    block_bytes = Bt * C * HW * 4
    table_bytes = ((NTAP + 7) // 8 * 8) * 2 * HW * 4
    needed = 5 * block_bytes + table_bytes + (2 << 20)
    vmem_limit = int(min(max(needed, 32 << 20), vmem_cap))

    grid_spec = pltpu.PrefetchScalarGridSpec(
        num_scalar_prefetch=0,
        grid=(num_blocks,),
        in_specs=[
            pl.BlockSpec((Bt, C, HW), lambda b: (b, 0, 0)),       # x (lane-dense)
            pl.BlockSpec((Cr, C), lambda b: (0, 0)),              # fc1 weight
            pl.BlockSpec((C, Cr), lambda b: (0, 0)),              # fc2 weight
            pl.BlockSpec((NTAP, 2 * HW), lambda b: (0, 0)),       # weight*mask table
        ],
        out_specs=pl.BlockSpec((Bt, C, HW), lambda b: (b, 0, 0)),
    )

    kernel = functools.partial(_cbam_kernel, W=W)
    out2d = pl.pallas_call(
        kernel,
        out_shape=jax.ShapeDtypeStruct((B, C, HW), x.dtype),
        grid_spec=grid_spec,
        compiler_params=pltpu.CompilerParams(
            dimension_semantics=("parallel",),
            vmem_limit_bytes=vmem_limit),
    )(x2d, w1, w2, wmask)
    return out2d.reshape(B, C, H, W)


def cbam_reference(x, w1, w2, wsp):
    """Pure-JAX reference (f32 everywhere)."""
    B, C, H, W = x.shape
    avg = jnp.mean(x, axis=(2, 3))                          # (B, C)
    mx = jnp.max(x, axis=(2, 3))                            # (B, C)

    def mlp(p):                                             # (B, C) -> (B, C)
        h = jnp.maximum(jnp.sum(p[:, None, :] * w1[None], axis=-1), 0.0)
        return jnp.sum(h[:, None, :] * w2[None], axis=-1)

    ca = jax.nn.sigmoid(mlp(avg) + mlp(mx))[:, :, None, None]
    x1 = x * ca

    avg_c = jnp.mean(x1, axis=1)                            # (B, H, W)
    max_c = jnp.max(x1, axis=1)                             # (B, H, W)
    feat = jnp.stack([avg_c, max_c], axis=1)                # (B, 2, H, W)
    fp = jnp.pad(feat, ((0, 0), (0, 0), (PAD, PAD), (PAD, PAD)))
    acc = jnp.zeros((B, H, W), jnp.float32)
    for kh in range(KSIZE):
        for kw in range(KSIZE):
            acc = acc + fp[:, 0, kh:kh + H, kw:kw + W] * wsp[0, kh, kw] \
                      + fp[:, 1, kh:kh + H, kw:kw + W] * wsp[1, kh, kw]
    sa = jax.nn.sigmoid(acc)[:, None]                       # (B, 1, H, W)
    return x1 * sa


if __name__ == "__main__":
    # cbam_block(channel=32, ratio=8, kernel_size=7)
    #   -> internal channel C = 32 // 2 = 16, hidden Cr = C // 8 = 2
    B, C, H, W = 2, 16, 16, 16
    ratio = 8
    Cr = C // ratio

    key = jax.random.PRNGKey(0)
    kx, k1, k2, k3 = jax.random.split(key, 4)

    x = jax.random.normal(kx, (B, C, H, W), dtype=jnp.float32)
    w1 = jax.random.normal(k1, (Cr, C), dtype=jnp.float32) * 0.2   # fc1 Conv2d(C, Cr, 1)
    w2 = jax.random.normal(k2, (C, Cr), dtype=jnp.float32) * 0.2   # fc2 Conv2d(Cr, C, 1)
    wsp = jax.random.normal(k3, (2, KSIZE, KSIZE), dtype=jnp.float32) * 0.1  # SA conv (1,2,7,7)

    out = jax.block_until_ready(cbam_block_pallas(x, w1, w2, wsp))

    ref = cbam_reference(x, w1, w2, wsp)
    np.testing.assert_allclose(np.asarray(out), np.asarray(ref),
                               rtol=1e-4, atol=1e-4)

    print("KERNEL_OK")
</pallas_src>

<mosaic_0001>
module attributes {stable_mosaic.version = 11 : i64} {
  func.func @_cbam_kernel(%arg0: i32, %arg1: memref<2x16x256xf32, #tpu.memory_space<vmem>>, %arg2: memref<2x16xf32, #tpu.memory_space<vmem>>, %arg3: memref<16x2xf32, #tpu.memory_space<vmem>>, %arg4: memref<49x512xf32, #tpu.memory_space<vmem>>, %arg5: memref<2x16x256xf32, #tpu.memory_space<vmem>>) attributes {dimension_semantics = [#tpu.dimension_semantics<parallel>], iteration_bounds = array<i64: 1>, scalar_prefetch = 0 : i64, scratch_operands = 0 : i64, tpu.core_type = #tpu.core_type<tc>, window_params = [{transform_indices = @transform_0, window_bounds = array<i64: 2, 16, 256>}, {pipeline_mode = #tpu.pipeline_mode<synchronous>, transform_indices = @transform_1, window_bounds = array<i64: 2, 16>}, {pipeline_mode = #tpu.pipeline_mode<synchronous>, transform_indices = @transform_2, window_bounds = array<i64: 16, 2>}, {pipeline_mode = #tpu.pipeline_mode<synchronous>, transform_indices = @transform_3, window_bounds = array<i64: 49, 512>}, {transform_indices = @transform_4, window_bounds = array<i64: 2, 16, 256>}]} {
    %c0 = arith.constant 0 : index
    %c0_0 = arith.constant 0 : index
    %c0_1 = arith.constant 0 : index
    %0 = vector.load %arg1[%c0, %c0_0, %c0_1] : memref<2x16x256xf32, #tpu.memory_space<vmem>>, vector<2x16x256xf32>
    %cst = arith.constant dense<0.000000e+00> : vector<2x16xf32>
    %1 = vector.multi_reduction <add>, %0, %cst [2] : vector<2x16x256xf32> to vector<2x16xf32>
    %cst_2 = arith.constant 2.560000e+02 : f32
    %2 = vector.broadcast %cst_2 : f32 to vector<2x16xf32>
    %3 = arith.divf %1, %2 : vector<2x16xf32>
    %cst_3 = arith.constant dense<0xFF800000> : vector<2x16xf32>
    %4 = vector.multi_reduction <maximumf>, %0, %cst_3 [2] : vector<2x16x256xf32> to vector<2x16xf32>
    %5 = tpu.concatenate %3, %4 in 0 : vector<2x16xf32>, vector<2x16xf32> -> vector<4x16xf32>
    %c0_4 = arith.constant 0 : index
    %c0_5 = arith.constant 0 : index
    %6 = vector.load %arg2[%c0_4, %c0_5] : memref<2x16xf32, #tpu.memory_space<vmem>>, vector<2x16xf32>
    %c0_6 = arith.constant 0 : index
    %c0_7 = arith.constant 0 : index
    %7 = vector.load %arg3[%c0_6, %c0_7] : memref<16x2xf32, #tpu.memory_space<vmem>>, vector<16x2xf32>
    %8 = vector.shape_cast %5 : vector<4x16xf32> to vector<4x1x16xf32>
    %9 = vector.shape_cast %6 : vector<2x16xf32> to vector<1x2x16xf32>
    %10 = vector.broadcast %8 : vector<4x1x16xf32> to vector<4x2x16xf32>
    %11 = vector.broadcast %9 : vector<1x2x16xf32> to vector<4x2x16xf32>
    %12 = arith.mulf %10, %11 : vector<4x2x16xf32>
    %cst_8 = arith.constant dense<0.000000e+00> : vector<4x2xf32>
    %13 = vector.multi_reduction <add>, %12, %cst_8 [2] : vector<4x2x16xf32> to vector<4x2xf32>
    %cst_9 = arith.constant 0.000000e+00 : f32
    %14 = vector.broadcast %cst_9 : f32 to vector<4x2xf32>
    %15 = arith.maximumf %13, %14 : vector<4x2xf32>
    %16 = vector.shape_cast %15 : vector<4x2xf32> to vector<4x1x2xf32>
    %17 = vector.shape_cast %7 : vector<16x2xf32> to vector<1x16x2xf32>
    %18 = vector.broadcast %16 : vector<4x1x2xf32> to vector<4x16x2xf32>
    %19 = vector.broadcast %17 : vector<1x16x2xf32> to vector<4x16x2xf32>
    %20 = arith.mulf %18, %19 : vector<4x16x2xf32>
    %cst_10 = arith.constant dense<0.000000e+00> : vector<4x16xf32>
    %21 = vector.multi_reduction <add>, %20, %cst_10 [2] : vector<4x16x2xf32> to vector<4x16xf32>
    %22 = vector.extract_strided_slice %21 {offsets = [0, 0], sizes = [2, 16], strides = [1, 1]} : vector<4x16xf32> to vector<2x16xf32>
    %23 = vector.extract_strided_slice %21 {offsets = [2, 0], sizes = [2, 16], strides = [1, 1]} : vector<4x16xf32> to vector<2x16xf32>
    %24 = arith.addf %22, %23 : vector<2x16xf32>
    %25 = arith.negf %24 : vector<2x16xf32>
    %26 = math.exp %25 : vector<2x16xf32>
    %cst_11 = arith.constant 1.000000e+00 : f32
    %27 = vector.broadcast %cst_11 : f32 to vector<2x16xf32>
    %28 = arith.addf %27, %26 : vector<2x16xf32>
    %29 = arith.divf %27, %28 : vector<2x16xf32>
    %30 = vector.shape_cast %29 : vector<2x16xf32> to vector<2x16x1xf32>
    %31 = vector.broadcast %30 : vector<2x16x1xf32> to vector<2x16x256xf32>
    %32 = arith.mulf %0, %31 : vector<2x16x256xf32>
    %cst_12 = arith.constant dense<0.000000e+00> : vector<2x256xf32>
    %33 = vector.multi_reduction <add>, %32, %cst_12 [1] : vector<2x16x256xf32> to vector<2x256xf32>
    %cst_13 = arith.constant 1.600000e+01 : f32
    %34 = vector.broadcast %cst_13 : f32 to vector<2x256xf32>
    %35 = arith.divf %33, %34 : vector<2x256xf32>
    %cst_14 = arith.constant dense<0xFF800000> : vector<2x256xf32>
    %36 = vector.multi_reduction <maximumf>, %32, %cst_14 [1] : vector<2x16x256xf32> to vector<2x256xf32>
    %c0_15 = arith.constant 0 : index
    %c0_16 = arith.constant 0 : index
    %c0_17 = arith.constant 0 : index
    %37 = vector.load %arg5[%c0_15, %c0_16, %c0_17] : memref<2x16x256xf32, #tpu.memory_space<vmem>>, vector<2x16x256xf32>
    tpu.vector_store %arg5[%c0_15, %c0_16, %c0_17], %32 {strides = array<i32>} : memref<2x16x256xf32, #tpu.memory_space<vmem>>, vector<2x16x256xf32>,
    %38 = tpu.concatenate %35, %36 in 1 : vector<2x256xf32>, vector<2x256xf32> -> vector<2x512xf32>
    %cst_18 = arith.constant 0.000000e+00 : f32
    %39 = vector.broadcast %cst_18 : f32 to vector<2x512xf32>
    %c51_i32 = arith.constant 51 : i32
    %40 = tpu.dynamic_rotate %38 by %c51_i32 dim 1 : vector<2x512xf32>, i32 -> vector<2x512xf32>
    %c0_19 = arith.constant 0 : index
    %c0_20 = arith.constant 0 : index
    %41 = vector.load %arg4[%c0_19, %c0_20] : memref<49x512xf32, #tpu.memory_space<vmem>>, vector<1x512xf32>
    %42 = vector.shape_cast %41 : vector<1x512xf32> to vector<512xf32>
    %43 = vector.shape_cast %42 : vector<512xf32> to vector<1x512xf32>
    %44 = vector.broadcast %43 : vector<1x512xf32> to vector<2x512xf32>
    %45 = arith.mulf %40, %44 : vector<2x512xf32>
    %46 = arith.addf %39, %45 : vector<2x512xf32>
    %c50_i32 = arith.constant 50 : i32
    %47 = tpu.dynamic_rotate %38 by %c50_i32 dim 1 : vector<2x512xf32>, i32 -> vector<2x512xf32>
    %c1 = arith.constant 1 : index
    %c0_21 = arith.constant 0 : index
    %48 = vector.load %arg4[%c1, %c0_21] : memref<49x512xf32, #tpu.memory_space<vmem>>, vector<1x512xf32>
    %49 = vector.shape_cast %48 : vector<1x512xf32> to vector<512xf32>
    %50 = vector.shape_cast %49 : vector<512xf32> to vector<1x512xf32>
    %51 = vector.broadcast %50 : vector<1x512xf32> to vector<2x512xf32>
    %52 = arith.mulf %47, %51 : vector<2x512xf32>
    %53 = arith.addf %46, %52 : vector<2x512xf32>
    %c49_i32 = arith.constant 49 : i32
    %54 = tpu.dynamic_rotate %38 by %c49_i32 dim 1 : vector<2x512xf32>, i32 -> vector<2x512xf32>
    %c2 = arith.constant 2 : index
    %c0_22 = arith.constant 0 : index
    %55 = vector.load %arg4[%c2, %c0_22] : memref<49x512xf32, #tpu.memory_space<vmem>>, vector<1x512xf32>
    %56 = vector.shape_cast %55 : vector<1x512xf32> to vector<512xf32>
    %57 = vector.shape_cast %56 : vector<512xf32> to vector<1x512xf32>
    %58 = vector.broadcast %57 : vector<1x512xf32> to vector<2x512xf32>
    %59 = arith.mulf %54, %58 : vector<2x512xf32>
    %60 = arith.addf %53, %59 : vector<2x512xf32>
    %c48_i32 = arith.constant 48 : i32
    %61 = tpu.dynamic_rotate %38 by %c48_i32 dim 1 : vector<2x512xf32>, i32 -> vector<2x512xf32>
    %c3 = arith.constant 3 : index
    %c0_23 = arith.constant 0 : index
    %62 = vector.load %arg4[%c3, %c0_23] : memref<49x512xf32, #tpu.memory_space<vmem>>, vector<1x512xf32>
    %63 = vector.shape_cast %62 : vector<1x512xf32> to vector<512xf32>
    %64 = vector.shape_cast %63 : vector<512xf32> to vector<1x512xf32>
    %65 = vector.broadcast %64 : vector<1x512xf32> to vector<2x512xf32>
    %66 = arith.mulf %61, %65 : vector<2x512xf32>
    %67 = arith.addf %60, %66 : vector<2x512xf32>
    %c47_i32 = arith.constant 47 : i32
    %68 = tpu.dynamic_rotate %38 by %c47_i32 dim 1 : vector<2x512xf32>, i32 -> vector<2x512xf32>
    %c4 = arith.constant 4 : index
    %c0_24 = arith.constant 0 : index
    %69 = vector.load %arg4[%c4, %c0_24] : memref<49x512xf32, #tpu.memory_space<vmem>>, vector<1x512xf32>
    %70 = vector.shape_cast %69 : vector<1x512xf32> to vector<512xf32>
    %71 = vector.shape_cast %70 : vector<512xf32> to vector<1x512xf32>
    %72 = vector.broadcast %71 : vector<1x512xf32> to vector<2x512xf32>
    %73 = arith.mulf %68, %72 : vector<2x512xf32>
    %74 = arith.addf %67, %73 : vector<2x512xf32>
    %c46_i32 = arith.constant 46 : i32
    %75 = tpu.dynamic_rotate %38 by %c46_i32 dim 1 : vector<2x512xf32>, i32 -> vector<2x512xf32>
    %c5 = arith.constant 5 : index
    %c0_25 = arith.constant 0 : index
    %76 = vector.load %arg4[%c5, %c0_25] : memref<49x512xf32, #tpu.memory_space<vmem>>, vector<1x512xf32>
    %77 = vector.shape_cast %76 : vector<1x512xf32> to vector<512xf32>
    %78 = vector.shape_cast %77 : vector<512xf32> to vector<1x512xf32>
    %79 = vector.broadcast %78 : vector<1x512xf32> to vector<2x512xf32>
    %80 = arith.mulf %75, %79 : vector<2x512xf32>
    %81 = arith.addf %74, %80 : vector<2x512xf32>
    %c45_i32 = arith.constant 45 : i32
    %82 = tpu.dynamic_rotate %38 by %c45_i32 dim 1 : vector<2x512xf32>, i32 -> vector<2x512xf32>
    %c6 = arith.constant 6 : index
    %c0_26 = arith.constant 0 : index
    %83 = vector.load %arg4[%c6, %c0_26] : memref<49x512xf32, #tpu.memory_space<vmem>>, vector<1x512xf32>
    %84 = vector.shape_cast %83 : vector<1x512xf32> to vector<512xf32>
    %85 = vector.shape_cast %84 : vector<512xf32> to vector<1x512xf32>
    %86 = vector.broadcast %85 : vector<1x512xf32> to vector<2x512xf32>
    %87 = arith.mulf %82, %86 : vector<2x512xf32>
    %88 = arith.addf %81, %87 : vector<2x512xf32>
    %c35_i32 = arith.constant 35 : i32
    %89 = tpu.dynamic_rotate %38 by %c35_i32 dim 1 : vector<2x512xf32>, i32 -> vector<2x512xf32>
    %c7 = arith.constant 7 : index
    %c0_27 = arith.constant 0 : index
    %90 = vector.load %arg4[%c7, %c0_27] : memref<49x512xf32, #tpu.memory_space<vmem>>, vector<1x512xf32>
    %91 = vector.shape_cast %90 : vector<1x512xf32> to vector<512xf32>
    %92 = vector.shape_cast %91 : vector<512xf32> to vector<1x512xf32>
    %93 = vector.broadcast %92 : vector<1x512xf32> to vector<2x512xf32>
    %94 = arith.mulf %89, %93 : vector<2x512xf32>
    %95 = arith.addf %88, %94 : vector<2x512xf32>
    %c34_i32 = arith.constant 34 : i32
    %96 = tpu.dynamic_rotate %38 by %c34_i32 dim 1 : vector<2x512xf32>, i32 -> vector<2x512xf32>
    %c8 = arith.constant 8 : index
    %c0_28 = arith.constant 0 : index
    %97 = vector.load %arg4[%c8, %c0_28] : memref<49x512xf32, #tpu.memory_space<vmem>>, vector<1x512xf32>
    %98 = vector.shape_cast %97 : vector<1x512xf32> to vector<512xf32>
    %99 = vector.shape_cast %98 : vector<512xf32> to vector<1x512xf32>
    %100 = vector.broadcast %99 : vector<1x512xf32> to vector<2x512xf32>
    %101 = arith.mulf %96, %100 : vector<2x512xf32>
    %102 = arith.addf %95, %101 : vector<2x512xf32>
    %c33_i32 = arith.constant 33 : i32
    %103 = tpu.dynamic_rotate %38 by %c33_i32 dim 1 : vector<2x512xf32>, i32 -> vector<2x512xf32>
    %c9 = arith.constant 9 : index
    %c0_29 = arith.constant 0 : index
    %104 = vector.load %arg4[%c9, %c0_29] : memref<49x512xf32, #tpu.memory_space<vmem>>, vector<1x512xf32>
    %105 = vector.shape_cast %104 : vector<1x512xf32> to vector<512xf32>
    %106 = vector.shape_cast %105 : vector<512xf32> to vector<1x512xf32>
    %107 = vector.broadcast %106 : vector<1x512xf32> to vector<2x512xf32>
    %108 = arith.mulf %103, %107 : vector<2x512xf32>
    %109 = arith.addf %102, %108 : vector<2x512xf32>
    %c32_i32 = arith.constant 32 : i32
    %110 = tpu.dynamic_rotate %38 by %c32_i32 dim 1 : vector<2x512xf32>, i32 -> vector<2x512xf32>
    %c10 = arith.constant 10 : index
    %c0_30 = arith.constant 0 : index
    %111 = vector.load %arg4[%c10, %c0_30] : memref<49x512xf32, #tpu.memory_space<vmem>>, vector<1x512xf32>
    %112 = vector.shape_cast %111 : vector<1x512xf32> to vector<512xf32>
    %113 = vector.shape_cast %112 : vector<512xf32> to vector<1x512xf32>
    %114 = vector.broadcast %113 : vector<1x512xf32> to vector<2x512xf32>
    %115 = arith.mulf %110, %114 : vector<2x512xf32>
    %116 = arith.addf %109, %115 : vector<2x512xf32>
    %c31_i32 = arith.constant 31 : i32
    %117 = tpu.dynamic_rotate %38 by %c31_i32 dim 1 : vector<2x512xf32>, i32 -> vector<2x512xf32>
    %c11 = arith.constant 11 : index
    %c0_31 = arith.constant 0 : index
    %118 = vector.load %arg4[%c11, %c0_31] : memref<49x512xf32, #tpu.memory_space<vmem>>, vector<1x512xf32>
    %119 = vector.shape_cast %118 : vector<1x512xf32> to vector<512xf32>
    %120 = vector.shape_cast %119 : vector<512xf32> to vector<1x512xf32>
    %121 = vector.broadcast %120 : vector<1x512xf32> to vector<2x512xf32>
    %122 = arith.mulf %117, %121 : vector<2x512xf32>
    %123 = arith.addf %116, %122 : vector<2x512xf32>
    %c30_i32 = arith.constant 30 : i32
    %124 = tpu.dynamic_rotate %38 by %c30_i32 dim 1 : vector<2x512xf32>, i32 -> vector<2x512xf32>
    %c12 = arith.constant 12 : index
    %c0_32 = arith.constant 0 : index
    %125 = vector.load %arg4[%c12, %c0_32] : memref<49x512xf32, #tpu.memory_space<vmem>>, vector<1x512xf32>
    %126 = vector.shape_cast %125 : vector<1x512xf32> to vector<512xf32>
    %127 = vector.shape_cast %126 : vector<512xf32> to vector<1x512xf32>
    %128 = vector.broadcast %127 : vector<1x512xf32> to vector<2x512xf32>
    %129 = arith.mulf %124, %128 : vector<2x512xf32>
    %130 = arith.addf %123, %129 : vector<2x512xf32>
    %c29_i32 = arith.constant 29 : i32
    %131 = tpu.dynamic_rotate %38 by %c29_i32 dim 1 : vector<2x512xf32>, i32 -> vector<2x512xf32>
    %c13 = arith.constant 13 : index
    %c0_33 = arith.constant 0 : index
    %132 = vector.load %arg4[%c13, %c0_33] : memref<49x512xf32, #tpu.memory_space<vmem>>, vector<1x512xf32>
    %133 = vector.shape_cast %132 : vector<1x512xf32> to vector<512xf32>
    %134 = vector.shape_cast %133 : vector<512xf32> to vector<1x512xf32>
    %135 = vector.broadcast %134 : vector<1x512xf32> to vector<2x512xf32>
    %136 = arith.mulf %131, %135 : vector<2x512xf32>
    %137 = arith.addf %130, %136 : vector<2x512xf32>
    %c19_i32 = arith.constant 19 : i32
    %138 = tpu.dynamic_rotate %38 by %c19_i32 dim 1 : vector<2x512xf32>, i32 -> vector<2x512xf32>
    %c14 = arith.constant 14 : index
    %c0_34 = arith.constant 0 : index
    %139 = vector.load %arg4[%c14, %c0_34] : memref<49x512xf32, #tpu.memory_space<vmem>>, vector<1x512xf32>
    %140 = vector.shape_cast %139 : vector<1x512xf32> to vector<512xf32>
    %141 = vector.shape_cast %140 : vector<512xf32> to vector<1x512xf32>
    %142 = vector.broadcast %141 : vector<1x512xf32> to vector<2x512xf32>
    %143 = arith.mulf %138, %142 : vector<2x512xf32>
    %144 = arith.addf %137, %143 : vector<2x512xf32>
    %c18_i32 = arith.constant 18 : i32
    %145 = tpu.dynamic_rotate %38 by %c18_i32 dim 1 : vector<2x512xf32>, i32 -> vector<2x512xf32>
    %c15 = arith.constant 15 : index
    %c0_35 = arith.constant 0 : index
    %146 = vector.load %arg4[%c15, %c0_35] : memref<49x512xf32, #tpu.memory_space<vmem>>, vector<1x512xf32>
    %147 = vector.shape_cast %146 : vector<1x512xf32> to vector<512xf32>
    %148 = vector.shape_cast %147 : vector<512xf32> to vector<1x512xf32>
    %149 = vector.broadcast %148 : vector<1x512xf32> to vector<2x512xf32>
    %150 = arith.mulf %145, %149 : vector<2x512xf32>
    %151 = arith.addf %144, %150 : vector<2x512xf32>
    %c17_i32 = arith.constant 17 : i32
    %152 = tpu.dynamic_rotate %38 by %c17_i32 dim 1 : vector<2x512xf32>, i32 -> vector<2x512xf32>
    %c16 = arith.constant 16 : index
    %c0_36 = arith.constant 0 : index
    %153 = vector.load %arg4[%c16, %c0_36] : memref<49x512xf32, #tpu.memory_space<vmem>>, vector<1x512xf32>
    %154 = vector.shape_cast %153 : vector<1x512xf32> to vector<512xf32>
    %155 = vector.shape_cast %154 : vector<512xf32> to vector<1x512xf32>
    %156 = vector.broadcast %155 : vector<1x512xf32> to vector<2x512xf32>
    %157 = arith.mulf %152, %156 : vector<2x512xf32>
    %158 = arith.addf %151, %157 : vector<2x512xf32>
    %c16_i32 = arith.constant 16 : i32
    %159 = tpu.dynamic_rotate %38 by %c16_i32 dim 1 : vector<2x512xf32>, i32 -> vector<2x512xf32>
    %c17 = arith.constant 17 : index
    %c0_37 = arith.constant 0 : index
    %160 = vector.load %arg4[%c17, %c0_37] : memref<49x512xf32, #tpu.memory_space<vmem>>, vector<1x512xf32>
    %161 = vector.shape_cast %160 : vector<1x512xf32> to vector<512xf32>
    %162 = vector.shape_cast %161 : vector<512xf32> to vector<1x512xf32>
    %163 = vector.broadcast %162 : vector<1x512xf32> to vector<2x512xf32>
    %164 = arith.mulf %159, %163 : vector<2x512xf32>
    %165 = arith.addf %158, %164 : vector<2x512xf32>
    %c15_i32 = arith.constant 15 : i32
    %166 = tpu.dynamic_rotate %38 by %c15_i32 dim 1 : vector<2x512xf32>, i32 -> vector<2x512xf32>
    %c18 = arith.constant 18 : index
    %c0_38 = arith.constant 0 : index
    %167 = vector.load %arg4[%c18, %c0_38] : memref<49x512xf32, #tpu.memory_space<vmem>>, vector<1x512xf32>
    %168 = vector.shape_cast %167 : vector<1x512xf32> to vector<512xf32>
    %169 = vector.shape_cast %168 : vector<512xf32> to vector<1x512xf32>
    %170 = vector.broadcast %169 : vector<1x512xf32> to vector<2x512xf32>
    %171 = arith.mulf %166, %170 : vector<2x512xf32>
    %172 = arith.addf %165, %171 : vector<2x512xf32>
    %c14_i32 = arith.constant 14 : i32
    %173 = tpu.dynamic_rotate %38 by %c14_i32 dim 1 : vector<2x512xf32>, i32 -> vector<2x512xf32>
    %c19 = arith.constant 19 : index
    %c0_39 = arith.constant 0 : index
    %174 = vector.load %arg4[%c19, %c0_39] : memref<49x512xf32, #tpu.memory_space<vmem>>, vector<1x512xf32>
    %175 = vector.shape_cast %174 : vector<1x512xf32> to vector<512xf32>
    %176 = vector.shape_cast %175 : vector<512xf32> to vector<1x512xf32>
    %177 = vector.broadcast %176 : vector<1x512xf32> to vector<2x512xf32>
    %178 = arith.mulf %173, %177 : vector<2x512xf32>
    %179 = arith.addf %172, %178 : vector<2x512xf32>
    %c13_i32 = arith.constant 13 : i32
    %180 = tpu.dynamic_rotate %38 by %c13_i32 dim 1 : vector<2x512xf32>, i32 -> vector<2x512xf32>
    %c20 = arith.constant 20 : index
    %c0_40 = arith.constant 0 : index
    %181 = vector.load %arg4[%c20, %c0_40] : memref<49x512xf32, #tpu.memory_space<vmem>>, vector<1x512xf32>
    %182 = vector.shape_cast %181 : vector<1x512xf32> to vector<512xf32>
    %183 = vector.shape_cast %182 : vector<512xf32> to vector<1x512xf32>
    %184 = vector.broadcast %183 : vector<1x512xf32> to vector<2x512xf32>
    %185 = arith.mulf %180, %184 : vector<2x512xf32>
    %186 = arith.addf %179, %185 : vector<2x512xf32>
    %c3_i32 = arith.constant 3 : i32
    %187 = tpu.dynamic_rotate %38 by %c3_i32 dim 1 : vector<2x512xf32>, i32 -> vector<2x512xf32>
    %c21 = arith.constant 21 : index
    %c0_41 = arith.constant 0 : index
    %188 = vector.load %arg4[%c21, %c0_41] : memref<49x512xf32, #tpu.memory_space<vmem>>, vector<1x512xf32>
    %189 = vector.shape_cast %188 : vector<1x512xf32> to vector<512xf32>
    %190 = vector.shape_cast %189 : vector<512xf32> to vector<1x512xf32>
    %191 = vector.broadcast %190 : vector<1x512xf32> to vector<2x512xf32>
    %192 = arith.mulf %187, %191 : vector<2x512xf32>
    %193 = arith.addf %186, %192 : vector<2x512xf32>
    %c2_i32 = arith.constant 2 : i32
    %194 = tpu.dynamic_rotate %38 by %c2_i32 dim 1 : vector<2x512xf32>, i32 -> vector<2x512xf32>
    %c22 = arith.constant 22 : index
    %c0_42 = arith.constant 0 : index
    %195 = vector.load %arg4[%c22, %c0_42] : memref<49x512xf32, #tpu.memory_space<vmem>>, vector<1x512xf32>
    %196 = vector.shape_cast %195 : vector<1x512xf32> to vector<512xf32>
    %197 = vector.shape_cast %196 : vector<512xf32> to vector<1x512xf32>
    %198 = vector.broadcast %197 : vector<1x512xf32> to vector<2x512xf32>
    %199 = arith.mulf %194, %198 : vector<2x512xf32>
    %200 = arith.addf %193, %199 : vector<2x512xf32>
    %c1_i32 = arith.constant 1 : i32
    %201 = tpu.dynamic_rotate %38 by %c1_i32 dim 1 : vector<2x512xf32>, i32 -> vector<2x512xf32>
    %c23 = arith.constant 23 : index
    %c0_43 = arith.constant 0 : index
    %202 = vector.load %arg4[%c23, %c0_43] : memref<49x512xf32, #tpu.memory_space<vmem>>, vector<1x512xf32>
    %203 = vector.shape_cast %202 : vector<1x512xf32> to vector<512xf32>
    %204 = vector.shape_cast %203 : vector<512xf32> to vector<1x512xf32>
    %205 = vector.broadcast %204 : vector<1x512xf32> to vector<2x512xf32>
    %206 = arith.mulf %201, %205 : vector<2x512xf32>
    %207 = arith.addf %200, %206 : vector<2x512xf32>
    %c24 = arith.constant 24 : index
    %c0_44 = arith.constant 0 : index
    %208 = vector.load %arg4[%c24, %c0_44] : memref<49x512xf32, #tpu.memory_space<vmem>>, vector<1x512xf32>
    %209 = vector.shape_cast %208 : vector<1x512xf32> to vector<512xf32>
    %210 = vector.shape_cast %209 : vector<512xf32> to vector<1x512xf32>
    %211 = vector.broadcast %210 : vector<1x512xf32> to vector<2x512xf32>
    %212 = arith.mulf %38, %211 : vector<2x512xf32>
    %213 = arith.addf %207, %212 : vector<2x512xf32>
    %c511_i32 = arith.constant 511 : i32
    %214 = tpu.dynamic_rotate %38 by %c511_i32 dim 1 : vector<2x512xf32>, i32 -> vector<2x512xf32>
    %c25 = arith.constant 25 : index
    %c0_45 = arith.constant 0 : index
    %215 = vector.load %arg4[%c25, %c0_45] : memref<49x512xf32, #tpu.memory_space<vmem>>, vector<1x512xf32>
    %216 = vector.shape_cast %215 : vector<1x512xf32> to vector<512xf32>
    %217 = vector.shape_cast %216 : vector<512xf32> to vector<1x512xf32>
    %218 = vector.broadcast %217 : vector<1x512xf32> to vector<2x512xf32>
    %219 = arith.mulf %214, %218 : vector<2x512xf32>
    %220 = arith.addf %213, %219 : vector<2x512xf32>
    %c510_i32 = arith.constant 510 : i32
    %221 = tpu.dynamic_rotate %38 by %c510_i32 dim 1 : vector<2x512xf32>, i32 -> vector<2x512xf32>
    %c26 = arith.constant 26 : index
    %c0_46 = arith.constant 0 : index
    %222 = vector.load %arg4[%c26, %c0_46] : memref<49x512xf32, #tpu.memory_space<vmem>>, vector<1x512xf32>
    %223 = vector.shape_cast %222 : vector<1x512xf32> to vector<512xf32>
    %224 = vector.shape_cast %223 : vector<512xf32> to vector<1x512xf32>
    %225 = vector.broadcast %224 : vector<1x512xf32> to vector<2x512xf32>
    %226 = arith.mulf %221, %225 : vector<2x512xf32>
    %227 = arith.addf %220, %226 : vector<2x512xf32>
    %c509_i32 = arith.constant 509 : i32
    %228 = tpu.dynamic_rotate %38 by %c509_i32 dim 1 : vector<2x512xf32>, i32 -> vector<2x512xf32>
    %c27 = arith.constant 27 : index
    %c0_47 = arith.constant 0 : index
    %229 = vector.load %arg4[%c27, %c0_47] : memref<49x512xf32, #tpu.memory_space<vmem>>, vector<1x512xf32>
    %230 = vector.shape_cast %229 : vector<1x512xf32> to vector<512xf32>
    %231 = vector.shape_cast %230 : vector<512xf32> to vector<1x512xf32>
    %232 = vector.broadcast %231 : vector<1x512xf32> to vector<2x512xf32>
    %233 = arith.mulf %228, %232 : vector<2x512xf32>
    %234 = arith.addf %227, %233 : vector<2x512xf32>
    %c499_i32 = arith.constant 499 : i32
    %235 = tpu.dynamic_rotate %38 by %c499_i32 dim 1 : vector<2x512xf32>, i32 -> vector<2x512xf32>
    %c28 = arith.constant 28 : index
    %c0_48 = arith.constant 0 : index
    %236 = vector.load %arg4[%c28, %c0_48] : memref<49x512xf32, #tpu.memory_space<vmem>>, vector<1x512xf32>
    %237 = vector.shape_cast %236 : vector<1x512xf32> to vector<512xf32>
    %238 = vector.shape_cast %237 : vector<512xf32> to vector<1x512xf32>
    %239 = vector.broadcast %238 : vector<1x512xf32> to vector<2x512xf32>
    %240 = arith.mulf %235, %239 : vector<2x512xf32>
    %241 = arith.addf %234, %240 : vector<2x512xf32>
    %c498_i32 = arith.constant 498 : i32
    %242 = tpu.dynamic_rotate %38 by %c498_i32 dim 1 : vector<2x512xf32>, i32 -> vector<2x512xf32>
    %c29 = arith.constant 29 : index
    %c0_49 = arith.constant 0 : index
    %243 = vector.load %arg4[%c29, %c0_49] : memref<49x512xf32, #tpu.memory_space<vmem>>, vector<1x512xf32>
    %244 = vector.shape_cast %243 : vector<1x512xf32> to vector<512xf32>
    %245 = vector.shape_cast %244 : vector<512xf32> to vector<1x512xf32>
    %246 = vector.broadcast %245 : vector<1x512xf32> to vector<2x512xf32>
    %247 = arith.mulf %242, %246 : vector<2x512xf32>
    %248 = arith.addf %241, %247 : vector<2x512xf32>
    %c497_i32 = arith.constant 497 : i32
    %249 = tpu.dynamic_rotate %38 by %c497_i32 dim 1 : vector<2x512xf32>, i32 -> vector<2x512xf32>
    %c30 = arith.constant 30 : index
    %c0_50 = arith.constant 0 : index
    %250 = vector.load %arg4[%c30, %c0_50] : memref<49x512xf32, #tpu.memory_space<vmem>>, vector<1x512xf32>
    %251 = vector.shape_cast %250 : vector<1x512xf32> to vector<512xf32>
    %252 = vector.shape_cast %251 : vector<512xf32> to vector<1x512xf32>
    %253 = vector.broadcast %252 : vector<1x512xf32> to vector<2x512xf32>
    %254 = arith.mulf %249, %253 : vector<2x512xf32>
    %255 = arith.addf %248, %254 : vector<2x512xf32>
    %c496_i32 = arith.constant 496 : i32
    %256 = tpu.dynamic_rotate %38 by %c496_i32 dim 1 : vector<2x512xf32>, i32 -> vector<2x512xf32>
    %c31 = arith.constant 31 : index
    %c0_51 = arith.constant 0 : index
    %257 = vector.load %arg4[%c31, %c0_51] : memref<49x512xf32, #tpu.memory_space<vmem>>, vector<1x512xf32>
    %258 = vector.shape_cast %257 : vector<1x512xf32> to vector<512xf32>
    %259 = vector.shape_cast %258 : vector<512xf32> to vector<1x512xf32>
    %260 = vector.broadcast %259 : vector<1x512xf32> to vector<2x512xf32>
    %261 = arith.mulf %256, %260 : vector<2x512xf32>
    %262 = arith.addf %255, %261 : vector<2x512xf32>
    %c495_i32 = arith.constant 495 : i32
    %263 = tpu.dynamic_rotate %38 by %c495_i32 dim 1 : vector<2x512xf32>, i32 -> vector<2x512xf32>
    %c32 = arith.constant 32 : index
    %c0_52 = arith.constant 0 : index
    %264 = vector.load %arg4[%c32, %c0_52] : memref<49x512xf32, #tpu.memory_space<vmem>>, vector<1x512xf32>
    %265 = vector.shape_cast %264 : vector<1x512xf32> to vector<512xf32>
    %266 = vector.shape_cast %265 : vector<512xf32> to vector<1x512xf32>
    %267 = vector.broadcast %266 : vector<1x512xf32> to vector<2x512xf32>
    %268 = arith.mulf %263, %267 : vector<2x512xf32>
    %269 = arith.addf %262, %268 : vector<2x512xf32>
    %c494_i32 = arith.constant 494 : i32
    %270 = tpu.dynamic_rotate %38 by %c494_i32 dim 1 : vector<2x512xf32>, i32 -> vector<2x512xf32>
    %c33 = arith.constant 33 : index
    %c0_53 = arith.constant 0 : index
    %271 = vector.load %arg4[%c33, %c0_53] : memref<49x512xf32, #tpu.memory_space<vmem>>, vector<1x512xf32>
    %272 = vector.shape_cast %271 : vector<1x512xf32> to vector<512xf32>
    %273 = vector.shape_cast %272 : vector<512xf32> to vector<1x512xf32>
    %274 = vector.broadcast %273 : vector<1x512xf32> to vector<2x512xf32>
    %275 = arith.mulf %270, %274 : vector<2x512xf32>
    %276 = arith.addf %269, %275 : vector<2x512xf32>
    %c493_i32 = arith.constant 493 : i32
    %277 = tpu.dynamic_rotate %38 by %c493_i32 dim 1 : vector<2x512xf32>, i32 -> vector<2x512xf32>
    %c34 = arith.constant 34 : index
    %c0_54 = arith.constant 0 : index
    %278 = vector.load %arg4[%c34, %c0_54] : memref<49x512xf32, #tpu.memory_space<vmem>>, vector<1x512xf32>
    %279 = vector.shape_cast %278 : vector<1x512xf32> to vector<512xf32>
    %280 = vector.shape_cast %279 : vector<512xf32> to vector<1x512xf32>
    %281 = vector.broadcast %280 : vector<1x512xf32> to vector<2x512xf32>
    %282 = arith.mulf %277, %281 : vector<2x512xf32>
    %283 = arith.addf %276, %282 : vector<2x512xf32>
    %c483_i32 = arith.constant 483 : i32
    %284 = tpu.dynamic_rotate %38 by %c483_i32 dim 1 : vector<2x512xf32>, i32 -> vector<2x512xf32>
    %c35 = arith.constant 35 : index
    %c0_55 = arith.constant 0 : index
    %285 = vector.load %arg4[%c35, %c0_55] : memref<49x512xf32, #tpu.memory_space<vmem>>, vector<1x512xf32>
    %286 = vector.shape_cast %285 : vector<1x512xf32> to vector<512xf32>
    %287 = vector.shape_cast %286 : vector<512xf32> to vector<1x512xf32>
    %288 = vector.broadcast %287 : vector<1x512xf32> to vector<2x512xf32>
    %289 = arith.mulf %284, %288 : vector<2x512xf32>
    %290 = arith.addf %283, %289 : vector<2x512xf32>
    %c482_i32 = arith.constant 482 : i32
    %291 = tpu.dynamic_rotate %38 by %c482_i32 dim 1 : vector<2x512xf32>, i32 -> vector<2x512xf32>
    %c36 = arith.constant 36 : index
    %c0_56 = arith.constant 0 : index
    %292 = vector.load %arg4[%c36, %c0_56] : memref<49x512xf32, #tpu.memory_space<vmem>>, vector<1x512xf32>
    %293 = vector.shape_cast %292 : vector<1x512xf32> to vector<512xf32>
    %294 = vector.shape_cast %293 : vector<512xf32> to vector<1x512xf32>
    %295 = vector.broadcast %294 : vector<1x512xf32> to vector<2x512xf32>
    %296 = arith.mulf %291, %295 : vector<2x512xf32>
    %297 = arith.addf %290, %296 : vector<2x512xf32>
    %c481_i32 = arith.constant 481 : i32
    %298 = tpu.dynamic_rotate %38 by %c481_i32 dim 1 : vector<2x512xf32>, i32 -> vector<2x512xf32>
    %c37 = arith.constant 37 : index
    %c0_57 = arith.constant 0 : index
    %299 = vector.load %arg4[%c37, %c0_57] : memref<49x512xf32, #tpu.memory_space<vmem>>, vector<1x512xf32>
    %300 = vector.shape_cast %299 : vector<1x512xf32> to vector<512xf32>
    %301 = vector.shape_cast %300 : vector<512xf32> to vector<1x512xf32>
    %302 = vector.broadcast %301 : vector<1x512xf32> to vector<2x512xf32>
    %303 = arith.mulf %298, %302 : vector<2x512xf32>
    %304 = arith.addf %297, %303 : vector<2x512xf32>
    %c480_i32 = arith.constant 480 : i32
    %305 = tpu.dynamic_rotate %38 by %c480_i32 dim 1 : vector<2x512xf32>, i32 -> vector<2x512xf32>
    %c38 = arith.constant 38 : index
    %c0_58 = arith.constant 0 : index
    %306 = vector.load %arg4[%c38, %c0_58] : memref<49x512xf32, #tpu.memory_space<vmem>>, vector<1x512xf32>
    %307 = vector.shape_cast %306 : vector<1x512xf32> to vector<512xf32>
    %308 = vector.shape_cast %307 : vector<512xf32> to vector<1x512xf32>
    %309 = vector.broadcast %308 : vector<1x512xf32> to vector<2x512xf32>
    %310 = arith.mulf %305, %309 : vector<2x512xf32>
    %311 = arith.addf %304, %310 : vector<2x512xf32>
    %c479_i32 = arith.constant 479 : i32
    %312 = tpu.dynamic_rotate %38 by %c479_i32 dim 1 : vector<2x512xf32>, i32 -> vector<2x512xf32>
    %c39 = arith.constant 39 : index
    %c0_59 = arith.constant 0 : index
    %313 = vector.load %arg4[%c39, %c0_59] : memref<49x512xf32, #tpu.memory_space<vmem>>, vector<1x512xf32>
    %314 = vector.shape_cast %313 : vector<1x512xf32> to vector<512xf32>
    %315 = vector.shape_cast %314 : vector<512xf32> to vector<1x512xf32>
    %316 = vector.broadcast %315 : vector<1x512xf32> to vector<2x512xf32>
    %317 = arith.mulf %312, %316 : vector<2x512xf32>
    %318 = arith.addf %311, %317 : vector<2x512xf32>
    %c478_i32 = arith.constant 478 : i32
    %319 = tpu.dynamic_rotate %38 by %c478_i32 dim 1 : vector<2x512xf32>, i32 -> vector<2x512xf32>
    %c40 = arith.constant 40 : index
    %c0_60 = arith.constant 0 : index
    %320 = vector.load %arg4[%c40, %c0_60] : memref<49x512xf32, #tpu.memory_space<vmem>>, vector<1x512xf32>
    %321 = vector.shape_cast %320 : vector<1x512xf32> to vector<512xf32>
    %322 = vector.shape_cast %321 : vector<512xf32> to vector<1x512xf32>
    %323 = vector.broadcast %322 : vector<1x512xf32> to vector<2x512xf32>
    %324 = arith.mulf %319, %323 : vector<2x512xf32>
    %325 = arith.addf %318, %324 : vector<2x512xf32>
    %c477_i32 = arith.constant 477 : i32
    %326 = tpu.dynamic_rotate %38 by %c477_i32 dim 1 : vector<2x512xf32>, i32 -> vector<2x512xf32>
    %c41 = arith.constant 41 : index
    %c0_61 = arith.constant 0 : index
    %327 = vector.load %arg4[%c41, %c0_61] : memref<49x512xf32, #tpu.memory_space<vmem>>, vector<1x512xf32>
    %328 = vector.shape_cast %327 : vector<1x512xf32> to vector<512xf32>
    %329 = vector.shape_cast %328 : vector<512xf32> to vector<1x512xf32>
    %330 = vector.broadcast %329 : vector<1x512xf32> to vector<2x512xf32>
    %331 = arith.mulf %326, %330 : vector<2x512xf32>
    %332 = arith.addf %325, %331 : vector<2x512xf32>
    %c467_i32 = arith.constant 467 : i32
    %333 = tpu.dynamic_rotate %38 by %c467_i32 dim 1 : vector<2x512xf32>, i32 -> vector<2x512xf32>
    %c42 = arith.constant 42 : index
    %c0_62 = arith.constant 0 : index
    %334 = vector.load %arg4[%c42, %c0_62] : memref<49x512xf32, #tpu.memory_space<vmem>>, vector<1x512xf32>
    %335 = vector.shape_cast %334 : vector<1x512xf32> to vector<512xf32>
    %336 = vector.shape_cast %335 : vector<512xf32> to vector<1x512xf32>
    %337 = vector.broadcast %336 : vector<1x512xf32> to vector<2x512xf32>
    %338 = arith.mulf %333, %337 : vector<2x512xf32>
    %339 = arith.addf %332, %338 : vector<2x512xf32>
    %c466_i32 = arith.constant 466 : i32
    %340 = tpu.dynamic_rotate %38 by %c466_i32 dim 1 : vector<2x512xf32>, i32 -> vector<2x512xf32>
    %c43 = arith.constant 43 : index
    %c0_63 = arith.constant 0 : index
    %341 = vector.load %arg4[%c43, %c0_63] : memref<49x512xf32, #tpu.memory_space<vmem>>, vector<1x512xf32>
    %342 = vector.shape_cast %341 : vector<1x512xf32> to vector<512xf32>
    %343 = vector.shape_cast %342 : vector<512xf32> to vector<1x512xf32>
    %344 = vector.broadcast %343 : vector<1x512xf32> to vector<2x512xf32>
    %345 = arith.mulf %340, %344 : vector<2x512xf32>
    %346 = arith.addf %339, %345 : vector<2x512xf32>
    %c465_i32 = arith.constant 465 : i32
    %347 = tpu.dynamic_rotate %38 by %c465_i32 dim 1 : vector<2x512xf32>, i32 -> vector<2x512xf32>
    %c44 = arith.constant 44 : index
    %c0_64 = arith.constant 0 : index
    %348 = vector.load %arg4[%c44, %c0_64] : memref<49x512xf32, #tpu.memory_space<vmem>>, vector<1x512xf32>
    %349 = vector.shape_cast %348 : vector<1x512xf32> to vector<512xf32>
    %350 = vector.shape_cast %349 : vector<512xf32> to vector<1x512xf32>
    %351 = vector.broadcast %350 : vector<1x512xf32> to vector<2x512xf32>
    %352 = arith.mulf %347, %351 : vector<2x512xf32>
    %353 = arith.addf %346, %352 : vector<2x512xf32>
    %c464_i32 = arith.constant 464 : i32
    %354 = tpu.dynamic_rotate %38 by %c464_i32 dim 1 : vector<2x512xf32>, i32 -> vector<2x512xf32>
    %c45 = arith.constant 45 : index
    %c0_65 = arith.constant 0 : index
    %355 = vector.load %arg4[%c45, %c0_65] : memref<49x512xf32, #tpu.memory_space<vmem>>, vector<1x512xf32>
    %356 = vector.shape_cast %355 : vector<1x512xf32> to vector<512xf32>
    %357 = vector.shape_cast %356 : vector<512xf32> to vector<1x512xf32>
    %358 = vector.broadcast %357 : vector<1x512xf32> to vector<2x512xf32>
    %359 = arith.mulf %354, %358 : vector<2x512xf32>
    %360 = arith.addf %353, %359 : vector<2x512xf32>
    %c463_i32 = arith.constant 463 : i32
    %361 = tpu.dynamic_rotate %38 by %c463_i32 dim 1 : vector<2x512xf32>, i32 -> vector<2x512xf32>
    %c46 = arith.constant 46 : index
    %c0_66 = arith.constant 0 : index
    %362 = vector.load %arg4[%c46, %c0_66] : memref<49x512xf32, #tpu.memory_space<vmem>>, vector<1x512xf32>
    %363 = vector.shape_cast %362 : vector<1x512xf32> to vector<512xf32>
    %364 = vector.shape_cast %363 : vector<512xf32> to vector<1x512xf32>
    %365 = vector.broadcast %364 : vector<1x512xf32> to vector<2x512xf32>
    %366 = arith.mulf %361, %365 : vector<2x512xf32>
    %367 = arith.addf %360, %366 : vector<2x512xf32>
    %c462_i32 = arith.constant 462 : i32
    %368 = tpu.dynamic_rotate %38 by %c462_i32 dim 1 : vector<2x512xf32>, i32 -> vector<2x512xf32>
    %c47 = arith.constant 47 : index
    %c0_67 = arith.constant 0 : index
    %369 = vector.load %arg4[%c47, %c0_67] : memref<49x512xf32, #tpu.memory_space<vmem>>, vector<1x512xf32>
    %370 = vector.shape_cast %369 : vector<1x512xf32> to vector<512xf32>
    %371 = vector.shape_cast %370 : vector<512xf32> to vector<1x512xf32>
    %372 = vector.broadcast %371 : vector<1x512xf32> to vector<2x512xf32>
    %373 = arith.mulf %368, %372 : vector<2x512xf32>
    %374 = arith.addf %367, %373 : vector<2x512xf32>
    %c461_i32 = arith.constant 461 : i32
    %375 = tpu.dynamic_rotate %38 by %c461_i32 dim 1 : vector<2x512xf32>, i32 -> vector<2x512xf32>
    %c48 = arith.constant 48 : index
    %c0_68 = arith.constant 0 : index
    %376 = vector.load %arg4[%c48, %c0_68] : memref<49x512xf32, #tpu.memory_space<vmem>>, vector<1x512xf32>
    %377 = vector.shape_cast %376 : vector<1x512xf32> to vector<512xf32>
    %378 = vector.shape_cast %377 : vector<512xf32> to vector<1x512xf32>
    %379 = vector.broadcast %378 : vector<1x512xf32> to vector<2x512xf32>
    %380 = arith.mulf %375, %379 : vector<2x512xf32>
    %381 = arith.addf %374, %380 : vector<2x512xf32>
    %382 = vector.extract_strided_slice %381 {offsets = [0, 0], sizes = [2, 256], strides = [1, 1]} : vector<2x512xf32> to vector<2x256xf32>
    %383 = vector.extract_strided_slice %381 {offsets = [0, 256], sizes = [2, 256], strides = [1, 1]} : vector<2x512xf32> to vector<2x256xf32>
    %384 = arith.addf %382, %383 : vector<2x256xf32>
    %385 = arith.negf %384 : vector<2x256xf32>
    %386 = math.exp %385 : vector<2x256xf32>
    %cst_69 = arith.constant 1.000000e+00 : f32
    %387 = vector.broadcast %cst_69 : f32 to vector<2x256xf32>
    %388 = arith.addf %387, %386 : vector<2x256xf32>
    %389 = arith.divf %387, %388 : vector<2x256xf32>
    %c0_70 = arith.constant 0 : index
    %c0_71 = arith.constant 0 : index
    %c0_72 = arith.constant 0 : index
    %390 = vector.load %arg5[%c0_70, %c0_71, %c0_72] : memref<2x16x256xf32, #tpu.memory_space<vmem>>, vector<2x16x256xf32>
    %391 = vector.shape_cast %389 : vector<2x256xf32> to vector<2x1x256xf32>
    %392 = vector.broadcast %391 : vector<2x1x256xf32> to vector<2x16x256xf32>
    %393 = arith.mulf %390, %392 : vector<2x16x256xf32>
    %c0_73 = arith.constant 0 : index
    %c0_74 = arith.constant 0 : index
    %c0_75 = arith.constant 0 : index
    %394 = vector.load %arg5[%c0_73, %c0_74, %c0_75] : memref<2x16x256xf32, #tpu.memory_space<vmem>>, vector<2x16x256xf32>
    tpu.vector_store %arg5[%c0_73, %c0_74, %c0_75], %393 {strides = array<i32>} : memref<2x16x256xf32, #tpu.memory_space<vmem>>, vector<2x16x256xf32>,
    return
  }
  func.func @transform_0(%arg0: i32) -> (i32, i32, i32) {
    %c0_i32 = arith.constant 0 : i32
    %c0_i32_0 = arith.constant 0 : i32
    %c0_i32_1 = arith.constant 0 : i32
    return %arg0, %c0_i32, %c0_i32_0 : i32, i32, i32
  }
  func.func @transform_1(%arg0: i32) -> (i32, i32) {
    %c0_i32 = arith.constant 0 : i32
    %c0_i32_0 = arith.constant 0 : i32
    %c0_i32_1 = arith.constant 0 : i32
    return %c0_i32, %c0_i32_0 : i32, i32
  }
  func.func @transform_2(%arg0: i32) -> (i32, i32) {
    %c0_i32 = arith.constant 0 : i32
    %c0_i32_0 = arith.constant 0 : i32
    %c0_i32_1 = arith.constant 0 : i32
    return %c0_i32, %c0_i32_0 : i32, i32
  }
  func.func @transform_3(%arg0: i32) -> (i32, i32) {
    %c0_i32 = arith.constant 0 : i32
    %c0_i32_0 = arith.constant 0 : i32
    %c0_i32_1 = arith.constant 0 : i32
    return %c0_i32, %c0_i32_0 : i32, i32
  }
  func.func @transform_4(%arg0: i32) -> (i32, i32, i32) {
    %c0_i32 = arith.constant 0 : i32
    %c0_i32_0 = arith.constant 0 : i32
    %c0_i32_1 = arith.constant 0 : i32
    return %arg0, %c0_i32, %c0_i32_0 : i32, i32, i32
  }
}

</mosaic_0001>

<llo_original>
// kernel: mul.9
$region0: #{mul.9}
  %s0 = inlined_call_operand.vmem [shape: f32[7,7], index: 0, kind: input, shape index: {}]
  %s1 = inlined_call_operand.vmem [shape: f32[49], index: 1, kind: output, shape index: {}]
  $region1: #{mul.9} parent=0
    #allocation0 [shape = 'u8[4096]{0}', space=vmem, size = 0x1000, scoped, tag = 'scoped mem for output reshape']
    %v2 = vld [vmem:[%s0] sm:$0x1]
    %vm3 = vcmask 56320
    %4 = vst.msk [vmem:[#allocation0] sm:$0x1] %vm3, %v2
    %s5 = scalar_lea.vmem %s0, 6
    %v6 = vld [vmem:[%s5] sm:$0x1]
    %7 = vrot.lane.b32.xlu0 %v6, 42
    %v8 = vpop.permute.xlu0 %7
    %vm9 = vcmask 400720
    %10 = vst.msk [vmem:[#allocation0] sm:$0x1] %vm9, %v8
    %s11 = scalar_lea.vmem %s0, 5
    %v12 = vld [vmem:[%s11] sm:$0x1]
    %13 = vrot.lane.b32.xlu0 %v12, 35
    %v14 = vpop.permute.xlu0 %13
    %vm15 = vcmask 343320
    %16 = vst.msk [vmem:[#allocation0] sm:$0x1] %vm15, %v14
    %s17 = scalar_lea.vmem %s0, 4
    %v18 = vld [vmem:[%s17] sm:$0x1]
    %19 = vrot.lane.b32.xlu0 %v18, 28
    %v20 = vpop.permute.xlu0 %19
    %vm21 = vcmask 285920
    %22 = vst.msk [vmem:[#allocation0] sm:$0x1] %vm21, %v20
    %s23 = scalar_lea.vmem %s0, 3
    %v24 = vld [vmem:[%s23] sm:$0x1]
    %25 = vrot.lane.b32.xlu0 %v24, 21
    %v26 = vpop.permute.xlu0 %25
    %vm27 = vcmask 228520
    %28 = vst.msk [vmem:[#allocation0] sm:$0x1] %vm27, %v26
    %s29 = scalar_lea.vmem %s0, 2
    %v30 = vld [vmem:[%s29] sm:$0x1]
    %31 = vrot.lane.b32.xlu0 %v30, 14
    %v32 = vpop.permute.xlu0 %31
    %vm33 = vcmask 171120
    %34 = vst.msk [vmem:[#allocation0] sm:$0x1] %vm33, %v32
    %s35 = scalar_lea.vmem %s0, 1
    %v36 = vld [vmem:[%s35] sm:$0x1]
    %37 = vrot.lane.b32.xlu0 %v36, 7
    %v38 = vpop.permute.xlu0 %37
    %vm39 = vcmask 113720
    %40 = vst.msk [vmem:[#allocation0] sm:$0x1] %vm39, %v38
    %s42 = sshllo.u32 0, 1
    %v44 = vld [vmem:[#allocation0] sm:%s42]
    %s45 = sshllo.u32 0, 1
    %46 = vst [vmem:[%s1] sm:%s45] %v44

// kernel: cbam_block_pallas.1
$region0: #{cbam_block_pallas.1}
  #allocation0 [shape = 'u32[]', space=smem, size = 0x4, offset = 0x4, fixed_abs, tag = 'smem constant byte address 0x4 - core index']
  #allocation1 [shape = 'u32[144,128]{1,0:T(1,128)}', space=vmem, size = 0x12000, scoped, tag = 'internal scratch']
  %s0 = inlined_call_operand.vmem [shape: f32[2,16,256], index: 0, kind: input, shape index: {}]
  %s1 = inlined_call_operand.vmem [shape: f32[2,16], index: 1, kind: input, shape index: {}]
  %s2 = inlined_call_operand.vmem [shape: f32[16,2], index: 2, kind: input, shape index: {}]
  %s3 = inlined_call_operand.vmem [shape: f32[49,512], index: 3, kind: input, shape index: {}]
  %s4 = inlined_call_operand.vmem [shape: f32[2,16,256], index: 4, kind: output, shape index: {}]
  %s5 = sld [smem:[#allocation0]]
  $region26: #{cbam_block_pallas.1} parent=0
    _
  %s7 = ssub.s32 1, %s5
  %s8 = scalar_select 0, %s7, %s5
  // Predicated region
  $region2: #{cbam_block_pallas.1} parent=0 // pred_check
    _
  $region3: #{cbam_block_pallas.1} parent=0 // pred_check_branch
    %10 = sbr.rel (0) target = $region5
  $region4: #{cbam_block_pallas.1} parent=0 // pred_region
    _
  $region5: #{cbam_block_pallas.1} parent=0 // pred_fallthru
    _
  // Predicated region
  $region6: #{cbam_block_pallas.1} parent=0 // pred_check
    _
  $region7: #{cbam_block_pallas.1} parent=0 // pred_check_branch
    %12 = sbr.rel (0) target = $region9
  $region8: #{cbam_block_pallas.1} parent=0 // pred_region
    _
  $region9: #{cbam_block_pallas.1} parent=0 // pred_fallthru
    _
  // Predicated region
  $region10: #{cbam_block_pallas.1} parent=0 // pred_check
    _
  $region11: #{cbam_block_pallas.1} parent=0 // pred_check_branch
    %14 = sbr.rel (0) target = $region13
  $region12: #{cbam_block_pallas.1} parent=0 // pred_region
    _
  $region13: #{cbam_block_pallas.1} parent=0 // pred_fallthru
    _
  // Predicated region
  $region14: #{cbam_block_pallas.1} parent=0 // pred_check
    _
  $region15: #{cbam_block_pallas.1} parent=0 // pred_check_branch
    %16 = sbr.rel (0) target = $region17
  $region16: #{cbam_block_pallas.1} parent=0 // pred_region
    _
  $region17: #{cbam_block_pallas.1} parent=0 // pred_fallthru
    _
  %v17 = vld [vmem:[%s0] sm:$0xff]
  %v18 = vld [vmem:[%s0 + $0x8] sm:$0xff]
  %v19 = vld [vmem:[%s0 + $0x10] sm:$0xff]
  %v20 = vld [vmem:[%s0 + $0x18] sm:$0xff]
  %v21 = vld [vmem:[%s0 + $0x20] sm:$0xff]
  %v22 = vld [vmem:[%s0 + $0x28] sm:$0xff]
  %v23 = vld [vmem:[%s0 + $0x30] sm:$0xff]
  %v24 = vld [vmem:[%s0 + $0x38] sm:$0xff]
  %v25 = vadd.f32 %v17, %v18
  %26 = vadd.xlane.f32.xlu0 %v25
  %v27 = vpop.xlane.xlu0 %26
  %v28 = vadd.f32 %v19, %v20
  %29 = vadd.xlane.f32.xlu0 %v28
  %v30 = vpop.xlane.xlu0 %29
  %v31 = vadd.f32 %v21, %v22
  %32 = vadd.xlane.f32.xlu0 %v31
  %v33 = vpop.xlane.xlu0 %32
  %v34 = vadd.f32 %v23, %v24
  %35 = vadd.xlane.f32.xlu0 %v34
  %v36 = vpop.xlane.xlu0 %35
  %v37 = vrcp.pop 256.0
  %v38 = vmul.f32 %v27, %v37
  %v39 = vmul.f32 %v30, %v37
  %v40 = vmul.f32 %v33, %v37
  %v41 = vmul.f32 %v36, %v37
  %v42 = vmax.f32 %v17, %v18
  %43 = vmax.xlane.f32.xlu0 %v42
  %v44 = vpop.xlane.xlu0 %43
  %v45 = vmax.f32 %v19, %v20
  %46 = vmax.xlane.f32.xlu0 %v45
  %v47 = vpop.xlane.xlu0 %46
  %v48 = vmax.f32 %v21, %v22
  %49 = vmax.xlane.f32.xlu0 %v48
  %v50 = vpop.xlane.xlu0 %49
  %v51 = vmax.f32 %v23, %v24
  %52 = vmax.xlane.f32.xlu0 %v51
  %v53 = vpop.xlane.xlu0 %52
  %v58 = vlaneseq
  %v59 = vand.u32 %v58, 127
  %v60 = vlaneseq
  %v61 = vshrl.u32 %v60, 7
  %v62 = vsub.s32 %v59, %v61
  %v63 = vrot.slane %v38, %v62
  %v64 = vadd.s32 %v59, 4294967288
  %v65 = vlaneseq
  %v66 = vshrl.u32 %v65, 7
  %v67 = vsub.s32 %v64, %v66
  %v68 = vrot.slane %v39, %v67
  %vm69 = vcmask 130112
  %v70 = vsel %vm69, %v68, %v63
  %v71 = vlaneseq
  %v72 = vshrl.u32 %v71, 7
  %v73 = vsub.s32 %v59, %v72
  %v74 = vrot.slane %v40, %v73
  %v75 = vlaneseq
  %v76 = vshrl.u32 %v75, 7
  %v77 = vsub.s32 %v64, %v76
  %v78 = vrot.slane %v41, %v77
  %v79 = vsel %vm69, %v78, %v74
  %vm80 = vcmask 1041409
  %v81 = vsel %vm80, %v79, %v70
  %v87 = vlaneseq
  %v88 = vshrl.u32 %v87, 7
  %v89 = vsub.s32 %v59, %v88
  %v90 = vrot.slane %v44, %v89
  %v91 = vlaneseq
  %v92 = vshrl.u32 %v91, 7
  %v93 = vsub.s32 %v64, %v92
  %v94 = vrot.slane %v47, %v93
  %v95 = vsel %vm69, %v94, %v90
  %v96 = vlaneseq
  %v97 = vshrl.u32 %v96, 7
  %v98 = vsub.s32 %v59, %v97
  %v99 = vrot.slane %v50, %v98
  %v100 = vlaneseq
  %v101 = vshrl.u32 %v100, 7
  %v102 = vsub.s32 %v64, %v101
  %v103 = vrot.slane %v53, %v102
  %v104 = vsel %vm69, %v103, %v99
  %vm105 = vcmask 1043459
  %v106 = vsel %vm105, %v104, %v95
  %vm108 = vcmask 1041408
  %v109 = vsel %vm108, %v81, %v106
  %v110 = vld [vmem:[%s1] sm:$0x3]
  %v111 = vld [vmem:[%s2] sm:$0xff]
  %v112 = vld [vmem:[%s2 + $0x8] sm:$0xff]
  %v115 = vunpack.c.l.s4 1966171168
  %v116 = vunpack.c.0.s8 %v115
  %v117 = vlaneseq
  %v118 = vshrl.u32 %v117, 7
  %v119 = vsub.s32 %v116, %v118
  %v120 = vrot.slane %v109, %v119
  %v121 = vcombine.high %v120, %v120
  %v123 = vunpack.c.l.s4 1966171168
  %v124 = vunpack.c.0.s8 %v123
  %v125 = vlaneseq
  %v126 = vshrl.u32 %v125, 7
  %v127 = vsub.s32 %v124, %v126
  %v128 = vrot.slane %v120, %v127
  %v130 = vunpack.c.l.s4 1966171168
  %v131 = vunpack.c.0.s8 %v130
  %v132 = vlaneseq
  %v133 = vshrl.u32 %v132, 7
  %v134 = vsub.s32 %v131, %v133
  %v135 = vrot.slane %v121, %v134
  %v136 = vcombine.high %v128, %v128
  %v137 = vcombine.high %v135, %v135
  %v138 = vlaneseq
  %v139 = vshrl.u32 %v138, 7
  %v140 = vsub.s32 0, %v139
  %v141 = vrot.slane %v128, %v140
  %v142 = vlaneseq
  %v143 = vshrl.u32 %v142, 7
  %v144 = vsub.s32 0, %v143
  %v145 = vrot.slane %v135, %v144
  %v146 = vlaneseq
  %v147 = vshrl.u32 %v146, 7
  %v148 = vsub.s32 0, %v147
  %v149 = vrot.slane %v136, %v148
  %v150 = vlaneseq
  %v151 = vshrl.u32 %v150, 7
  %v152 = vsub.s32 0, %v151
  %v153 = vrot.slane %v137, %v152
  %v158 = vmul.f32 %v141, %v110
  %v159 = vmul.f32 %v145, %v110
  %v160 = vmul.f32 %v149, %v110
  %v161 = vmul.f32 %v153, %v110
  %vm162 = vcmask 123904
  %v163 = vsel %vm162, %v158, 0.0
  %164 = vadd.xlane.f32.xlu0 %v163
  %v165 = vpop.xlane.xlu0 %164
  %v166 = vsel %vm162, %v159, 0.0
  %167 = vadd.xlane.f32.xlu0 %v166
  %v168 = vpop.xlane.xlu0 %167
  %v169 = vsel %vm162, %v160, 0.0
  %170 = vadd.xlane.f32.xlu0 %v169
  %v171 = vpop.xlane.xlu0 %170
  %v172 = vsel %vm162, %v161, 0.0
  %173 = vadd.xlane.f32.xlu0 %v172
  %v174 = vpop.xlane.xlu0 %173
  %v175 = vmax.f32 %v165, 0.0
  %v176 = vmax.f32 %v168, 0.0
  %v177 = vmax.f32 %v171, 0.0
  %v178 = vmax.f32 %v174, 0.0
  %v181 = vlaneseq
  %v182 = vshrl.u32 %v181, 7
  %v183 = vsub.s32 0, %v182
  %v184 = vrot.slane %v111, %v183
  %186 = vbcast.lane.b32.xlu0 %v184, 256
  %v187 = vpop.permute.xlu0 %186
  %v188 = vlaneseq
  %v189 = vshrl.u32 %v188, 7
  %v190 = vsub.s32 1, %v189
  %v191 = vrot.slane %v111, %v190
  %193 = vbcast.lane.b32.xlu0 %v191, 256
  %v194 = vpop.permute.xlu0 %193
  %v195 = vlaneseq
  %v196 = vshrl.u32 %v195, 7
  %v197 = vsub.s32 2, %v196
  %v198 = vrot.slane %v111, %v197
  %200 = vbcast.lane.b32.xlu0 %v198, 256
  %v201 = vpop.permute.xlu0 %200
  %v202 = vlaneseq
  %v203 = vshrl.u32 %v202, 7
  %v204 = vsub.s32 3, %v203
  %v205 = vrot.slane %v111, %v204
  %207 = vbcast.lane.b32.xlu0 %v205, 256
  %v208 = vpop.permute.xlu0 %207
  %v209 = vlaneseq
  %v210 = vshrl.u32 %v209, 7
  %v211 = vsub.s32 4, %v210
  %v212 = vrot.slane %v111, %v211
  %214 = vbcast.lane.b32.xlu0 %v212, 256
  %v215 = vpop.permute.xlu0 %214
  %v216 = vlaneseq
  %v217 = vshrl.u32 %v216, 7
  %v218 = vsub.s32 5, %v217
  %v219 = vrot.slane %v111, %v218
  %221 = vbcast.lane.b32.xlu0 %v219, 256
  %v222 = vpop.permute.xlu0 %221
  %v223 = vlaneseq
  %v224 = vshrl.u32 %v223, 7
  %v225 = vsub.s32 6, %v224
  %v226 = vrot.slane %v111, %v225
  %228 = vbcast.lane.b32.xlu0 %v226, 256
  %v229 = vpop.permute.xlu0 %228
  %v230 = vlaneseq
  %v231 = vshrl.u32 %v230, 7
  %v232 = vsub.s32 7, %v231
  %v233 = vrot.slane %v111, %v232
  %235 = vbcast.lane.b32.xlu0 %v233, 256
  %v236 = vpop.permute.xlu0 %235
  %v237 = vlaneseq
  %v238 = vshrl.u32 %v237, 7
  %v239 = vsub.s32 0, %v238
  %v240 = vrot.slane %v112, %v239
  %242 = vbcast.lane.b32.xlu0 %v240, 256
  %v243 = vpop.permute.xlu0 %242
  %v244 = vlaneseq
  %v245 = vshrl.u32 %v244, 7
  %v246 = vsub.s32 1, %v245
  %v247 = vrot.slane %v112, %v246
  %249 = vbcast.lane.b32.xlu0 %v247, 256
  %v250 = vpop.permute.xlu0 %249
  %v251 = vlaneseq
  %v252 = vshrl.u32 %v251, 7
  %v253 = vsub.s32 2, %v252
  %v254 = vrot.slane %v112, %v253
  %256 = vbcast.lane.b32.xlu0 %v254, 256
  %v257 = vpop.permute.xlu0 %256
  %v258 = vlaneseq
  %v259 = vshrl.u32 %v258, 7
  %v260 = vsub.s32 3, %v259
  %v261 = vrot.slane %v112, %v260
  %263 = vbcast.lane.b32.xlu0 %v261, 256
  %v264 = vpop.permute.xlu0 %263
  %v265 = vlaneseq
  %v266 = vshrl.u32 %v265, 7
  %v267 = vsub.s32 4, %v266
  %v268 = vrot.slane %v112, %v267
  %270 = vbcast.lane.b32.xlu0 %v268, 256
  %v271 = vpop.permute.xlu0 %270
  %v272 = vlaneseq
  %v273 = vshrl.u32 %v272, 7
  %v274 = vsub.s32 5, %v273
  %v275 = vrot.slane %v112, %v274
  %277 = vbcast.lane.b32.xlu0 %v275, 256
  %v278 = vpop.permute.xlu0 %277
  %v279 = vlaneseq
  %v280 = vshrl.u32 %v279, 7
  %v281 = vsub.s32 6, %v280
  %v282 = vrot.slane %v112, %v281
  %284 = vbcast.lane.b32.xlu0 %v282, 256
  %v285 = vpop.permute.xlu0 %284
  %v286 = vlaneseq
  %v287 = vshrl.u32 %v286, 7
  %v288 = vsub.s32 7, %v287
  %v289 = vrot.slane %v112, %v288
  %291 = vbcast.lane.b32.xlu0 %v289, 256
  %v292 = vpop.permute.xlu0 %291
  %v309 = vmul.f32 %v175, %v187
  %v310 = vmul.f32 %v175, %v194
  %v311 = vmul.f32 %v175, %v201
  %v312 = vmul.f32 %v175, %v208
  %v313 = vmul.f32 %v175, %v215
  %v314 = vmul.f32 %v175, %v222
  %v315 = vmul.f32 %v175, %v229
  %v316 = vmul.f32 %v175, %v236
  %v317 = vmul.f32 %v175, %v243
  %v318 = vmul.f32 %v175, %v250
  %v319 = vmul.f32 %v175, %v257
  %v320 = vmul.f32 %v175, %v264
  %v321 = vmul.f32 %v175, %v271
  %v322 = vmul.f32 %v175, %v278
  %v323 = vmul.f32 %v175, %v285
  %v324 = vmul.f32 %v175, %v292
  %v325 = vmul.f32 %v176, %v187
  %v326 = vmul.f32 %v176, %v194
  %v327 = vmul.f32 %v176, %v201
  %v328 = vmul.f32 %v176, %v208
  %v329 = vmul.f32 %v176, %v215
  %v330 = vmul.f32 %v176, %v222
  %v331 = vmul.f32 %v176, %v229
  %v332 = vmul.f32 %v176, %v236
  %v333 = vmul.f32 %v176, %v243
  %v334 = vmul.f32 %v176, %v250
  %v335 = vmul.f32 %v176, %v257
  %v336 = vmul.f32 %v176, %v264
  %v337 = vmul.f32 %v176, %v271
  %v338 = vmul.f32 %v176, %v278
  %v339 = vmul.f32 %v176, %v285
  %v340 = vmul.f32 %v176, %v292
  %v341 = vmul.f32 %v177, %v187
  %v342 = vmul.f32 %v177, %v194
  %v343 = vmul.f32 %v177, %v201
  %v344 = vmul.f32 %v177, %v208
  %v345 = vmul.f32 %v177, %v215
  %v346 = vmul.f32 %v177, %v222
  %v347 = vmul.f32 %v177, %v229
  %v348 = vmul.f32 %v177, %v236
  %v349 = vmul.f32 %v177, %v243
  %v350 = vmul.f32 %v177, %v250
  %v351 = vmul.f32 %v177, %v257
  %v352 = vmul.f32 %v177, %v264
  %v353 = vmul.f32 %v177, %v271
  %v354 = vmul.f32 %v177, %v278
  %v355 = vmul.f32 %v177, %v285
  %v356 = vmul.f32 %v177, %v292
  %v357 = vmul.f32 %v178, %v187
  %v358 = vmul.f32 %v178, %v194
  %v359 = vmul.f32 %v178, %v201
  %v360 = vmul.f32 %v178, %v208
  %v361 = vmul.f32 %v178, %v215
  %v362 = vmul.f32 %v178, %v222
  %v363 = vmul.f32 %v178, %v229
  %v364 = vmul.f32 %v178, %v236
  %v365 = vmul.f32 %v178, %v243
  %v366 = vmul.f32 %v178, %v250
  %v367 = vmul.f32 %v178, %v257
  %v368 = vmul.f32 %v178, %v264
  %v369 = vmul.f32 %v178, %v271
  %v370 = vmul.f32 %v178, %v278
  %v371 = vmul.f32 %v178, %v285
  %v372 = vmul.f32 %v178, %v292
  %437 = vset.pattern.permute.xlu0 0
  %438 = vperm.xlu0 %437, %v309
  %v439 = vpop.permute.xlu0 %438
  %440 = vset.pattern.permute.xlu0 0
  %441 = vperm.xlu0 %440, %v310
  %v442 = vpop.permute.xlu0 %441
  %443 = vset.pattern.permute.xlu0 0
  %444 = vperm.xlu0 %443, %v311
  %v445 = vpop.permute.xlu0 %444
  %446 = vset.pattern.permute.xlu0 0
  %447 = vperm.xlu0 %446, %v312
  %v448 = vpop.permute.xlu0 %447
  %449 = vset.pattern.permute.xlu0 0
  %450 = vperm.xlu0 %449, %v313
  %v451 = vpop.permute.xlu0 %450
  %452 = vset.pattern.permute.xlu0 0
  %453 = vperm.xlu0 %452, %v314
  %v454 = vpop.permute.xlu0 %453
  %455 = vset.pattern.permute.xlu0 0
  %456 = vperm.xlu0 %455, %v315
  %v457 = vpop.permute.xlu0 %456
  %458 = vset.pattern.permute.xlu0 0
  %459 = vperm.xlu0 %458, %v316
  %v460 = vpop.permute.xlu0 %459
  %461 = vset.pattern.permute.xlu0 0
  %462 = vperm.xlu0 %461, %v317
  %v463 = vpop.permute.xlu0 %462
  %464 = vset.pattern.permute.xlu0 0
  %465 = vperm.xlu0 %464, %v318
  %v466 = vpop.permute.xlu0 %465
  %467 = vset.pattern.permute.xlu0 0
  %468 = vperm.xlu0 %467, %v319
  %v469 = vpop.permute.xlu0 %468
  %470 = vset.pattern.permute.xlu0 0
  %471 = vperm.xlu0 %470, %v320
  %v472 = vpop.permute.xlu0 %471
  %473 = vset.pattern.permute.xlu0 0
  %474 = vperm.xlu0 %473, %v321
  %v475 = vpop.permute.xlu0 %474
  %476 = vset.pattern.permute.xlu0 0
  %477 = vperm.xlu0 %476, %v322
  %v478 = vpop.permute.xlu0 %477
  %479 = vset.pattern.permute.xlu0 0
  %480 = vperm.xlu0 %479, %v323
  %v481 = vpop.permute.xlu0 %480
  %482 = vset.pattern.permute.xlu0 0
  %483 = vperm.xlu0 %482, %v324
  %v484 = vpop.permute.xlu0 %483
  %485 = vset.pattern.permute.xlu0 0
  %486 = vperm.xlu0 %485, %v325
  %v487 = vpop.permute.xlu0 %486
  %488 = vset.pattern.permute.xlu0 0
  %489 = vperm.xlu0 %488, %v326
  %v490 = vpop.permute.xlu0 %489
  %491 = vset.pattern.permute.xlu0 0
  %492 = vperm.xlu0 %491, %v327
  %v493 = vpop.permute.xlu0 %492
  %494 = vset.pattern.permute.xlu0 0
  %495 = vperm.xlu0 %494, %v328
  %v496 = vpop.permute.xlu0 %495
  %497 = vset.pattern.permute.xlu0 0
  %498 = vperm.xlu0 %497, %v329
  %v499 = vpop.permute.xlu0 %498
  %500 = vset.pattern.permute.xlu0 0
  %501 = vperm.xlu0 %500, %v330
  %v502 = vpop.permute.xlu0 %501
  %503 = vset.pattern.permute.xlu0 0
  %504 = vperm.xlu0 %503, %v331
  %v505 = vpop.permute.xlu0 %504
  %506 = vset.pattern.permute.xlu0 0
  %507 = vperm.xlu0 %506, %v332
  %v508 = vpop.permute.xlu0 %507
  %509 = vset.pattern.permute.xlu0 0
  %510 = vperm.xlu0 %509, %v333
  %v511 = vpop.permute.xlu0 %510
  %512 = vset.pattern.permute.xlu0 0
  %513 = vperm.xlu0 %512, %v334
  %v514 = vpop.permute.xlu0 %513
  %515 = vset.pattern.permute.xlu0 0
  %516 = vperm.xlu0 %515, %v335
  %v517 = vpop.permute.xlu0 %516
  %518 = vset.pattern.permute.xlu0 0
  %519 = vperm.xlu0 %518, %v336
  %v520 = vpop.permute.xlu0 %519
  %521 = vset.pattern.permute.xlu0 0
  %522 = vperm.xlu0 %521, %v337
  %v523 = vpop.permute.xlu0 %522
  %524 = vset.pattern.permute.xlu0 0
  %525 = vperm.xlu0 %524, %v338
  %v526 = vpop.permute.xlu0 %525
  %527 = vset.pattern.permute.xlu0 0
  %528 = vperm.xlu0 %527, %v339
  %v529 = vpop.permute.xlu0 %528
  %530 = vset.pattern.permute.xlu0 0
  %531 = vperm.xlu0 %530, %v340
  %v532 = vpop.permute.xlu0 %531
  %533 = vset.pattern.permute.xlu0 0
  %534 = vperm.xlu0 %533, %v341
  %v535 = vpop.permute.xlu0 %534
  %536 = vset.pattern.permute.xlu0 0
  %537 = vperm.xlu0 %536, %v342
  %v538 = vpop.permute.xlu0 %537
  %539 = vset.pattern.permute.xlu0 0
  %540 = vperm.xlu0 %539, %v343
  %v541 = vpop.permute.xlu0 %540
  %542 = vset.pattern.permute.xlu0 0
  %543 = vperm.xlu0 %542, %v344
  %v544 = vpop.permute.xlu0 %543
  %545 = vset.pattern.permute.xlu0 0
  %546 = vperm.xlu0 %545, %v345
  %v547 = vpop.permute.xlu0 %546
  %548 = vset.pattern.permute.xlu0 0
  %549 = vperm.xlu0 %548, %v346
  %v550 = vpop.permute.xlu0 %549
  %551 = vset.pattern.permute.xlu0 0
  %552 = vperm.xlu0 %551, %v347
  %v553 = vpop.permute.xlu0 %552
  %554 = vset.pattern.permute.xlu0 0
  %555 = vperm.xlu0 %554, %v348
  %v556 = vpop.permute.xlu0 %555
  %557 = vset.pattern.permute.xlu0 0
  %558 = vperm.xlu0 %557, %v349
  %v559 = vpop.permute.xlu0 %558
  %560 = vset.pattern.permute.xlu0 0
  %561 = vperm.xlu0 %560, %v350
  %v562 = vpop.permute.xlu0 %561
  %563 = vset.pattern.permute.xlu0 0
  %564 = vperm.xlu0 %563, %v351
  %v565 = vpop.permute.xlu0 %564
  %566 = vset.pattern.permute.xlu0 0
  %567 = vperm.xlu0 %566, %v352
  %v568 = vpop.permute.xlu0 %567
  %569 = vset.pattern.permute.xlu0 0
  %570 = vperm.xlu0 %569, %v353
  %v571 = vpop.permute.xlu0 %570
  %572 = vset.pattern.permute.xlu0 0
  %573 = vperm.xlu0 %572, %v354
  %v574 = vpop.permute.xlu0 %573
  %575 = vset.pattern.permute.xlu0 0
  %576 = vperm.xlu0 %575, %v355
  %v577 = vpop.permute.xlu0 %576
  %578 = vset.pattern.permute.xlu0 0
  %579 = vperm.xlu0 %578, %v356
  %v580 = vpop.permute.xlu0 %579
  %581 = vset.pattern.permute.xlu0 0
  %582 = vperm.xlu0 %581, %v357
  %v583 = vpop.permute.xlu0 %582
  %584 = vset.pattern.permute.xlu0 0
  %585 = vperm.xlu0 %584, %v358
  %v586 = vpop.permute.xlu0 %585
  %587 = vset.pattern.permute.xlu0 0
  %588 = vperm.xlu0 %587, %v359
  %v589 = vpop.permute.xlu0 %588
  %590 = vset.pattern.permute.xlu0 0
  %591 = vperm.xlu0 %590, %v360
  %v592 = vpop.permute.xlu0 %591
  %593 = vset.pattern.permute.xlu0 0
  %594 = vperm.xlu0 %593, %v361
  %v595 = vpop.permute.xlu0 %594
  %596 = vset.pattern.permute.xlu0 0
  %597 = vperm.xlu0 %596, %v362
  %v598 = vpop.permute.xlu0 %597
  %599 = vset.pattern.permute.xlu0 0
  %600 = vperm.xlu0 %599, %v363
  %v601 = vpop.permute.xlu0 %600
  %602 = vset.pattern.permute.xlu0 0
  %603 = vperm.xlu0 %602, %v364
  %v604 = vpop.permute.xlu0 %603
  %605 = vset.pattern.permute.xlu0 0
  %606 = vperm.xlu0 %605, %v365
  %v607 = vpop.permute.xlu0 %606
  %608 = vset.pattern.permute.xlu0 0
  %609 = vperm.xlu0 %608, %v366
  %v610 = vpop.permute.xlu0 %609
  %611 = vset.pattern.permute.xlu0 0
  %612 = vperm.xlu0 %611, %v367
  %v613 = vpop.permute.xlu0 %612
  %614 = vset.pattern.permute.xlu0 0
  %615 = vperm.xlu0 %614, %v368
  %v616 = vpop.permute.xlu0 %615
  %617 = vset.pattern.permute.xlu0 0
  %618 = vperm.xlu0 %617, %v369
  %v619 = vpop.permute.xlu0 %618
  %620 = vset.pattern.permute.xlu0 0
  %621 = vperm.xlu0 %620, %v370
  %v622 = vpop.permute.xlu0 %621
  %623 = vset.pattern.permute.xlu0 0
  %624 = vperm.xlu0 %623, %v371
  %v625 = vpop.permute.xlu0 %624
  %626 = vset.pattern.permute.xlu0 0
  %627 = vperm.xlu0 %626, %v372
  %v628 = vpop.permute.xlu0 %627
  %v629 = vlaneseq
  %v630 = vshrl.u32 %v629, 7
  %v631 = vsub.s32 %v59, %v630
  %v632 = vrot.slane %v439, %v631
  %v633 = vlaneseq
  %v634 = vshrl.u32 %v633, 7
  %v635 = vsub.s32 %v59, %v634
  %v636 = vrot.slane %v442, %v635
  %v637 = vlaneseq
  %v638 = vshrl.u32 %v637, 7
  %v639 = vsub.s32 %v59, %v638
  %v640 = vrot.slane %v445, %v639
  %v641 = vlaneseq
  %v642 = vshrl.u32 %v641, 7
  %v643 = vsub.s32 %v59, %v642
  %v644 = vrot.slane %v448, %v643
  %v645 = vlaneseq
  %v646 = vshrl.u32 %v645, 7
  %v647 = vsub.s32 %v59, %v646
  %v648 = vrot.slane %v451, %v647
  %v649 = vlaneseq
  %v650 = vshrl.u32 %v649, 7
  %v651 = vsub.s32 %v59, %v650
  %v652 = vrot.slane %v454, %v651
  %v653 = vlaneseq
  %v654 = vshrl.u32 %v653, 7
  %v655 = vsub.s32 %v59, %v654
  %v656 = vrot.slane %v457, %v655
  %v657 = vlaneseq
  %v658 = vshrl.u32 %v657, 7
  %v659 = vsub.s32 %v59, %v658
  %v660 = vrot.slane %v460, %v659
  %v661 = vlaneseq
  %v662 = vshrl.u32 %v661, 7
  %v663 = vsub.s32 %v59, %v662
  %v664 = vrot.slane %v463, %v663
  %v665 = vlaneseq
  %v666 = vshrl.u32 %v665, 7
  %v667 = vsub.s32 %v59, %v666
  %v668 = vrot.slane %v466, %v667
  %v669 = vlaneseq
  %v670 = vshrl.u32 %v669, 7
  %v671 = vsub.s32 %v59, %v670
  %v672 = vrot.slane %v469, %v671
  %v673 = vlaneseq
  %v674 = vshrl.u32 %v673, 7
  %v675 = vsub.s32 %v59, %v674
  %v676 = vrot.slane %v472, %v675
  %v677 = vlaneseq
  %v678 = vshrl.u32 %v677, 7
  %v679 = vsub.s32 %v59, %v678
  %v680 = vrot.slane %v475, %v679
  %v681 = vlaneseq
  %v682 = vshrl.u32 %v681, 7
  %v683 = vsub.s32 %v59, %v682
  %v684 = vrot.slane %v478, %v683
  %v685 = vlaneseq
  %v686 = vshrl.u32 %v685, 7
  %v687 = vsub.s32 %v59, %v686
  %v688 = vrot.slane %v481, %v687
  %v689 = vlaneseq
  %v690 = vshrl.u32 %v689, 7
  %v691 = vsub.s32 %v59, %v690
  %v692 = vrot.slane %v484, %v691
  %v693 = vlaneseq
  %v694 = vshrl.u32 %v693, 7
  %v695 = vsub.s32 %v59, %v694
  %v696 = vrot.slane %v487, %v695
  %v697 = vlaneseq
  %v698 = vshrl.u32 %v697, 7
  %v699 = vsub.s32 %v59, %v698
  %v700 = vrot.slane %v490, %v699
  %v701 = vlaneseq
  %v702 = vshrl.u32 %v701, 7
  %v703 = vsub.s32 %v59, %v702
  %v704 = vrot.slane %v493, %v703
  %v705 = vlaneseq
  %v706 = vshrl.u32 %v705, 7
  %v707 = vsub.s32 %v59, %v706
  %v708 = vrot.slane %v496, %v707
  %v709 = vlaneseq
  %v710 = vshrl.u32 %v709, 7
  %v711 = vsub.s32 %v59, %v710
  %v712 = vrot.slane %v499, %v711
  %v713 = vlaneseq
  %v714 = vshrl.u32 %v713, 7
  %v715 = vsub.s32 %v59, %v714
  %v716 = vrot.slane %v502, %v715
  %v717 = vlaneseq
  %v718 = vshrl.u32 %v717, 7
  %v719 = vsub.s32 %v59, %v718
  %v720 = vrot.slane %v505, %v719
  %v721 = vlaneseq
  %v722 = vshrl.u32 %v721, 7
  %v723 = vsub.s32 %v59, %v722
  %v724 = vrot.slane %v508, %v723
  %v725 = vlaneseq
  %v726 = vshrl.u32 %v725, 7
  %v727 = vsub.s32 %v59, %v726
  %v728 = vrot.slane %v511, %v727
  %v729 = vlaneseq
  %v730 = vshrl.u32 %v729, 7
  %v731 = vsub.s32 %v59, %v730
  %v732 = vrot.slane %v514, %v731
  %v733 = vlaneseq
  %v734 = vshrl.u32 %v733, 7
  %v735 = vsub.s32 %v59, %v734
  %v736 = vrot.slane %v517, %v735
  %v737 = vlaneseq
  %v738 = vshrl.u32 %v737, 7
  %v739 = vsub.s32 %v59, %v738
  %v740 = vrot.slane %v520, %v739
  %v741 = vlaneseq
  %v742 = vshrl.u32 %v741, 7
  %v743 = vsub.s32 %v59, %v742
  %v744 = vrot.slane %v523, %v743
  %v745 = vlaneseq
  %v746 = vshrl.u32 %v745, 7
  %v747 = vsub.s32 %v59, %v746
  %v748 = vrot.slane %v526, %v747
  %v749 = vlaneseq
  %v750 = vshrl.u32 %v749, 7
  %v751 = vsub.s32 %v59, %v750
  %v752 = vrot.slane %v529, %v751
  %v753 = vlaneseq
  %v754 = vshrl.u32 %v753, 7
  %v755 = vsub.s32 %v59, %v754
  %v756 = vrot.slane %v532, %v755
  %v757 = vlaneseq
  %v758 = vshrl.u32 %v757, 7
  %v759 = vsub.s32 %v59, %v758
  %v760 = vrot.slane %v535, %v759
  %v761 = vlaneseq
  %v762 = vshrl.u32 %v761, 7
  %v763 = vsub.s32 %v59, %v762
  %v764 = vrot.slane %v538, %v763
  %v765 = vlaneseq
  %v766 = vshrl.u32 %v765, 7
  %v767 = vsub.s32 %v59, %v766
  %v768 = vrot.slane %v541, %v767
  %v769 = vlaneseq
  %v770 = vshrl.u32 %v769, 7
  %v771 = vsub.s32 %v59, %v770
  %v772 = vrot.slane %v544, %v771
  %v773 = vlaneseq
  %v774 = vshrl.u32 %v773, 7
  %v775 = vsub.s32 %v59, %v774
  %v776 = vrot.slane %v547, %v775
  %v777 = vlaneseq
  %v778 = vshrl.u32 %v777, 7
  %v779 = vsub.s32 %v59, %v778
  %v780 = vrot.slane %v550, %v779
  %v781 = vlaneseq
  %v782 = vshrl.u32 %v781, 7
  %v783 = vsub.s32 %v59, %v782
  %v784 = vrot.slane %v553, %v783
  %v785 = vlaneseq
  %v786 = vshrl.u32 %v785, 7
  %v787 = vsub.s32 %v59, %v786
  %v788 = vrot.slane %v556, %v787
  %v789 = vlaneseq
  %v790 = vshrl.u32 %v789, 7
  %v791 = vsub.s32 %v59, %v790
  %v792 = vrot.slane %v559, %v791
  %v793 = vlaneseq
  %v794 = vshrl.u32 %v793, 7
  %v795 = vsub.s32 %v59, %v794
  %v796 = vrot.slane %v562, %v795
  %v797 = vlaneseq
  %v798 = vshrl.u32 %v797, 7
  %v799 = vsub.s32 %v59, %v798
  %v800 = vrot.slane %v565, %v799
  %v801 = vlaneseq
  %v802 = vshrl.u32 %v801, 7
  %v803 = vsub.s32 %v59, %v802
  %v804 = vrot.slane %v568, %v803
  %v805 = vlaneseq
  %v806 = vshrl.u32 %v805, 7
  %v807 = vsub.s32 %v59, %v806
  %v808 = vrot.slane %v571, %v807
  %v809 = vlaneseq
  %v810 = vshrl.u32 %v809, 7
  %v811 = vsub.s32 %v59, %v810
  %v812 = vrot.slane %v574, %v811
  %v813 = vlaneseq
  %v814 = vshrl.u32 %v813, 7
  %v815 = vsub.s32 %v59, %v814
  %v816 = vrot.slane %v577, %v815
  %v817 = vlaneseq
  %v818 = vshrl.u32 %v817, 7
  %v819 = vsub.s32 %v59, %v818
  %v820 = vrot.slane %v580, %v819
  %v821 = vlaneseq
  %v822 = vshrl.u32 %v821, 7
  %v823 = vsub.s32 %v59, %v822
  %v824 = vrot.slane %v583, %v823
  %v825 = vlaneseq
  %v826 = vshrl.u32 %v825, 7
  %v827 = vsub.s32 %v59, %v826
  %v828 = vrot.slane %v586, %v827
  %v829 = vlaneseq
  %v830 = vshrl.u32 %v829, 7
  %v831 = vsub.s32 %v59, %v830
  %v832 = vrot.slane %v589, %v831
  %v833 = vlaneseq
  %v834 = vshrl.u32 %v833, 7
  %v835 = vsub.s32 %v59, %v834
  %v836 = vrot.slane %v592, %v835
  %v837 = vlaneseq
  %v838 = vshrl.u32 %v837, 7
  %v839 = vsub.s32 %v59, %v838
  %v840 = vrot.slane %v595, %v839
  %v841 = vlaneseq
  %v842 = vshrl.u32 %v841, 7
  %v843 = vsub.s32 %v59, %v842
  %v844 = vrot.slane %v598, %v843
  %v845 = vlaneseq
  %v846 = vshrl.u32 %v845, 7
  %v847 = vsub.s32 %v59, %v846
  %v848 = vrot.slane %v601, %v847
  %v849 = vlaneseq
  %v850 = vshrl.u32 %v849, 7
  %v851 = vsub.s32 %v59, %v850
  %v852 = vrot.slane %v604, %v851
  %v853 = vlaneseq
  %v854 = vshrl.u32 %v853, 7
  %v855 = vsub.s32 %v59, %v854
  %v856 = vrot.slane %v607, %v855
  %v857 = vlaneseq
  %v858 = vshrl.u32 %v857, 7
  %v859 = vsub.s32 %v59, %v858
  %v860 = vrot.slane %v610, %v859
  %v861 = vlaneseq
  %v862 = vshrl.u32 %v861, 7
  %v863 = vsub.s32 %v59, %v862
  %v864 = vrot.slane %v613, %v863
  %v865 = vlaneseq
  %v866 = vshrl.u32 %v865, 7
  %v867 = vsub.s32 %v59, %v866
  %v868 = vrot.slane %v616, %v867
  %v869 = vlaneseq
  %v870 = vshrl.u32 %v869, 7
  %v871 = vsub.s32 %v59, %v870
  %v872 = vrot.slane %v619, %v871
  %v873 = vlaneseq
  %v874 = vshrl.u32 %v873, 7
  %v875 = vsub.s32 %v59, %v874
  %v876 = vrot.slane %v622, %v875
  %v877 = vlaneseq
  %v878 = vshrl.u32 %v877, 7
  %v879 = vsub.s32 %v59, %v878
  %v880 = vrot.slane %v625, %v879
  %v881 = vlaneseq
  %v882 = vshrl.u32 %v881, 7
  %v883 = vsub.s32 %v59, %v882
  %v884 = vrot.slane %v628, %v883
  %v885 = vsel %vm80, %v636, %v632
  %vm886 = vcmask 1042434
  %v887 = vsel %vm886, %v640, %v885
  %v888 = vsel %vm105, %v644, %v887
  %vm889 = vcmask 1044484
  %v890 = vsel %vm889, %v648, %v888
  %vm891 = vcmask 1045509
  %v892 = vsel %vm891, %v652, %v890
  %vm893 = vcmask 1046534
  %v894 = vsel %vm893, %v656, %v892
  %vm895 = vcmask 1047559
  %v896 = vsel %vm895, %v660, %v894
  %v897 = vsel %vm80, %v668, %v664
  %v898 = vsel %vm886, %v672, %v897
  %v899 = vsel %vm105, %v676, %v898
  %v900 = vsel %vm889, %v680, %v899
  %v901 = vsel %vm891, %v684, %v900
  %v902 = vsel %vm893, %v688, %v901
  %v903 = vsel %vm895, %v692, %v902
  %v904 = vsel %vm80, %v700, %v696
  %v905 = vsel %vm886, %v704, %v904
  %v906 = vsel %vm105, %v708, %v905
  %v907 = vsel %vm889, %v712, %v906
  %v908 = vsel %vm891, %v716, %v907
  %v909 = vsel %vm893, %v720, %v908
  %v910 = vsel %vm895, %v724, %v909
  %v911 = vsel %vm80, %v732, %v728
  %v912 = vsel %vm886, %v736, %v911
  %v913 = vsel %vm105, %v740, %v912
  %v914 = vsel %vm889, %v744, %v913
  %v915 = vsel %vm891, %v748, %v914
  %v916 = vsel %vm893, %v752, %v915
  %v917 = vsel %vm895, %v756, %v916
  %v918 = vsel %vm80, %v764, %v760
  %v919 = vsel %vm886, %v768, %v918
  %v920 = vsel %vm105, %v772, %v919
  %v921 = vsel %vm889, %v776, %v920
  %v922 = vsel %vm891, %v780, %v921
  %v923 = vsel %vm893, %v784, %v922
  %v924 = vsel %vm895, %v788, %v923
  %v925 = vsel %vm80, %v796, %v792
  %v926 = vsel %vm886, %v800, %v925
  %v927 = vsel %vm105, %v804, %v926
  %v928 = vsel %vm889, %v808, %v927
  %v929 = vsel %vm891, %v812, %v928
  %v930 = vsel %vm893, %v816, %v929
  %v931 = vsel %vm895, %v820, %v930
  %v932 = vsel %vm80, %v828, %v824
  %v933 = vsel %vm886, %v832, %v932
  %v934 = vsel %vm105, %v836, %v933
  %v935 = vsel %vm889, %v840, %v934
  %v936 = vsel %vm891, %v844, %v935
  %v937 = vsel %vm893, %v848, %v936
  %v938 = vsel %vm895, %v852, %v937
  %v939 = vsel %vm80, %v860, %v856
  %v940 = vsel %vm886, %v864, %v939
  %v941 = vsel %vm105, %v868, %v940
  %v942 = vsel %vm889, %v872, %v941
  %v943 = vsel %vm891, %v876, %v942
  %v944 = vsel %vm893, %v880, %v943
  %v945 = vsel %vm895, %v884, %v944
  %vm954 = vcmask 15360
  %v955 = vsel %vm954, %v896, 0.0
  %956 = vadd.xlane.f32.xlu0 %v955
  %v957 = vpop.xlane.xlu0 %956
  %v958 = vsel %vm954, %v903, 0.0
  %959 = vadd.xlane.f32.xlu0 %v958
  %v960 = vpop.xlane.xlu0 %959
  %v961 = vsel %vm954, %v910, 0.0
  %962 = vadd.xlane.f32.xlu0 %v961
  %v963 = vpop.xlane.xlu0 %962
  %v964 = vsel %vm954, %v917, 0.0
  %965 = vadd.xlane.f32.xlu0 %v964
  %v966 = vpop.xlane.xlu0 %965
  %v967 = vsel %vm954, %v924, 0.0
  %968 = vadd.xlane.f32.xlu0 %v967
  %v969 = vpop.xlane.xlu0 %968
  %v970 = vsel %vm954, %v931, 0.0
  %971 = vadd.xlane.f32.xlu0 %v970
  %v972 = vpop.xlane.xlu0 %971
  %v973 = vsel %vm954, %v938, 0.0
  %974 = vadd.xlane.f32.xlu0 %v973
  %v975 = vpop.xlane.xlu0 %974
  %v976 = vsel %vm954, %v945, 0.0
  %977 = vadd.xlane.f32.xlu0 %v976
  %v978 = vpop.xlane.xlu0 %977
  %v979 = vadd.f32 %v957, %v969
  %v980 = vadd.f32 %v960, %v972
  %v981 = vadd.f32 %v963, %v975
  %v982 = vadd.f32 %v966, %v978
  %v983 = vxor.u32 %v979, 2147483648
  %v984 = vxor.u32 %v980, 2147483648
  %v985 = vxor.u32 %v981, 2147483648
  %v986 = vxor.u32 %v982, 2147483648
  %v987 = vmul.f32 %v983, 1.442695
  %v988 = vpow.pop %v987
  %v989 = vmul.f32 %v984, 1.442695
  %v990 = vpow.pop %v989
  %v991 = vmul.f32 %v985, 1.442695
  %v992 = vpow.pop %v991
  %v993 = vmul.f32 %v986, 1.442695
  %v994 = vpow.pop %v993
  %v995 = vadd.f32 %v988, 1.0
  %v996 = vadd.f32 %v990, 1.0
  %v997 = vadd.f32 %v992, 1.0
  %v998 = vadd.f32 %v994, 1.0
  %v999 = vrcp.pop %v995
  %v1000 = vmul.f32 1.0, %v999
  %v1001 = vrcp.pop %v996
  %v1002 = vmul.f32 1.0, %v1001
  %v1003 = vrcp.pop %v997
  %v1004 = vmul.f32 1.0, %v1003
  %v1005 = vrcp.pop %v998
  %v1006 = vmul.f32 1.0, %v1005
  %v1007 = vmul.f32 %v17, %v1000
  %v1008 = vmul.f32 %v18, %v1000
  %v1009 = vmul.f32 %v19, %v1002
  %v1010 = vmul.f32 %v20, %v1002
  %v1011 = vmul.f32 %v21, %v1004
  %v1012 = vmul.f32 %v22, %v1004
  %v1013 = vmul.f32 %v23, %v1006
  %v1014 = vmul.f32 %v24, %v1006
  %v1015 = vadd.f32 %v1007, %v1009
  %v1016 = vrot.slane %v1015, 4
  %v1017 = vadd.f32 %v1015, %v1016
  %v1018 = vrot.slane %v1017, 2
  %v1019 = vadd.f32 %v1017, %v1018
  %v1020 = vrot.slane %v1019, 1
  %v1021 = vadd.f32 %v1019, %v1020
  %v1022 = vadd.f32 %v1008, %v1010
  %v1023 = vrot.slane %v1022, 4
  %v1024 = vadd.f32 %v1022, %v1023
  %v1025 = vrot.slane %v1024, 2
  %v1026 = vadd.f32 %v1024, %v1025
  %v1027 = vrot.slane %v1026, 1
  %v1028 = vadd.f32 %v1026, %v1027
  %v1029 = vadd.f32 %v1011, %v1013
  %v1030 = vrot.slane %v1029, 4
  %v1031 = vadd.f32 %v1029, %v1030
  %v1032 = vrot.slane %v1031, 2
  %v1033 = vadd.f32 %v1031, %v1032
  %v1034 = vrot.slane %v1033, 1
  %v1035 = vadd.f32 %v1033, %v1034
  %v1036 = vadd.f32 %v1012, %v1014
  %v1037 = vrot.slane %v1036, 4
  %v1038 = vadd.f32 %v1036, %v1037
  %v1039 = vrot.slane %v1038, 2
  %v1040 = vadd.f32 %v1038, %v1039
  %v1041 = vrot.slane %v1040, 1
  %v1042 = vadd.f32 %v1040, %v1041
  %v1043 = vrcp.pop 16.0
  %v1044 = vmul.f32 %v1021, %v1043
  %v1045 = vmul.f32 %v1028, %v1043
  %v1046 = vmul.f32 %v1035, %v1043
  %v1047 = vmul.f32 %v1042, %v1043
  %v1048 = vmax.f32 %v1007, %v1009
  %v1049 = vrot.slane %v1048, 4
  %v1050 = vmax.f32 %v1048, %v1049
  %v1051 = vrot.slane %v1050, 2
  %v1052 = vmax.f32 %v1050, %v1051
  %v1053 = vrot.slane %v1052, 1
  %v1054 = vmax.f32 %v1052, %v1053
  %v1055 = vmax.f32 %v1008, %v1010
  %v1056 = vrot.slane %v1055, 4
  %v1057 = vmax.f32 %v1055, %v1056
  %v1058 = vrot.slane %v1057, 2
  %v1059 = vmax.f32 %v1057, %v1058
  %v1060 = vrot.slane %v1059, 1
  %v1061 = vmax.f32 %v1059, %v1060
  %v1062 = vmax.f32 %v1011, %v1013
  %v1063 = vrot.slane %v1062, 4
  %v1064 = vmax.f32 %v1062, %v1063
  %v1065 = vrot.slane %v1064, 2
  %v1066 = vmax.f32 %v1064, %v1065
  %v1067 = vrot.slane %v1066, 1
  %v1068 = vmax.f32 %v1066, %v1067
  %v1069 = vmax.f32 %v1012, %v1014
  %v1070 = vrot.slane %v1069, 4
  %v1071 = vmax.f32 %v1069, %v1070
  %v1072 = vrot.slane %v1071, 2
  %v1073 = vmax.f32 %v1071, %v1072
  %v1074 = vrot.slane %v1073, 1
  %v1075 = vmax.f32 %v1073, %v1074
  %1076 = vst [vmem:[%s4] sm:$0xff] %v1007
  %1077 = vst [vmem:[%s4 + $0x8] sm:$0xff] %v1008
  %1078 = vst [vmem:[%s4 + $0x10] sm:$0xff] %v1009
  %1079 = vst [vmem:[%s4 + $0x18] sm:$0xff] %v1010
  %1080 = vst [vmem:[%s4 + $0x20] sm:$0xff] %v1011
  %1081 = vst [vmem:[%s4 + $0x28] sm:$0xff] %v1012
  %1082 = vst [vmem:[%s4 + $0x30] sm:$0xff] %v1013
  %1083 = vst [vmem:[%s4 + $0x38] sm:$0xff] %v1014
  %v1088 = vsel %vm80, %v1046, %v1044
  %v1089 = vsel %vm80, %v1047, %v1045
  %v1096 = vsel %vm80, %v1068, %v1054
  %v1097 = vsel %vm80, %v1075, %v1061
  %1100 = vrot.lane.b32.xlu0 %v1088, 51
  %v1101 = vpop.permute.xlu0 %1100
  %1102 = vrot.lane.b32.xlu0 %v1089, 51
  %v1103 = vpop.permute.xlu0 %1102
  %1104 = vrot.lane.b32.xlu0 %v1096, 51
  %v1105 = vpop.permute.xlu0 %1104
  %1106 = vrot.lane.b32.xlu0 %v1097, 51
  %v1107 = vpop.permute.xlu0 %1106
  %vm1108 = vcmp.lt.s32.totalorder %v59, 51
  %v1109 = vsel %vm1108, %v1105, %v1107
  %v1110 = vsel %vm1108, %v1103, %v1105
  %v1111 = vsel %vm1108, %v1101, %v1103
  %v1112 = vsel %vm1108, %v1107, %v1101
  %v1113 = vld [vmem:[%s3] ss:$8 sm:$0xf]
  %v1115 = vlaneseq
  %v1116 = vshrl.u32 %v1115, 7
  %v1117 = vsub.s32 0, %v1116
  %v1118 = vrot.slane %v1113, %v1117
  %v1119 = vlaneseq
  %v1120 = vshrl.u32 %v1119, 7
  %v1121 = vsub.s32 1, %v1120
  %v1122 = vrot.slane %v1113, %v1121
  %v1123 = vlaneseq
  %v1124 = vshrl.u32 %v1123, 7
  %v1125 = vsub.s32 2, %v1124
  %v1126 = vrot.slane %v1113, %v1125
  %v1127 = vlaneseq
  %v1128 = vshrl.u32 %v1127, 7
  %v1129 = vsub.s32 3, %v1128
  %v1130 = vrot.slane %v1113, %v1129
  %v1135 = vmul.f32 %v1112, %v1118
  %v1136 = vmul.f32 %v1111, %v1122
  %v1137 = vmul.f32 %v1110, %v1126
  %v1138 = vmul.f32 %v1109, %v1130
  %v1139 = vadd.f32 %v1135, 0.0
  %v1140 = vadd.f32 %v1136, 0.0
  %v1141 = vadd.f32 %v1137, 0.0
  %v1142 = vadd.f32 %v1138, 0.0
  %1143 = vrot.lane.b32.xlu0 %v1088, 50
  %v1144 = vpop.permute.xlu0 %1143
  %1145 = vrot.lane.b32.xlu0 %v1089, 50
  %v1146 = vpop.permute.xlu0 %1145
  %1147 = vrot.lane.b32.xlu0 %v1096, 50
  %v1148 = vpop.permute.xlu0 %1147
  %1149 = vrot.lane.b32.xlu0 %v1097, 50
  %v1150 = vpop.permute.xlu0 %1149
  %vm1151 = vcmp.lt.s32.totalorder %v59, 50
  %v1152 = vsel %vm1151, %v1148, %v1150
  %v1153 = vsel %vm1151, %v1146, %v1148
  %v1154 = vsel %vm1151, %v1144, %v1146
  %v1155 = vsel %vm1151, %v1150, %v1144
  %s1156 = scalar_lea.vmem %s3, 1
  %v1157 = vld [vmem:[%s1156] ss:$8 sm:$0xf]
  %v1159 = vlaneseq
  %v1160 = vshrl.u32 %v1159, 7
  %v1161 = vsub.s32 0, %v1160
  %v1162 = vrot.slane %v1157, %v1161
  %v1163 = vlaneseq
  %v1164 = vshrl.u32 %v1163, 7
  %v1165 = vsub.s32 1, %v1164
  %v1166 = vrot.slane %v1157, %v1165
  %v1167 = vlaneseq
  %v1168 = vshrl.u32 %v1167, 7
  %v1169 = vsub.s32 2, %v1168
  %v1170 = vrot.slane %v1157, %v1169
  %v1171 = vlaneseq
  %v1172 = vshrl.u32 %v1171, 7
  %v1173 = vsub.s32 3, %v1172
  %v1174 = vrot.slane %v1157, %v1173
  %v1179 = vmul.f32 %v1155, %v1162
  %v1180 = vmul.f32 %v1154, %v1166
  %v1181 = vmul.f32 %v1153, %v1170
  %v1182 = vmul.f32 %v1152, %v1174
  %v1183 = vadd.f32 %v1139, %v1179
  %v1184 = vadd.f32 %v1140, %v1180
  %v1185 = vadd.f32 %v1141, %v1181
  %v1186 = vadd.f32 %v1142, %v1182
  %1187 = vrot.lane.b32.xlu0 %v1088, 49
  %v1188 = vpop.permute.xlu0 %1187
  %1189 = vrot.lane.b32.xlu0 %v1089, 49
  %v1190 = vpop.permute.xlu0 %1189
  %1191 = vrot.lane.b32.xlu0 %v1096, 49
  %v1192 = vpop.permute.xlu0 %1191
  %1193 = vrot.lane.b32.xlu0 %v1097, 49
  %v1194 = vpop.permute.xlu0 %1193
  %vm1195 = vcmp.lt.s32.totalorder %v59, 49
  %v1196 = vsel %vm1195, %v1192, %v1194
  %v1197 = vsel %vm1195, %v1190, %v1192
  %v1198 = vsel %vm1195, %v1188, %v1190
  %v1199 = vsel %vm1195, %v1194, %v1188
  %s1200 = scalar_lea.vmem %s3, 2
  %v1201 = vld [vmem:[%s1200] ss:$8 sm:$0xf]
  %v1203 = vlaneseq
  %v1204 = vshrl.u32 %v1203, 7
  %v1205 = vsub.s32 0, %v1204
  %v1206 = vrot.slane %v1201, %v1205
  %v1207 = vlaneseq
  %v1208 = vshrl.u32 %v1207, 7
  %v1209 = vsub.s32 1, %v1208
  %v1210 = vrot.slane %v1201, %v1209
  %v1211 = vlaneseq
  %v1212 = vshrl.u32 %v1211, 7
  %v1213 = vsub.s32 2, %v1212
  %v1214 = vrot.slane %v1201, %v1213
  %v1215 = vlaneseq
  %v1216 = vshrl.u32 %v1215, 7
  %v1217 = vsub.s32 3, %v1216
  %v1218 = vrot.slane %v1201, %v1217
  %v1223 = vmul.f32 %v1199, %v1206
  %v1224 = vmul.f32 %v1198, %v1210
  %v1225 = vmul.f32 %v1197, %v1214
  %v1226 = vmul.f32 %v1196, %v1218
  %v1227 = vadd.f32 %v1183, %v1223
  %v1228 = vadd.f32 %v1184, %v1224
  %v1229 = vadd.f32 %v1185, %v1225
  %v1230 = vadd.f32 %v1186, %v1226
  %1231 = vrot.lane.b32.xlu0 %v1088, 48
  %v1232 = vpop.permute.xlu0 %1231
  %1233 = vrot.lane.b32.xlu0 %v1089, 48
  %v1234 = vpop.permute.xlu0 %1233
  %1235 = vrot.lane.b32.xlu0 %v1096, 48
  %v1236 = vpop.permute.xlu0 %1235
  %1237 = vrot.lane.b32.xlu0 %v1097, 48
  %v1238 = vpop.permute.xlu0 %1237
  %vm1239 = vcmp.lt.s32.totalorder %v59, 48
  %v1240 = vsel %vm1239, %v1236, %v1238
  %v1241 = vsel %vm1239, %v1234, %v1236
  %v1242 = vsel %vm1239, %v1232, %v1234
  %v1243 = vsel %vm1239, %v1238, %v1232
  %s1244 = scalar_lea.vmem %s3, 3
  %v1245 = vld [vmem:[%s1244] ss:$8 sm:$0xf]
  %v1247 = vlaneseq
  %v1248 = vshrl.u32 %v1247, 7
  %v1249 = vsub.s32 0, %v1248
  %v1250 = vrot.slane %v1245, %v1249
  %v1251 = vlaneseq
  %v1252 = vshrl.u32 %v1251, 7
  %v1253 = vsub.s32 1, %v1252
  %v1254 = vrot.slane %v1245, %v1253
  %v1255 = vlaneseq
  %v1256 = vshrl.u32 %v1255, 7
  %v1257 = vsub.s32 2, %v1256
  %v1258 = vrot.slane %v1245, %v1257
  %v1259 = vlaneseq
  %v1260 = vshrl.u32 %v1259, 7
  %v1261 = vsub.s32 3, %v1260
  %v1262 = vrot.slane %v1245, %v1261
  %v1267 = vmul.f32 %v1243, %v1250
  %v1268 = vmul.f32 %v1242, %v1254
  %v1269 = vmul.f32 %v1241, %v1258
  %v1270 = vmul.f32 %v1240, %v1262
  %v1271 = vadd.f32 %v1227, %v1267
  %v1272 = vadd.f32 %v1228, %v1268
  %v1273 = vadd.f32 %v1229, %v1269
  %v1274 = vadd.f32 %v1230, %v1270
  %1275 = vrot.lane.b32.xlu0 %v1088, 47
  %v1276 = vpop.permute.xlu0 %1275
  %1277 = vrot.lane.b32.xlu0 %v1089, 47
  %v1278 = vpop.permute.xlu0 %1277
  %1279 = vrot.lane.b32.xlu0 %v1096, 47
  %v1280 = vpop.permute.xlu0 %1279
  %1281 = vrot.lane.b32.xlu0 %v1097, 47
  %v1282 = vpop.permute.xlu0 %1281
  %vm1283 = vcmp.lt.s32.totalorder %v59, 47
  %v1284 = vsel %vm1283, %v1280, %v1282
  %v1285 = vsel %vm1283, %v1278, %v1280
  %v1286 = vsel %vm1283, %v1276, %v1278
  %v1287 = vsel %vm1283, %v1282, %v1276
  %s1288 = scalar_lea.vmem %s3, 4
  %v1289 = vld [vmem:[%s1288] ss:$8 sm:$0xf]
  %v1291 = vlaneseq
  %v1292 = vshrl.u32 %v1291, 7
  %v1293 = vsub.s32 0, %v1292
  %v1294 = vrot.slane %v1289, %v1293
  %v1295 = vlaneseq
  %v1296 = vshrl.u32 %v1295, 7
  %v1297 = vsub.s32 1, %v1296
  %v1298 = vrot.slane %v1289, %v1297
  %v1299 = vlaneseq
  %v1300 = vshrl.u32 %v1299, 7
  %v1301 = vsub.s32 2, %v1300
  %v1302 = vrot.slane %v1289, %v1301
  %v1303 = vlaneseq
  %v1304 = vshrl.u32 %v1303, 7
  %v1305 = vsub.s32 3, %v1304
  %v1306 = vrot.slane %v1289, %v1305
  %v1311 = vmul.f32 %v1287, %v1294
  %v1312 = vmul.f32 %v1286, %v1298
  %v1313 = vmul.f32 %v1285, %v1302
  %v1314 = vmul.f32 %v1284, %v1306
  %v1315 = vadd.f32 %v1271, %v1311
  %v1316 = vadd.f32 %v1272, %v1312
  %v1317 = vadd.f32 %v1273, %v1313
  %v1318 = vadd.f32 %v1274, %v1314
  %1319 = vrot.lane.b32.xlu0 %v1088, 46
  %v1320 = vpop.permute.xlu0 %1319
  %1321 = vrot.lane.b32.xlu0 %v1089, 46
  %v1322 = vpop.permute.xlu0 %1321
  %1323 = vrot.lane.b32.xlu0 %v1096, 46
  %v1324 = vpop.permute.xlu0 %1323
  %1325 = vrot.lane.b32.xlu0 %v1097, 46
  %v1326 = vpop.permute.xlu0 %1325
  %vm1327 = vcmp.lt.s32.totalorder %v59, 46
  %v1328 = vsel %vm1327, %v1324, %v1326
  %v1329 = vsel %vm1327, %v1322, %v1324
  %v1330 = vsel %vm1327, %v1320, %v1322
  %v1331 = vsel %vm1327, %v1326, %v1320
  %s1332 = scalar_lea.vmem %s3, 5
  %v1333 = vld [vmem:[%s1332] ss:$8 sm:$0xf]
  %v1335 = vlaneseq
  %v1336 = vshrl.u32 %v1335, 7
  %v1337 = vsub.s32 0, %v1336
  %v1338 = vrot.slane %v1333, %v1337
  %v1339 = vlaneseq
  %v1340 = vshrl.u32 %v1339, 7
  %v1341 = vsub.s32 1, %v1340
  %v1342 = vrot.slane %v1333, %v1341
  %v1343 = vlaneseq
  %v1344 = vshrl.u32 %v1343, 7
  %v1345 = vsub.s32 2, %v1344
  %v1346 = vrot.slane %v1333, %v1345
  %v1347 = vlaneseq
  %v1348 = vshrl.u32 %v1347, 7
  %v1349 = vsub.s32 3, %v1348
  %v1350 = vrot.slane %v1333, %v1349
  %v1355 = vmul.f32 %v1331, %v1338
  %v1356 = vmul.f32 %v1330, %v1342
  %v1357 = vmul.f32 %v1329, %v1346
  %v1358 = vmul.f32 %v1328, %v1350
  %v1359 = vadd.f32 %v1315, %v1355
  %v1360 = vadd.f32 %v1316, %v1356
  %v1361 = vadd.f32 %v1317, %v1357
  %v1362 = vadd.f32 %v1318, %v1358
  %1363 = vrot.lane.b32.xlu0 %v1088, 45
  %v1364 = vpop.permute.xlu0 %1363
  %1365 = vrot.lane.b32.xlu0 %v1089, 45
  %v1366 = vpop.permute.xlu0 %1365
  %1367 = vrot.lane.b32.xlu0 %v1096, 45
  %v1368 = vpop.permute.xlu0 %1367
  %1369 = vrot.lane.b32.xlu0 %v1097, 45
  %v1370 = vpop.permute.xlu0 %1369
  %vm1371 = vcmp.lt.s32.totalorder %v59, 45
  %v1372 = vsel %vm1371, %v1368, %v1370
  %v1373 = vsel %vm1371, %v1366, %v1368
  %v1374 = vsel %vm1371, %v1364, %v1366
  %v1375 = vsel %vm1371, %v1370, %v1364
  %s1376 = scalar_lea.vmem %s3, 6
  %v1377 = vld [vmem:[%s1376] ss:$8 sm:$0xf]
  %v1379 = vlaneseq
  %v1380 = vshrl.u32 %v1379, 7
  %v1381 = vsub.s32 0, %v1380
  %v1382 = vrot.slane %v1377, %v1381
  %v1383 = vlaneseq
  %v1384 = vshrl.u32 %v1383, 7
  %v1385 = vsub.s32 1, %v1384
  %v1386 = vrot.slane %v1377, %v1385
  %v1387 = vlaneseq
  %v1388 = vshrl.u32 %v1387, 7
  %v1389 = vsub.s32 2, %v1388
  %v1390 = vrot.slane %v1377, %v1389
  %v1391 = vlaneseq
  %v1392 = vshrl.u32 %v1391, 7
  %v1393 = vsub.s32 3, %v1392
  %v1394 = vrot.slane %v1377, %v1393
  %v1399 = vmul.f32 %v1375, %v1382
  %v1400 = vmul.f32 %v1374, %v1386
  %v1401 = vmul.f32 %v1373, %v1390
  %v1402 = vmul.f32 %v1372, %v1394
  %v1403 = vadd.f32 %v1359, %v1399
  %v1404 = vadd.f32 %v1360, %v1400
  %v1405 = vadd.f32 %v1361, %v1401
  %v1406 = vadd.f32 %v1362, %v1402
  %1407 = vrot.lane.b32.xlu0 %v1088, 35
  %v1408 = vpop.permute.xlu0 %1407
  %1409 = vrot.lane.b32.xlu0 %v1089, 35
  %v1410 = vpop.permute.xlu0 %1409
  %1411 = vrot.lane.b32.xlu0 %v1096, 35
  %v1412 = vpop.permute.xlu0 %1411
  %1413 = vrot.lane.b32.xlu0 %v1097, 35
  %v1414 = vpop.permute.xlu0 %1413
  %vm1415 = vcmp.lt.s32.totalorder %v59, 35
  %v1416 = vsel %vm1415, %v1412, %v1414
  %v1417 = vsel %vm1415, %v1410, %v1412
  %v1418 = vsel %vm1415, %v1408, %v1410
  %v1419 = vsel %vm1415, %v1414, %v1408
  %s1420 = scalar_lea.vmem %s3, 7
  %v1421 = vld [vmem:[%s1420] ss:$8 sm:$0xf]
  %v1423 = vlaneseq
  %v1424 = vshrl.u32 %v1423, 7
  %v1425 = vsub.s32 0, %v1424
  %v1426 = vrot.slane %v1421, %v1425
  %v1427 = vlaneseq
  %v1428 = vshrl.u32 %v1427, 7
  %v1429 = vsub.s32 1, %v1428
  %v1430 = vrot.slane %v1421, %v1429
  %v1431 = vlaneseq
  %v1432 = vshrl.u32 %v1431, 7
  %v1433 = vsub.s32 2, %v1432
  %v1434 = vrot.slane %v1421, %v1433
  %v1435 = vlaneseq
  %v1436 = vshrl.u32 %v1435, 7
  %v1437 = vsub.s32 3, %v1436
  %v1438 = vrot.slane %v1421, %v1437
  %v1443 = vmul.f32 %v1419, %v1426
  %v1444 = vmul.f32 %v1418, %v1430
  %v1445 = vmul.f32 %v1417, %v1434
  %v1446 = vmul.f32 %v1416, %v1438
  %v1447 = vadd.f32 %v1403, %v1443
  %v1448 = vadd.f32 %v1404, %v1444
  %v1449 = vadd.f32 %v1405, %v1445
  %v1450 = vadd.f32 %v1406, %v1446
  %1451 = vrot.lane.b32.xlu0 %v1088, 34
  %v1452 = vpop.permute.xlu0 %1451
  %1453 = vrot.lane.b32.xlu0 %v1089, 34
  %v1454 = vpop.permute.xlu0 %1453
  %1455 = vrot.lane.b32.xlu0 %v1096, 34
  %v1456 = vpop.permute.xlu0 %1455
  %1457 = vrot.lane.b32.xlu0 %v1097, 34
  %v1458 = vpop.permute.xlu0 %1457
  %vm1459 = vcmp.lt.s32.totalorder %v59, 34
  %v1460 = vsel %vm1459, %v1456, %v1458
  %v1461 = vsel %vm1459, %v1454, %v1456
  %v1462 = vsel %vm1459, %v1452, %v1454
  %v1463 = vsel %vm1459, %v1458, %v1452
  %s1464 = scalar_lea.vmem %s3, 32
  %v1465 = vld [vmem:[%s1464] ss:$8 sm:$0xf]
  %v1467 = vlaneseq
  %v1468 = vshrl.u32 %v1467, 7
  %v1469 = vsub.s32 0, %v1468
  %v1470 = vrot.slane %v1465, %v1469
  %v1471 = vlaneseq
  %v1472 = vshrl.u32 %v1471, 7
  %v1473 = vsub.s32 1, %v1472
  %v1474 = vrot.slane %v1465, %v1473
  %v1475 = vlaneseq
  %v1476 = vshrl.u32 %v1475, 7
  %v1477 = vsub.s32 2, %v1476
  %v1478 = vrot.slane %v1465, %v1477
  %v1479 = vlaneseq
  %v1480 = vshrl.u32 %v1479, 7
  %v1481 = vsub.s32 3, %v1480
  %v1482 = vrot.slane %v1465, %v1481
  %v1487 = vmul.f32 %v1463, %v1470
  %v1488 = vmul.f32 %v1462, %v1474
  %v1489 = vmul.f32 %v1461, %v1478
  %v1490 = vmul.f32 %v1460, %v1482
  %v1491 = vadd.f32 %v1447, %v1487
  %v1492 = vadd.f32 %v1448, %v1488
  %v1493 = vadd.f32 %v1449, %v1489
  %v1494 = vadd.f32 %v1450, %v1490
  %1495 = vrot.lane.b32.xlu0 %v1088, 33
  %v1496 = vpop.permute.xlu0 %1495
  %1497 = vrot.lane.b32.xlu0 %v1089, 33
  %v1498 = vpop.permute.xlu0 %1497
  %1499 = vrot.lane.b32.xlu0 %v1096, 33
  %v1500 = vpop.permute.xlu0 %1499
  %1501 = vrot.lane.b32.xlu0 %v1097, 33
  %v1502 = vpop.permute.xlu0 %1501
  %vm1503 = vcmp.lt.s32.totalorder %v59, 33
  %v1504 = vsel %vm1503, %v1500, %v1502
  %v1505 = vsel %vm1503, %v1498, %v1500
  %v1506 = vsel %vm1503, %v1496, %v1498
  %v1507 = vsel %vm1503, %v1502, %v1496
  %s1508 = scalar_lea.vmem %s3, 33
  %v1509 = vld [vmem:[%s1508] ss:$8 sm:$0xf]
  %v1511 = vlaneseq
  %v1512 = vshrl.u32 %v1511, 7
  %v1513 = vsub.s32 0, %v1512
  %v1514 = vrot.slane %v1509, %v1513
  %v1515 = vlaneseq
  %v1516 = vshrl.u32 %v1515, 7
  %v1517 = vsub.s32 1, %v1516
  %v1518 = vrot.slane %v1509, %v1517
  %v1519 = vlaneseq
  %v1520 = vshrl.u32 %v1519, 7
  %v1521 = vsub.s32 2, %v1520
  %v1522 = vrot.slane %v1509, %v1521
  %v1523 = vlaneseq
  %v1524 = vshrl.u32 %v1523, 7
  %v1525 = vsub.s32 3, %v1524
  %v1526 = vrot.slane %v1509, %v1525
  %v1531 = vmul.f32 %v1507, %v1514
  %v1532 = vmul.f32 %v1506, %v1518
  %v1533 = vmul.f32 %v1505, %v1522
  %v1534 = vmul.f32 %v1504, %v1526
  %v1535 = vadd.f32 %v1491, %v1531
  %v1536 = vadd.f32 %v1492, %v1532
  %v1537 = vadd.f32 %v1493, %v1533
  %v1538 = vadd.f32 %v1494, %v1534
  %1539 = vrot.lane.b32.xlu0 %v1088, 32
  %v1540 = vpop.permute.xlu0 %1539
  %1541 = vrot.lane.b32.xlu0 %v1089, 32
  %v1542 = vpop.permute.xlu0 %1541
  %1543 = vrot.lane.b32.xlu0 %v1096, 32
  %v1544 = vpop.permute.xlu0 %1543
  %1545 = vrot.lane.b32.xlu0 %v1097, 32
  %v1546 = vpop.permute.xlu0 %1545
  %vm1547 = vcmp.lt.s32.totalorder %v59, 32
  %v1548 = vsel %vm1547, %v1544, %v1546
  %v1549 = vsel %vm1547, %v1542, %v1544
  %v1550 = vsel %vm1547, %v1540, %v1542
  %v1551 = vsel %vm1547, %v1546, %v1540
  %s1552 = scalar_lea.vmem %s3, 34
  %v1553 = vld [vmem:[%s1552] ss:$8 sm:$0xf]
  %v1555 = vlaneseq
  %v1556 = vshrl.u32 %v1555, 7
  %v1557 = vsub.s32 0, %v1556
  %v1558 = vrot.slane %v1553, %v1557
  %v1559 = vlaneseq
  %v1560 = vshrl.u32 %v1559, 7
  %v1561 = vsub.s32 1, %v1560
  %v1562 = vrot.slane %v1553, %v1561
  %v1563 = vlaneseq
  %v1564 = vshrl.u32 %v1563, 7
  %v1565 = vsub.s32 2, %v1564
  %v1566 = vrot.slane %v1553, %v1565
  %v1567 = vlaneseq
  %v1568 = vshrl.u32 %v1567, 7
  %v1569 = vsub.s32 3, %v1568
  %v1570 = vrot.slane %v1553, %v1569
  %v1575 = vmul.f32 %v1551, %v1558
  %v1576 = vmul.f32 %v1550, %v1562
  %v1577 = vmul.f32 %v1549, %v1566
  %v1578 = vmul.f32 %v1548, %v1570
  %v1579 = vadd.f32 %v1535, %v1575
  %v1580 = vadd.f32 %v1536, %v1576
  %v1581 = vadd.f32 %v1537, %v1577
  %v1582 = vadd.f32 %v1538, %v1578
  %1583 = vrot.lane.b32.xlu0 %v1088, 31
  %v1584 = vpop.permute.xlu0 %1583
  %1585 = vrot.lane.b32.xlu0 %v1089, 31
  %v1586 = vpop.permute.xlu0 %1585
  %1587 = vrot.lane.b32.xlu0 %v1096, 31
  %v1588 = vpop.permute.xlu0 %1587
  %1589 = vrot.lane.b32.xlu0 %v1097, 31
  %v1590 = vpop.permute.xlu0 %1589
  %vm1591 = vcmp.lt.s32.totalorder %v59, 31
  %v1592 = vsel %vm1591, %v1588, %v1590
  %v1593 = vsel %vm1591, %v1586, %v1588
  %v1594 = vsel %vm1591, %v1584, %v1586
  %v1595 = vsel %vm1591, %v1590, %v1584
  %s1596 = scalar_lea.vmem %s3, 35
  %v1597 = vld [vmem:[%s1596] ss:$8 sm:$0xf]
  %v1599 = vlaneseq
  %v1600 = vshrl.u32 %v1599, 7
  %v1601 = vsub.s32 0, %v1600
  %v1602 = vrot.slane %v1597, %v1601
  %v1603 = vlaneseq
  %v1604 = vshrl.u32 %v1603, 7
  %v1605 = vsub.s32 1, %v1604
  %v1606 = vrot.slane %v1597, %v1605
  %v1607 = vlaneseq
  %v1608 = vshrl.u32 %v1607, 7
  %v1609 = vsub.s32 2, %v1608
  %v1610 = vrot.slane %v1597, %v1609
  %v1611 = vlaneseq
  %v1612 = vshrl.u32 %v1611, 7
  %v1613 = vsub.s32 3, %v1612
  %v1614 = vrot.slane %v1597, %v1613
  %v1619 = vmul.f32 %v1595, %v1602
  %v1620 = vmul.f32 %v1594, %v1606
  %v1621 = vmul.f32 %v1593, %v1610
  %v1622 = vmul.f32 %v1592, %v1614
  %v1623 = vadd.f32 %v1579, %v1619
  %v1624 = vadd.f32 %v1580, %v1620
  %v1625 = vadd.f32 %v1581, %v1621
  %v1626 = vadd.f32 %v1582, %v1622
  %1627 = vrot.lane.b32.xlu0 %v1088, 30
  %v1628 = vpop.permute.xlu0 %1627
  %1629 = vrot.lane.b32.xlu0 %v1089, 30
  %v1630 = vpop.permute.xlu0 %1629
  %1631 = vrot.lane.b32.xlu0 %v1096, 30
  %v1632 = vpop.permute.xlu0 %1631
  %1633 = vrot.lane.b32.xlu0 %v1097, 30
  %v1634 = vpop.permute.xlu0 %1633
  %vm1635 = vcmp.lt.s32.totalorder %v59, 30
  %v1636 = vsel %vm1635, %v1632, %v1634
  %v1637 = vsel %vm1635, %v1630, %v1632
  %v1638 = vsel %vm1635, %v1628, %v1630
  %v1639 = vsel %vm1635, %v1634, %v1628
  %s1640 = scalar_lea.vmem %s3, 36
  %v1641 = vld [vmem:[%s1640] ss:$8 sm:$0xf]
  %v1643 = vlaneseq
  %v1644 = vshrl.u32 %v1643, 7
  %v1645 = vsub.s32 0, %v1644
  %v1646 = vrot.slane %v1641, %v1645
  %v1647 = vlaneseq
  %v1648 = vshrl.u32 %v1647, 7
  %v1649 = vsub.s32 1, %v1648
  %v1650 = vrot.slane %v1641, %v1649
  %v1651 = vlaneseq
  %v1652 = vshrl.u32 %v1651, 7
  %v1653 = vsub.s32 2, %v1652
  %v1654 = vrot.slane %v1641, %v1653
  %v1655 = vlaneseq
  %v1656 = vshrl.u32 %v1655, 7
  %v1657 = vsub.s32 3, %v1656
  %v1658 = vrot.slane %v1641, %v1657
  %v1663 = vmul.f32 %v1639, %v1646
  %v1664 = vmul.f32 %v1638, %v1650
  %v1665 = vmul.f32 %v1637, %v1654
  %v1666 = vmul.f32 %v1636, %v1658
  %v1667 = vadd.f32 %v1623, %v1663
  %v1668 = vadd.f32 %v1624, %v1664
  %v1669 = vadd.f32 %v1625, %v1665
  %v1670 = vadd.f32 %v1626, %v1666
  %1671 = vrot.lane.b32.xlu0 %v1088, 29
  %v1672 = vpop.permute.xlu0 %1671
  %1673 = vrot.lane.b32.xlu0 %v1089, 29
  %v1674 = vpop.permute.xlu0 %1673
  %1675 = vrot.lane.b32.xlu0 %v1096, 29
  %v1676 = vpop.permute.xlu0 %1675
  %1677 = vrot.lane.b32.xlu0 %v1097, 29
  %v1678 = vpop.permute.xlu0 %1677
  %vm1679 = vcmp.lt.s32.totalorder %v59, 29
  %v1680 = vsel %vm1679, %v1676, %v1678
  %v1681 = vsel %vm1679, %v1674, %v1676
  %v1682 = vsel %vm1679, %v1672, %v1674
  %v1683 = vsel %vm1679, %v1678, %v1672
  %s1684 = scalar_lea.vmem %s3, 37
  %v1685 = vld [vmem:[%s1684] ss:$8 sm:$0xf]
  %v1687 = vlaneseq
  %v1688 = vshrl.u32 %v1687, 7
  %v1689 = vsub.s32 0, %v1688
  %v1690 = vrot.slane %v1685, %v1689
  %v1691 = vlaneseq
  %v1692 = vshrl.u32 %v1691, 7
  %v1693 = vsub.s32 1, %v1692
  %v1694 = vrot.slane %v1685, %v1693
  %v1695 = vlaneseq
  %v1696 = vshrl.u32 %v1695, 7
  %v1697 = vsub.s32 2, %v1696
  %v1698 = vrot.slane %v1685, %v1697
  %v1699 = vlaneseq
  %v1700 = vshrl.u32 %v1699, 7
  %v1701 = vsub.s32 3, %v1700
  %v1702 = vrot.slane %v1685, %v1701
  %v1707 = vmul.f32 %v1683, %v1690
  %v1708 = vmul.f32 %v1682, %v1694
  %v1709 = vmul.f32 %v1681, %v1698
  %v1710 = vmul.f32 %v1680, %v1702
  %v1711 = vadd.f32 %v1667, %v1707
  %v1712 = vadd.f32 %v1668, %v1708
  %v1713 = vadd.f32 %v1669, %v1709
  %v1714 = vadd.f32 %v1670, %v1710
  %1715 = vrot.lane.b32.xlu0 %v1088, 19
  %v1716 = vpop.permute.xlu0 %1715
  %1717 = vrot.lane.b32.xlu0 %v1089, 19
  %v1718 = vpop.permute.xlu0 %1717
  %1719 = vrot.lane.b32.xlu0 %v1096, 19
  %v1720 = vpop.permute.xlu0 %1719
  %1721 = vrot.lane.b32.xlu0 %v1097, 19
  %v1722 = vpop.permute.xlu0 %1721
  %vm1723 = vcmp.lt.s32.totalorder %v59, 19
  %v1724 = vsel %vm1723, %v1720, %v1722
  %v1725 = vsel %vm1723, %v1718, %v1720
  %v1726 = vsel %vm1723, %v1716, %v1718
  %v1727 = vsel %vm1723, %v1722, %v1716
  %s1728 = scalar_lea.vmem %s3, 38
  %v1729 = vld [vmem:[%s1728] ss:$8 sm:$0xf]
  %v1731 = vlaneseq
  %v1732 = vshrl.u32 %v1731, 7
  %v1733 = vsub.s32 0, %v1732
  %v1734 = vrot.slane %v1729, %v1733
  %v1735 = vlaneseq
  %v1736 = vshrl.u32 %v1735, 7
  %v1737 = vsub.s32 1, %v1736
  %v1738 = vrot.slane %v1729, %v1737
  %v1739 = vlaneseq
  %v1740 = vshrl.u32 %v1739, 7
  %v1741 = vsub.s32 2, %v1740
  %v1742 = vrot.slane %v1729, %v1741
  %v1743 = vlaneseq
  %v1744 = vshrl.u32 %v1743, 7
  %v1745 = vsub.s32 3, %v1744
  %v1746 = vrot.slane %v1729, %v1745
  %v1751 = vmul.f32 %v1727, %v1734
  %v1752 = vmul.f32 %v1726, %v1738
  %v1753 = vmul.f32 %v1725, %v1742
  %v1754 = vmul.f32 %v1724, %v1746
  %v1755 = vadd.f32 %v1711, %v1751
  %v1756 = vadd.f32 %v1712, %v1752
  %v1757 = vadd.f32 %v1713, %v1753
  %v1758 = vadd.f32 %v1714, %v1754
  %1759 = vrot.lane.b32.xlu0 %v1088, 18
  %v1760 = vpop.permute.xlu0 %1759
  %1761 = vrot.lane.b32.xlu0 %v1089, 18
  %v1762 = vpop.permute.xlu0 %1761
  %1763 = vrot.lane.b32.xlu0 %v1096, 18
  %v1764 = vpop.permute.xlu0 %1763
  %1765 = vrot.lane.b32.xlu0 %v1097, 18
  %v1766 = vpop.permute.xlu0 %1765
  %vm1767 = vcmp.lt.s32.totalorder %v59, 18
  %v1768 = vsel %vm1767, %v1764, %v1766
  %v1769 = vsel %vm1767, %v1762, %v1764
  %v1770 = vsel %vm1767, %v1760, %v1762
  %v1771 = vsel %vm1767, %v1766, %v1760
  %s1772 = scalar_lea.vmem %s3, 39
  %v1773 = vld [vmem:[%s1772] ss:$8 sm:$0xf]
  %v1775 = vlaneseq
  %v1776 = vshrl.u32 %v1775, 7
  %v1777 = vsub.s32 0, %v1776
  %v1778 = vrot.slane %v1773, %v1777
  %v1779 = vlaneseq
  %v1780 = vshrl.u32 %v1779, 7
  %v1781 = vsub.s32 1, %v1780
  %v1782 = vrot.slane %v1773, %v1781
  %v1783 = vlaneseq
  %v1784 = vshrl.u32 %v1783, 7
  %v1785 = vsub.s32 2, %v1784
  %v1786 = vrot.slane %v1773, %v1785
  %v1787 = vlaneseq
  %v1788 = vshrl.u32 %v1787, 7
  %v1789 = vsub.s32 3, %v1788
  %v1790 = vrot.slane %v1773, %v1789
  %v1795 = vmul.f32 %v1771, %v1778
  %v1796 = vmul.f32 %v1770, %v1782
  %v1797 = vmul.f32 %v1769, %v1786
  %v1798 = vmul.f32 %v1768, %v1790
  %v1799 = vadd.f32 %v1755, %v1795
  %v1800 = vadd.f32 %v1756, %v1796
  %v1801 = vadd.f32 %v1757, %v1797
  %v1802 = vadd.f32 %v1758, %v1798
  %1803 = vrot.lane.b32.xlu0 %v1088, 17
  %v1804 = vpop.permute.xlu0 %1803
  %1805 = vrot.lane.b32.xlu0 %v1089, 17
  %v1806 = vpop.permute.xlu0 %1805
  %1807 = vrot.lane.b32.xlu0 %v1096, 17
  %v1808 = vpop.permute.xlu0 %1807
  %1809 = vrot.lane.b32.xlu0 %v1097, 17
  %v1810 = vpop.permute.xlu0 %1809
  %vm1811 = vcmp.lt.s32.totalorder %v59, 17
  %v1812 = vsel %vm1811, %v1808, %v1810
  %v1813 = vsel %vm1811, %v1806, %v1808
  %v1814 = vsel %vm1811, %v1804, %v1806
  %v1815 = vsel %vm1811, %v1810, %v1804
  %s1816 = scalar_lea.vmem %s3, 64
  %v1817 = vld [vmem:[%s1816] ss:$8 sm:$0xf]
  %v1819 = vlaneseq
  %v1820 = vshrl.u32 %v1819, 7
  %v1821 = vsub.s32 0, %v1820
  %v1822 = vrot.slane %v1817, %v1821
  %v1823 = vlaneseq
  %v1824 = vshrl.u32 %v1823, 7
  %v1825 = vsub.s32 1, %v1824
  %v1826 = vrot.slane %v1817, %v1825
  %v1827 = vlaneseq
  %v1828 = vshrl.u32 %v1827, 7
  %v1829 = vsub.s32 2, %v1828
  %v1830 = vrot.slane %v1817, %v1829
  %v1831 = vlaneseq
  %v1832 = vshrl.u32 %v1831, 7
  %v1833 = vsub.s32 3, %v1832
  %v1834 = vrot.slane %v1817, %v1833
  %v1839 = vmul.f32 %v1815, %v1822
  %v1840 = vmul.f32 %v1814, %v1826
  %v1841 = vmul.f32 %v1813, %v1830
  %v1842 = vmul.f32 %v1812, %v1834
  %v1843 = vadd.f32 %v1799, %v1839
  %v1844 = vadd.f32 %v1800, %v1840
  %v1845 = vadd.f32 %v1801, %v1841
  %v1846 = vadd.f32 %v1802, %v1842
  %1847 = vrot.lane.b32.xlu0 %v1088, 16
  %v1848 = vpop.permute.xlu0 %1847
  %1849 = vrot.lane.b32.xlu0 %v1089, 16
  %v1850 = vpop.permute.xlu0 %1849
  %1851 = vrot.lane.b32.xlu0 %v1096, 16
  %v1852 = vpop.permute.xlu0 %1851
  %1853 = vrot.lane.b32.xlu0 %v1097, 16
  %v1854 = vpop.permute.xlu0 %1853
  %vm1855 = vcmp.lt.s32.totalorder %v59, 16
  %v1856 = vsel %vm1855, %v1852, %v1854
  %v1857 = vsel %vm1855, %v1850, %v1852
  %v1858 = vsel %vm1855, %v1848, %v1850
  %v1859 = vsel %vm1855, %v1854, %v1848
  %s1860 = scalar_lea.vmem %s3, 65
  %v1861 = vld [vmem:[%s1860] ss:$8 sm:$0xf]
  %v1863 = vlaneseq
  %v1864 = vshrl.u32 %v1863, 7
  %v1865 = vsub.s32 0, %v1864
  %v1866 = vrot.slane %v1861, %v1865
  %v1867 = vlaneseq
  %v1868 = vshrl.u32 %v1867, 7
  %v1869 = vsub.s32 1, %v1868
  %v1870 = vrot.slane %v1861, %v1869
  %v1871 = vlaneseq
  %v1872 = vshrl.u32 %v1871, 7
  %v1873 = vsub.s32 2, %v1872
  %v1874 = vrot.slane %v1861, %v1873
  %v1875 = vlaneseq
  %v1876 = vshrl.u32 %v1875, 7
  %v1877 = vsub.s32 3, %v1876
  %v1878 = vrot.slane %v1861, %v1877
  %v1883 = vmul.f32 %v1859, %v1866
  %v1884 = vmul.f32 %v1858, %v1870
  %v1885 = vmul.f32 %v1857, %v1874
  %v1886 = vmul.f32 %v1856, %v1878
  %v1887 = vadd.f32 %v1843, %v1883
  %v1888 = vadd.f32 %v1844, %v1884
  %v1889 = vadd.f32 %v1845, %v1885
  %v1890 = vadd.f32 %v1846, %v1886
  %1891 = vrot.lane.b32.xlu0 %v1088, 15
  %v1892 = vpop.permute.xlu0 %1891
  %1893 = vrot.lane.b32.xlu0 %v1089, 15
  %v1894 = vpop.permute.xlu0 %1893
  %1895 = vrot.lane.b32.xlu0 %v1096, 15
  %v1896 = vpop.permute.xlu0 %1895
  %1897 = vrot.lane.b32.xlu0 %v1097, 15
  %v1898 = vpop.permute.xlu0 %1897
  %vm1899 = vcmp.lt.s32.totalorder %v59, 15
  %v1900 = vsel %vm1899, %v1896, %v1898
  %v1901 = vsel %vm1899, %v1894, %v1896
  %v1902 = vsel %vm1899, %v1892, %v1894
  %v1903 = vsel %vm1899, %v1898, %v1892
  %s1904 = scalar_lea.vmem %s3, 66
  %v1905 = vld [vmem:[%s1904] ss:$8 sm:$0xf]
  %v1907 = vlaneseq
  %v1908 = vshrl.u32 %v1907, 7
  %v1909 = vsub.s32 0, %v1908
  %v1910 = vrot.slane %v1905, %v1909
  %v1911 = vlaneseq
  %v1912 = vshrl.u32 %v1911, 7
  %v1913 = vsub.s32 1, %v1912
  %v1914 = vrot.slane %v1905, %v1913
  %v1915 = vlaneseq
  %v1916 = vshrl.u32 %v1915, 7
  %v1917 = vsub.s32 2, %v1916
  %v1918 = vrot.slane %v1905, %v1917
  %v1919 = vlaneseq
  %v1920 = vshrl.u32 %v1919, 7
  %v1921 = vsub.s32 3, %v1920
  %v1922 = vrot.slane %v1905, %v1921
  %v1927 = vmul.f32 %v1903, %v1910
  %v1928 = vmul.f32 %v1902, %v1914
  %v1929 = vmul.f32 %v1901, %v1918
  %v1930 = vmul.f32 %v1900, %v1922
  %v1931 = vadd.f32 %v1887, %v1927
  %v1932 = vadd.f32 %v1888, %v1928
  %v1933 = vadd.f32 %v1889, %v1929
  %v1934 = vadd.f32 %v1890, %v1930
  %1935 = vrot.lane.b32.xlu0 %v1088, 14
  %v1936 = vpop.permute.xlu0 %1935
  %1937 = vrot.lane.b32.xlu0 %v1089, 14
  %v1938 = vpop.permute.xlu0 %1937
  %1939 = vrot.lane.b32.xlu0 %v1096, 14
  %v1940 = vpop.permute.xlu0 %1939
  %1941 = vrot.lane.b32.xlu0 %v1097, 14
  %v1942 = vpop.permute.xlu0 %1941
  %vm1943 = vcmp.lt.s32.totalorder %v59, 14
  %v1944 = vsel %vm1943, %v1940, %v1942
  %v1945 = vsel %vm1943, %v1938, %v1940
  %v1946 = vsel %vm1943, %v1936, %v1938
  %v1947 = vsel %vm1943, %v1942, %v1936
  %s1948 = scalar_lea.vmem %s3, 67
  %v1949 = vld [vmem:[%s1948] ss:$8 sm:$0xf]
  %v1951 = vlaneseq
  %v1952 = vshrl.u32 %v1951, 7
  %v1953 = vsub.s32 0, %v1952
  %v1954 = vrot.slane %v1949, %v1953
  %v1955 = vlaneseq
  %v1956 = vshrl.u32 %v1955, 7
  %v1957 = vsub.s32 1, %v1956
  %v1958 = vrot.slane %v1949, %v1957
  %v1959 = vlaneseq
  %v1960 = vshrl.u32 %v1959, 7
  %v1961 = vsub.s32 2, %v1960
  %v1962 = vrot.slane %v1949, %v1961
  %v1963 = vlaneseq
  %v1964 = vshrl.u32 %v1963, 7
  %v1965 = vsub.s32 3, %v1964
  %v1966 = vrot.slane %v1949, %v1965
  %v1971 = vmul.f32 %v1947, %v1954
  %v1972 = vmul.f32 %v1946, %v1958
  %v1973 = vmul.f32 %v1945, %v1962
  %v1974 = vmul.f32 %v1944, %v1966
  %v1975 = vadd.f32 %v1931, %v1971
  %v1976 = vadd.f32 %v1932, %v1972
  %v1977 = vadd.f32 %v1933, %v1973
  %v1978 = vadd.f32 %v1934, %v1974
  %1979 = vrot.lane.b32.xlu0 %v1088, 13
  %v1980 = vpop.permute.xlu0 %1979
  %1981 = vrot.lane.b32.xlu0 %v1089, 13
  %v1982 = vpop.permute.xlu0 %1981
  %1983 = vrot.lane.b32.xlu0 %v1096, 13
  %v1984 = vpop.permute.xlu0 %1983
  %1985 = vrot.lane.b32.xlu0 %v1097, 13
  %v1986 = vpop.permute.xlu0 %1985
  %vm1987 = vcmp.lt.s32.totalorder %v59, 13
  %v1988 = vsel %vm1987, %v1984, %v1986
  %v1989 = vsel %vm1987, %v1982, %v1984
  %v1990 = vsel %vm1987, %v1980, %v1982
  %v1991 = vsel %vm1987, %v1986, %v1980
  %s1992 = scalar_lea.vmem %s3, 68
  %v1993 = vld [vmem:[%s1992] ss:$8 sm:$0xf]
  %v1995 = vlaneseq
  %v1996 = vshrl.u32 %v1995, 7
  %v1997 = vsub.s32 0, %v1996
  %v1998 = vrot.slane %v1993, %v1997
  %v1999 = vlaneseq
  %v2000 = vshrl.u32 %v1999, 7
  %v2001 = vsub.s32 1, %v2000
  %v2002 = vrot.slane %v1993, %v2001
  %v2003 = vlaneseq
  %v2004 = vshrl.u32 %v2003, 7
  %v2005 = vsub.s32 2, %v2004
  %v2006 = vrot.slane %v1993, %v2005
  %v2007 = vlaneseq
  %v2008 = vshrl.u32 %v2007, 7
  %v2009 = vsub.s32 3, %v2008
  %v2010 = vrot.slane %v1993, %v2009
  %v2015 = vmul.f32 %v1991, %v1998
  %v2016 = vmul.f32 %v1990, %v2002
  %v2017 = vmul.f32 %v1989, %v2006
  %v2018 = vmul.f32 %v1988, %v2010
  %v2019 = vadd.f32 %v1975, %v2015
  %v2020 = vadd.f32 %v1976, %v2016
  %v2021 = vadd.f32 %v1977, %v2017
  %v2022 = vadd.f32 %v1978, %v2018
  %2023 = vrot.lane.b32.xlu0 %v1088, 3
  %v2024 = vpop.permute.xlu0 %2023
  %2025 = vrot.lane.b32.xlu0 %v1089, 3
  %v2026 = vpop.permute.xlu0 %2025
  %2027 = vrot.lane.b32.xlu0 %v1096, 3
  %v2028 = vpop.permute.xlu0 %2027
  %2029 = vrot.lane.b32.xlu0 %v1097, 3
  %v2030 = vpop.permute.xlu0 %2029
  %vm2031 = vcmp.lt.s32.totalorder %v59, 3
  %v2032 = vsel %vm2031, %v2028, %v2030
  %v2033 = vsel %vm2031, %v2026, %v2028
  %v2034 = vsel %vm2031, %v2024, %v2026
  %v2035 = vsel %vm2031, %v2030, %v2024
  %s2036 = scalar_lea.vmem %s3, 69
  %v2037 = vld [vmem:[%s2036] ss:$8 sm:$0xf]
  %v2039 = vlaneseq
  %v2040 = vshrl.u32 %v2039, 7
  %v2041 = vsub.s32 0, %v2040
  %v2042 = vrot.slane %v2037, %v2041
  %v2043 = vlaneseq
  %v2044 = vshrl.u32 %v2043, 7
  %v2045 = vsub.s32 1, %v2044
  %v2046 = vrot.slane %v2037, %v2045
  %v2047 = vlaneseq
  %v2048 = vshrl.u32 %v2047, 7
  %v2049 = vsub.s32 2, %v2048
  %v2050 = vrot.slane %v2037, %v2049
  %v2051 = vlaneseq
  %v2052 = vshrl.u32 %v2051, 7
  %v2053 = vsub.s32 3, %v2052
  %v2054 = vrot.slane %v2037, %v2053
  %v2059 = vmul.f32 %v2035, %v2042
  %v2060 = vmul.f32 %v2034, %v2046
  %v2061 = vmul.f32 %v2033, %v2050
  %v2062 = vmul.f32 %v2032, %v2054
  %v2063 = vadd.f32 %v2019, %v2059
  %v2064 = vadd.f32 %v2020, %v2060
  %v2065 = vadd.f32 %v2021, %v2061
  %v2066 = vadd.f32 %v2022, %v2062
  %2067 = vrot.lane.b32.xlu0 %v1088, 2
  %v2068 = vpop.permute.xlu0 %2067
  %2069 = vrot.lane.b32.xlu0 %v1089, 2
  %v2070 = vpop.permute.xlu0 %2069
  %2071 = vrot.lane.b32.xlu0 %v1096, 2
  %v2072 = vpop.permute.xlu0 %2071
  %2073 = vrot.lane.b32.xlu0 %v1097, 2
  %v2074 = vpop.permute.xlu0 %2073
  %vm2075 = vcmp.lt.s32.totalorder %v59, 2
  %v2076 = vsel %vm2075, %v2072, %v2074
  %v2077 = vsel %vm2075, %v2070, %v2072
  %v2078 = vsel %vm2075, %v2068, %v2070
  %v2079 = vsel %vm2075, %v2074, %v2068
  %s2080 = scalar_lea.vmem %s3, 70
  %v2081 = vld [vmem:[%s2080] ss:$8 sm:$0xf]
  %v2083 = vlaneseq
  %v2084 = vshrl.u32 %v2083, 7
  %v2085 = vsub.s32 0, %v2084
  %v2086 = vrot.slane %v2081, %v2085
  %v2087 = vlaneseq
  %v2088 = vshrl.u32 %v2087, 7
  %v2089 = vsub.s32 1, %v2088
  %v2090 = vrot.slane %v2081, %v2089
  %v2091 = vlaneseq
  %v2092 = vshrl.u32 %v2091, 7
  %v2093 = vsub.s32 2, %v2092
  %v2094 = vrot.slane %v2081, %v2093
  %v2095 = vlaneseq
  %v2096 = vshrl.u32 %v2095, 7
  %v2097 = vsub.s32 3, %v2096
  %v2098 = vrot.slane %v2081, %v2097
  %v2103 = vmul.f32 %v2079, %v2086
  %v2104 = vmul.f32 %v2078, %v2090
  %v2105 = vmul.f32 %v2077, %v2094
  %v2106 = vmul.f32 %v2076, %v2098
  %v2107 = vadd.f32 %v2063, %v2103
  %v2108 = vadd.f32 %v2064, %v2104
  %v2109 = vadd.f32 %v2065, %v2105
  %v2110 = vadd.f32 %v2066, %v2106
  %2111 = vrot.lane.b32.xlu0 %v1088, 1
  %v2112 = vpop.permute.xlu0 %2111
  %2113 = vrot.lane.b32.xlu0 %v1089, 1
  %v2114 = vpop.permute.xlu0 %2113
  %2115 = vrot.lane.b32.xlu0 %v1096, 1
  %v2116 = vpop.permute.xlu0 %2115
  %2117 = vrot.lane.b32.xlu0 %v1097, 1
  %v2118 = vpop.permute.xlu0 %2117
  %vm2119 = vcmp.lt.s32.totalorder %v59, 1
  %v2120 = vsel %vm2119, %v2116, %v2118
  %v2121 = vsel %vm2119, %v2114, %v2116
  %v2122 = vsel %vm2119, %v2112, %v2114
  %v2123 = vsel %vm2119, %v2118, %v2112
  %s2124 = scalar_lea.vmem %s3, 71
  %v2125 = vld [vmem:[%s2124] ss:$8 sm:$0xf]
  %v2127 = vlaneseq
  %v2128 = vshrl.u32 %v2127, 7
  %v2129 = vsub.s32 0, %v2128
  %v2130 = vrot.slane %v2125, %v2129
  %v2131 = vlaneseq
  %v2132 = vshrl.u32 %v2131, 7
  %v2133 = vsub.s32 1, %v2132
  %v2134 = vrot.slane %v2125, %v2133
  %v2135 = vlaneseq
  %v2136 = vshrl.u32 %v2135, 7
  %v2137 = vsub.s32 2, %v2136
  %v2138 = vrot.slane %v2125, %v2137
  %v2139 = vlaneseq
  %v2140 = vshrl.u32 %v2139, 7
  %v2141 = vsub.s32 3, %v2140
  %v2142 = vrot.slane %v2125, %v2141
  %v2147 = vmul.f32 %v2123, %v2130
  %v2148 = vmul.f32 %v2122, %v2134
  %v2149 = vmul.f32 %v2121, %v2138
  %v2150 = vmul.f32 %v2120, %v2142
  %v2151 = vadd.f32 %v2107, %v2147
  %v2152 = vadd.f32 %v2108, %v2148
  %v2153 = vadd.f32 %v2109, %v2149
  %v2154 = vadd.f32 %v2110, %v2150
  %s2155 = scalar_lea.vmem %s3, 96
  %v2156 = vld [vmem:[%s2155] ss:$8 sm:$0xf]
  %v2158 = vlaneseq
  %v2159 = vshrl.u32 %v2158, 7
  %v2160 = vsub.s32 0, %v2159
  %v2161 = vrot.slane %v2156, %v2160
  %v2162 = vlaneseq
  %v2163 = vshrl.u32 %v2162, 7
  %v2164 = vsub.s32 1, %v2163
  %v2165 = vrot.slane %v2156, %v2164
  %v2166 = vlaneseq
  %v2167 = vshrl.u32 %v2166, 7
  %v2168 = vsub.s32 2, %v2167
  %v2169 = vrot.slane %v2156, %v2168
  %v2170 = vlaneseq
  %v2171 = vshrl.u32 %v2170, 7
  %v2172 = vsub.s32 3, %v2171
  %v2173 = vrot.slane %v2156, %v2172
  %v2178 = vmul.f32 %v1088, %v2161
  %v2179 = vmul.f32 %v1089, %v2165
  %v2180 = vmul.f32 %v1096, %v2169
  %v2181 = vmul.f32 %v1097, %v2173
  %v2182 = vadd.f32 %v2151, %v2178
  %v2183 = vadd.f32 %v2152, %v2179
  %v2184 = vadd.f32 %v2153, %v2180
  %v2185 = vadd.f32 %v2154, %v2181
  %2186 = vrot.lane.b32.xlu0 %v1088, 127
  %v2187 = vpop.permute.xlu0 %2186
  %2188 = vrot.lane.b32.xlu0 %v1089, 127
  %v2189 = vpop.permute.xlu0 %2188
  %2190 = vrot.lane.b32.xlu0 %v1096, 127
  %v2191 = vpop.permute.xlu0 %2190
  %2192 = vrot.lane.b32.xlu0 %v1097, 127
  %v2193 = vpop.permute.xlu0 %2192
  %vm2194 = vcmp.lt.s32.totalorder %v59, 127
  %v2195 = vsel %vm2194, %v2191, %v2193
  %v2196 = vsel %vm2194, %v2189, %v2191
  %v2197 = vsel %vm2194, %v2187, %v2189
  %v2198 = vsel %vm2194, %v2193, %v2187
  %s2199 = scalar_lea.vmem %s3, 97
  %v2200 = vld [vmem:[%s2199] ss:$8 sm:$0xf]
  %v2202 = vlaneseq
  %v2203 = vshrl.u32 %v2202, 7
  %v2204 = vsub.s32 0, %v2203
  %v2205 = vrot.slane %v2200, %v2204
  %v2206 = vlaneseq
  %v2207 = vshrl.u32 %v2206, 7
  %v2208 = vsub.s32 1, %v2207
  %v2209 = vrot.slane %v2200, %v2208
  %v2210 = vlaneseq
  %v2211 = vshrl.u32 %v2210, 7
  %v2212 = vsub.s32 2, %v2211
  %v2213 = vrot.slane %v2200, %v2212
  %v2214 = vlaneseq
  %v2215 = vshrl.u32 %v2214, 7
  %v2216 = vsub.s32 3, %v2215
  %v2217 = vrot.slane %v2200, %v2216
  %v2222 = vmul.f32 %v2197, %v2205
  %v2223 = vmul.f32 %v2196, %v2209
  %v2224 = vmul.f32 %v2195, %v2213
  %v2225 = vmul.f32 %v2198, %v2217
  %v2226 = vadd.f32 %v2182, %v2222
  %v2227 = vadd.f32 %v2183, %v2223
  %v2228 = vadd.f32 %v2184, %v2224
  %v2229 = vadd.f32 %v2185, %v2225
  %2230 = vrot.lane.b32.xlu0 %v1088, 126
  %v2231 = vpop.permute.xlu0 %2230
  %2232 = vrot.lane.b32.xlu0 %v1089, 126
  %v2233 = vpop.permute.xlu0 %2232
  %2234 = vrot.lane.b32.xlu0 %v1096, 126
  %v2235 = vpop.permute.xlu0 %2234
  %2236 = vrot.lane.b32.xlu0 %v1097, 126
  %v2237 = vpop.permute.xlu0 %2236
  %vm2238 = vcmp.lt.s32.totalorder %v59, 126
  %v2239 = vsel %vm2238, %v2235, %v2237
  %v2240 = vsel %vm2238, %v2233, %v2235
  %v2241 = vsel %vm2238, %v2231, %v2233
  %v2242 = vsel %vm2238, %v2237, %v2231
  %s2243 = scalar_lea.vmem %s3, 98
  %v2244 = vld [vmem:[%s2243] ss:$8 sm:$0xf]
  %v2246 = vlaneseq
  %v2247 = vshrl.u32 %v2246, 7
  %v2248 = vsub.s32 0, %v2247
  %v2249 = vrot.slane %v2244, %v2248
  %v2250 = vlaneseq
  %v2251 = vshrl.u32 %v2250, 7
  %v2252 = vsub.s32 1, %v2251
  %v2253 = vrot.slane %v2244, %v2252
  %v2254 = vlaneseq
  %v2255 = vshrl.u32 %v2254, 7
  %v2256 = vsub.s32 2, %v2255
  %v2257 = vrot.slane %v2244, %v2256
  %v2258 = vlaneseq
  %v2259 = vshrl.u32 %v2258, 7
  %v2260 = vsub.s32 3, %v2259
  %v2261 = vrot.slane %v2244, %v2260
  %v2266 = vmul.f32 %v2241, %v2249
  %v2267 = vmul.f32 %v2240, %v2253
  %v2268 = vmul.f32 %v2239, %v2257
  %v2269 = vmul.f32 %v2242, %v2261
  %v2270 = vadd.f32 %v2226, %v2266
  %v2271 = vadd.f32 %v2227, %v2267
  %v2272 = vadd.f32 %v2228, %v2268
  %v2273 = vadd.f32 %v2229, %v2269
  %2274 = vrot.lane.b32.xlu0 %v1088, 125
  %v2275 = vpop.permute.xlu0 %2274
  %2276 = vrot.lane.b32.xlu0 %v1089, 125
  %v2277 = vpop.permute.xlu0 %2276
  %2278 = vrot.lane.b32.xlu0 %v1096, 125
  %v2279 = vpop.permute.xlu0 %2278
  %2280 = vrot.lane.b32.xlu0 %v1097, 125
  %v2281 = vpop.permute.xlu0 %2280
  %vm2282 = vcmp.lt.s32.totalorder %v59, 125
  %v2283 = vsel %vm2282, %v2279, %v2281
  %v2284 = vsel %vm2282, %v2277, %v2279
  %v2285 = vsel %vm2282, %v2275, %v2277
  %v2286 = vsel %vm2282, %v2281, %v2275
  %s2287 = scalar_lea.vmem %s3, 99
  %v2288 = vld [vmem:[%s2287] ss:$8 sm:$0xf]
  %v2290 = vlaneseq
  %v2291 = vshrl.u32 %v2290, 7
  %v2292 = vsub.s32 0, %v2291
  %v2293 = vrot.slane %v2288, %v2292
  %v2294 = vlaneseq
  %v2295 = vshrl.u32 %v2294, 7
  %v2296 = vsub.s32 1, %v2295
  %v2297 = vrot.slane %v2288, %v2296
  %v2298 = vlaneseq
  %v2299 = vshrl.u32 %v2298, 7
  %v2300 = vsub.s32 2, %v2299
  %v2301 = vrot.slane %v2288, %v2300
  %v2302 = vlaneseq
  %v2303 = vshrl.u32 %v2302, 7
  %v2304 = vsub.s32 3, %v2303
  %v2305 = vrot.slane %v2288, %v2304
  %v2310 = vmul.f32 %v2285, %v2293
  %v2311 = vmul.f32 %v2284, %v2297
  %v2312 = vmul.f32 %v2283, %v2301
  %v2313 = vmul.f32 %v2286, %v2305
  %v2314 = vadd.f32 %v2270, %v2310
  %v2315 = vadd.f32 %v2271, %v2311
  %v2316 = vadd.f32 %v2272, %v2312
  %v2317 = vadd.f32 %v2273, %v2313
  %2318 = vrot.lane.b32.xlu0 %v1088, 115
  %v2319 = vpop.permute.xlu0 %2318
  %2320 = vrot.lane.b32.xlu0 %v1089, 115
  %v2321 = vpop.permute.xlu0 %2320
  %2322 = vrot.lane.b32.xlu0 %v1096, 115
  %v2323 = vpop.permute.xlu0 %2322
  %2324 = vrot.lane.b32.xlu0 %v1097, 115
  %v2325 = vpop.permute.xlu0 %2324
  %vm2326 = vcmp.lt.s32.totalorder %v59, 115
  %v2327 = vsel %vm2326, %v2323, %v2325
  %v2328 = vsel %vm2326, %v2321, %v2323
  %v2329 = vsel %vm2326, %v2319, %v2321
  %v2330 = vsel %vm2326, %v2325, %v2319
  %s2331 = scalar_lea.vmem %s3, 100
  %v2332 = vld [vmem:[%s2331] ss:$8 sm:$0xf]
  %v2334 = vlaneseq
  %v2335 = vshrl.u32 %v2334, 7
  %v2336 = vsub.s32 0, %v2335
  %v2337 = vrot.slane %v2332, %v2336
  %v2338 = vlaneseq
  %v2339 = vshrl.u32 %v2338, 7
  %v2340 = vsub.s32 1, %v2339
  %v2341 = vrot.slane %v2332, %v2340
  %v2342 = vlaneseq
  %v2343 = vshrl.u32 %v2342, 7
  %v2344 = vsub.s32 2, %v2343
  %v2345 = vrot.slane %v2332, %v2344
  %v2346 = vlaneseq
  %v2347 = vshrl.u32 %v2346, 7
  %v2348 = vsub.s32 3, %v2347
  %v2349 = vrot.slane %v2332, %v2348
  %v2354 = vmul.f32 %v2329, %v2337
  %v2355 = vmul.f32 %v2328, %v2341
  %v2356 = vmul.f32 %v2327, %v2345
  %v2357 = vmul.f32 %v2330, %v2349
  %v2358 = vadd.f32 %v2314, %v2354
  %v2359 = vadd.f32 %v2315, %v2355
  %v2360 = vadd.f32 %v2316, %v2356
  %v2361 = vadd.f32 %v2317, %v2357
  %2362 = vrot.lane.b32.xlu0 %v1088, 114
  %v2363 = vpop.permute.xlu0 %2362
  %2364 = vrot.lane.b32.xlu0 %v1089, 114
  %v2365 = vpop.permute.xlu0 %2364
  %2366 = vrot.lane.b32.xlu0 %v1096, 114
  %v2367 = vpop.permute.xlu0 %2366
  %2368 = vrot.lane.b32.xlu0 %v1097, 114
  %v2369 = vpop.permute.xlu0 %2368
  %vm2370 = vcmp.lt.s32.totalorder %v59, 114
  %v2371 = vsel %vm2370, %v2367, %v2369
  %v2372 = vsel %vm2370, %v2365, %v2367
  %v2373 = vsel %vm2370, %v2363, %v2365
  %v2374 = vsel %vm2370, %v2369, %v2363
  %s2375 = scalar_lea.vmem %s3, 101
  %v2376 = vld [vmem:[%s2375] ss:$8 sm:$0xf]
  %v2378 = vlaneseq
  %v2379 = vshrl.u32 %v2378, 7
  %v2380 = vsub.s32 0, %v2379
  %v2381 = vrot.slane %v2376, %v2380
  %v2382 = vlaneseq
  %v2383 = vshrl.u32 %v2382, 7
  %v2384 = vsub.s32 1, %v2383
  %v2385 = vrot.slane %v2376, %v2384
  %v2386 = vlaneseq
  %v2387 = vshrl.u32 %v2386, 7
  %v2388 = vsub.s32 2, %v2387
  %v2389 = vrot.slane %v2376, %v2388
  %v2390 = vlaneseq
  %v2391 = vshrl.u32 %v2390, 7
  %v2392 = vsub.s32 3, %v2391
  %v2393 = vrot.slane %v2376, %v2392
  %v2398 = vmul.f32 %v2373, %v2381
  %v2399 = vmul.f32 %v2372, %v2385
  %v2400 = vmul.f32 %v2371, %v2389
  %v2401 = vmul.f32 %v2374, %v2393
  %v2402 = vadd.f32 %v2358, %v2398
  %v2403 = vadd.f32 %v2359, %v2399
  %v2404 = vadd.f32 %v2360, %v2400
  %v2405 = vadd.f32 %v2361, %v2401
  %2406 = vrot.lane.b32.xlu0 %v1088, 113
  %v2407 = vpop.permute.xlu0 %2406
  %2408 = vrot.lane.b32.xlu0 %v1089, 113
  %v2409 = vpop.permute.xlu0 %2408
  %2410 = vrot.lane.b32.xlu0 %v1096, 113
  %v2411 = vpop.permute.xlu0 %2410
  %2412 = vrot.lane.b32.xlu0 %v1097, 113
  %v2413 = vpop.permute.xlu0 %2412
  %vm2414 = vcmp.lt.s32.totalorder %v59, 113
  %v2415 = vsel %vm2414, %v2411, %v2413
  %v2416 = vsel %vm2414, %v2409, %v2411
  %v2417 = vsel %vm2414, %v2407, %v2409
  %v2418 = vsel %vm2414, %v2413, %v2407
  %s2419 = scalar_lea.vmem %s3, 102
  %v2420 = vld [vmem:[%s2419] ss:$8 sm:$0xf]
  %v2422 = vlaneseq
  %v2423 = vshrl.u32 %v2422, 7
  %v2424 = vsub.s32 0, %v2423
  %v2425 = vrot.slane %v2420, %v2424
  %v2426 = vlaneseq
  %v2427 = vshrl.u32 %v2426, 7
  %v2428 = vsub.s32 1, %v2427
  %v2429 = vrot.slane %v2420, %v2428
  %v2430 = vlaneseq
  %v2431 = vshrl.u32 %v2430, 7
  %v2432 = vsub.s32 2, %v2431
  %v2433 = vrot.slane %v2420, %v2432
  %v2434 = vlaneseq
  %v2435 = vshrl.u32 %v2434, 7
  %v2436 = vsub.s32 3, %v2435
  %v2437 = vrot.slane %v2420, %v2436
  %v2442 = vmul.f32 %v2417, %v2425
  %v2443 = vmul.f32 %v2416, %v2429
  %v2444 = vmul.f32 %v2415, %v2433
  %v2445 = vmul.f32 %v2418, %v2437
  %v2446 = vadd.f32 %v2402, %v2442
  %v2447 = vadd.f32 %v2403, %v2443
  %v2448 = vadd.f32 %v2404, %v2444
  %v2449 = vadd.f32 %v2405, %v2445
  %2450 = vrot.lane.b32.xlu0 %v1088, 112
  %v2451 = vpop.permute.xlu0 %2450
  %2452 = vrot.lane.b32.xlu0 %v1089, 112
  %v2453 = vpop.permute.xlu0 %2452
  %2454 = vrot.lane.b32.xlu0 %v1096, 112
  %v2455 = vpop.permute.xlu0 %2454
  %2456 = vrot.lane.b32.xlu0 %v1097, 112
  %v2457 = vpop.permute.xlu0 %2456
  %vm2458 = vcmp.lt.s32.totalorder %v59, 112
  %v2459 = vsel %vm2458, %v2455, %v2457
  %v2460 = vsel %vm2458, %v2453, %v2455
  %v2461 = vsel %vm2458, %v2451, %v2453
  %v2462 = vsel %vm2458, %v2457, %v2451
  %s2463 = scalar_lea.vmem %s3, 103
  %v2464 = vld [vmem:[%s2463] ss:$8 sm:$0xf]
  %v2466 = vlaneseq
  %v2467 = vshrl.u32 %v2466, 7
  %v2468 = vsub.s32 0, %v2467
  %v2469 = vrot.slane %v2464, %v2468
  %v2470 = vlaneseq
  %v2471 = vshrl.u32 %v2470, 7
  %v2472 = vsub.s32 1, %v2471
  %v2473 = vrot.slane %v2464, %v2472
  %v2474 = vlaneseq
  %v2475 = vshrl.u32 %v2474, 7
  %v2476 = vsub.s32 2, %v2475
  %v2477 = vrot.slane %v2464, %v2476
  %v2478 = vlaneseq
  %v2479 = vshrl.u32 %v2478, 7
  %v2480 = vsub.s32 3, %v2479
  %v2481 = vrot.slane %v2464, %v2480
  %v2486 = vmul.f32 %v2461, %v2469
  %v2487 = vmul.f32 %v2460, %v2473
  %v2488 = vmul.f32 %v2459, %v2477
  %v2489 = vmul.f32 %v2462, %v2481
  %v2490 = vadd.f32 %v2446, %v2486
  %v2491 = vadd.f32 %v2447, %v2487
  %v2492 = vadd.f32 %v2448, %v2488
  %v2493 = vadd.f32 %v2449, %v2489
  %2494 = vrot.lane.b32.xlu0 %v1088, 111
  %v2495 = vpop.permute.xlu0 %2494
  %2496 = vrot.lane.b32.xlu0 %v1089, 111
  %v2497 = vpop.permute.xlu0 %2496
  %2498 = vrot.lane.b32.xlu0 %v1096, 111
  %v2499 = vpop.permute.xlu0 %2498
  %2500 = vrot.lane.b32.xlu0 %v1097, 111
  %v2501 = vpop.permute.xlu0 %2500
  %vm2502 = vcmp.lt.s32.totalorder %v59, 111
  %v2503 = vsel %vm2502, %v2499, %v2501
  %v2504 = vsel %vm2502, %v2497, %v2499
  %v2505 = vsel %vm2502, %v2495, %v2497
  %v2506 = vsel %vm2502, %v2501, %v2495
  %s2507 = scalar_lea.vmem %s3, 128
  %v2508 = vld [vmem:[%s2507] ss:$8 sm:$0xf]
  %v2510 = vlaneseq
  %v2511 = vshrl.u32 %v2510, 7
  %v2512 = vsub.s32 0, %v2511
  %v2513 = vrot.slane %v2508, %v2512
  %v2514 = vlaneseq
  %v2515 = vshrl.u32 %v2514, 7
  %v2516 = vsub.s32 1, %v2515
  %v2517 = vrot.slane %v2508, %v2516
  %v2518 = vlaneseq
  %v2519 = vshrl.u32 %v2518, 7
  %v2520 = vsub.s32 2, %v2519
  %v2521 = vrot.slane %v2508, %v2520
  %v2522 = vlaneseq
  %v2523 = vshrl.u32 %v2522, 7
  %v2524 = vsub.s32 3, %v2523
  %v2525 = vrot.slane %v2508, %v2524
  %v2530 = vmul.f32 %v2505, %v2513
  %v2531 = vmul.f32 %v2504, %v2517
  %v2532 = vmul.f32 %v2503, %v2521
  %v2533 = vmul.f32 %v2506, %v2525
  %v2534 = vadd.f32 %v2490, %v2530
  %v2535 = vadd.f32 %v2491, %v2531
  %v2536 = vadd.f32 %v2492, %v2532
  %v2537 = vadd.f32 %v2493, %v2533
  %2538 = vrot.lane.b32.xlu0 %v1088, 110
  %v2539 = vpop.permute.xlu0 %2538
  %2540 = vrot.lane.b32.xlu0 %v1089, 110
  %v2541 = vpop.permute.xlu0 %2540
  %2542 = vrot.lane.b32.xlu0 %v1096, 110
  %v2543 = vpop.permute.xlu0 %2542
  %2544 = vrot.lane.b32.xlu0 %v1097, 110
  %v2545 = vpop.permute.xlu0 %2544
  %vm2546 = vcmp.lt.s32.totalorder %v59, 110
  %v2547 = vsel %vm2546, %v2543, %v2545
  %v2548 = vsel %vm2546, %v2541, %v2543
  %v2549 = vsel %vm2546, %v2539, %v2541
  %v2550 = vsel %vm2546, %v2545, %v2539
  %s2551 = scalar_lea.vmem %s3, 129
  %v2552 = vld [vmem:[%s2551] ss:$8 sm:$0xf]
  %v2554 = vlaneseq
  %v2555 = vshrl.u32 %v2554, 7
  %v2556 = vsub.s32 0, %v2555
  %v2557 = vrot.slane %v2552, %v2556
  %v2558 = vlaneseq
  %v2559 = vshrl.u32 %v2558, 7
  %v2560 = vsub.s32 1, %v2559
  %v2561 = vrot.slane %v2552, %v2560
  %v2562 = vlaneseq
  %v2563 = vshrl.u32 %v2562, 7
  %v2564 = vsub.s32 2, %v2563
  %v2565 = vrot.slane %v2552, %v2564
  %v2566 = vlaneseq
  %v2567 = vshrl.u32 %v2566, 7
  %v2568 = vsub.s32 3, %v2567
  %v2569 = vrot.slane %v2552, %v2568
  %v2574 = vmul.f32 %v2549, %v2557
  %v2575 = vmul.f32 %v2548, %v2561
  %v2576 = vmul.f32 %v2547, %v2565
  %v2577 = vmul.f32 %v2550, %v2569
  %v2578 = vadd.f32 %v2534, %v2574
  %v2579 = vadd.f32 %v2535, %v2575
  %v2580 = vadd.f32 %v2536, %v2576
  %v2581 = vadd.f32 %v2537, %v2577
  %2582 = vrot.lane.b32.xlu0 %v1088, 109
  %v2583 = vpop.permute.xlu0 %2582
  %2584 = vrot.lane.b32.xlu0 %v1089, 109
  %v2585 = vpop.permute.xlu0 %2584
  %2586 = vrot.lane.b32.xlu0 %v1096, 109
  %v2587 = vpop.permute.xlu0 %2586
  %2588 = vrot.lane.b32.xlu0 %v1097, 109
  %v2589 = vpop.permute.xlu0 %2588
  %vm2590 = vcmp.lt.s32.totalorder %v59, 109
  %v2591 = vsel %vm2590, %v2587, %v2589
  %v2592 = vsel %vm2590, %v2585, %v2587
  %v2593 = vsel %vm2590, %v2583, %v2585
  %v2594 = vsel %vm2590, %v2589, %v2583
  %s2595 = scalar_lea.vmem %s3, 130
  %v2596 = vld [vmem:[%s2595] ss:$8 sm:$0xf]
  %v2598 = vlaneseq
  %v2599 = vshrl.u32 %v2598, 7
  %v2600 = vsub.s32 0, %v2599
  %v2601 = vrot.slane %v2596, %v2600
  %v2602 = vlaneseq
  %v2603 = vshrl.u32 %v2602, 7
  %v2604 = vsub.s32 1, %v2603
  %v2605 = vrot.slane %v2596, %v2604
  %v2606 = vlaneseq
  %v2607 = vshrl.u32 %v2606, 7
  %v2608 = vsub.s32 2, %v2607
  %v2609 = vrot.slane %v2596, %v2608
  %v2610 = vlaneseq
  %v2611 = vshrl.u32 %v2610, 7
  %v2612 = vsub.s32 3, %v2611
  %v2613 = vrot.slane %v2596, %v2612
  %v2618 = vmul.f32 %v2593, %v2601
  %v2619 = vmul.f32 %v2592, %v2605
  %v2620 = vmul.f32 %v2591, %v2609
  %v2621 = vmul.f32 %v2594, %v2613
  %v2622 = vadd.f32 %v2578, %v2618
  %v2623 = vadd.f32 %v2579, %v2619
  %v2624 = vadd.f32 %v2580, %v2620
  %v2625 = vadd.f32 %v2581, %v2621
  %2626 = vrot.lane.b32.xlu0 %v1088, 99
  %v2627 = vpop.permute.xlu0 %2626
  %2628 = vrot.lane.b32.xlu0 %v1089, 99
  %v2629 = vpop.permute.xlu0 %2628
  %2630 = vrot.lane.b32.xlu0 %v1096, 99
  %v2631 = vpop.permute.xlu0 %2630
  %2632 = vrot.lane.b32.xlu0 %v1097, 99
  %v2633 = vpop.permute.xlu0 %2632
  %vm2634 = vcmp.lt.s32.totalorder %v59, 99
  %v2635 = vsel %vm2634, %v2631, %v2633
  %v2636 = vsel %vm2634, %v2629, %v2631
  %v2637 = vsel %vm2634, %v2627, %v2629
  %v2638 = vsel %vm2634, %v2633, %v2627
  %s2639 = scalar_lea.vmem %s3, 131
  %v2640 = vld [vmem:[%s2639] ss:$8 sm:$0xf]
  %v2642 = vlaneseq
  %v2643 = vshrl.u32 %v2642, 7
  %v2644 = vsub.s32 0, %v2643
  %v2645 = vrot.slane %v2640, %v2644
  %v2646 = vlaneseq
  %v2647 = vshrl.u32 %v2646, 7
  %v2648 = vsub.s32 1, %v2647
  %v2649 = vrot.slane %v2640, %v2648
  %v2650 = vlaneseq
  %v2651 = vshrl.u32 %v2650, 7
  %v2652 = vsub.s32 2, %v2651
  %v2653 = vrot.slane %v2640, %v2652
  %v2654 = vlaneseq
  %v2655 = vshrl.u32 %v2654, 7
  %v2656 = vsub.s32 3, %v2655
  %v2657 = vrot.slane %v2640, %v2656
  %v2662 = vmul.f32 %v2637, %v2645
  %v2663 = vmul.f32 %v2636, %v2649
  %v2664 = vmul.f32 %v2635, %v2653
  %v2665 = vmul.f32 %v2638, %v2657
  %v2666 = vadd.f32 %v2622, %v2662
  %v2667 = vadd.f32 %v2623, %v2663
  %v2668 = vadd.f32 %v2624, %v2664
  %v2669 = vadd.f32 %v2625, %v2665
  %2670 = vrot.lane.b32.xlu0 %v1088, 98
  %v2671 = vpop.permute.xlu0 %2670
  %2672 = vrot.lane.b32.xlu0 %v1089, 98
  %v2673 = vpop.permute.xlu0 %2672
  %2674 = vrot.lane.b32.xlu0 %v1096, 98
  %v2675 = vpop.permute.xlu0 %2674
  %2676 = vrot.lane.b32.xlu0 %v1097, 98
  %v2677 = vpop.permute.xlu0 %2676
  %vm2678 = vcmp.lt.s32.totalorder %v59, 98
  %v2679 = vsel %vm2678, %v2675, %v2677
  %v2680 = vsel %vm2678, %v2673, %v2675
  %v2681 = vsel %vm2678, %v2671, %v2673
  %v2682 = vsel %vm2678, %v2677, %v2671
  %s2683 = scalar_lea.vmem %s3, 132
  %v2684 = vld [vmem:[%s2683] ss:$8 sm:$0xf]
  %v2686 = vlaneseq
  %v2687 = vshrl.u32 %v2686, 7
  %v2688 = vsub.s32 0, %v2687
  %v2689 = vrot.slane %v2684, %v2688
  %v2690 = vlaneseq
  %v2691 = vshrl.u32 %v2690, 7
  %v2692 = vsub.s32 1, %v2691
  %v2693 = vrot.slane %v2684, %v2692
  %v2694 = vlaneseq
  %v2695 = vshrl.u32 %v2694, 7
  %v2696 = vsub.s32 2, %v2695
  %v2697 = vrot.slane %v2684, %v2696
  %v2698 = vlaneseq
  %v2699 = vshrl.u32 %v2698, 7
  %v2700 = vsub.s32 3, %v2699
  %v2701 = vrot.slane %v2684, %v2700
  %v2706 = vmul.f32 %v2681, %v2689
  %v2707 = vmul.f32 %v2680, %v2693
  %v2708 = vmul.f32 %v2679, %v2697
  %v2709 = vmul.f32 %v2682, %v2701
  %v2710 = vadd.f32 %v2666, %v2706
  %v2711 = vadd.f32 %v2667, %v2707
  %v2712 = vadd.f32 %v2668, %v2708
  %v2713 = vadd.f32 %v2669, %v2709
  %2714 = vrot.lane.b32.xlu0 %v1088, 97
  %v2715 = vpop.permute.xlu0 %2714
  %2716 = vrot.lane.b32.xlu0 %v1089, 97
  %v2717 = vpop.permute.xlu0 %2716
  %2718 = vrot.lane.b32.xlu0 %v1096, 97
  %v2719 = vpop.permute.xlu0 %2718
  %2720 = vrot.lane.b32.xlu0 %v1097, 97
  %v2721 = vpop.permute.xlu0 %2720
  %vm2722 = vcmp.lt.s32.totalorder %v59, 97
  %v2723 = vsel %vm2722, %v2719, %v2721
  %v2724 = vsel %vm2722, %v2717, %v2719
  %v2725 = vsel %vm2722, %v2715, %v2717
  %v2726 = vsel %vm2722, %v2721, %v2715
  %s2727 = scalar_lea.vmem %s3, 133
  %v2728 = vld [vmem:[%s2727] ss:$8 sm:$0xf]
  %v2730 = vlaneseq
  %v2731 = vshrl.u32 %v2730, 7
  %v2732 = vsub.s32 0, %v2731
  %v2733 = vrot.slane %v2728, %v2732
  %v2734 = vlaneseq
  %v2735 = vshrl.u32 %v2734, 7
  %v2736 = vsub.s32 1, %v2735
  %v2737 = vrot.slane %v2728, %v2736
  %v2738 = vlaneseq
  %v2739 = vshrl.u32 %v2738, 7
  %v2740 = vsub.s32 2, %v2739
  %v2741 = vrot.slane %v2728, %v2740
  %v2742 = vlaneseq
  %v2743 = vshrl.u32 %v2742, 7
  %v2744 = vsub.s32 3, %v2743
  %v2745 = vrot.slane %v2728, %v2744
  %v2750 = vmul.f32 %v2725, %v2733
  %v2751 = vmul.f32 %v2724, %v2737
  %v2752 = vmul.f32 %v2723, %v2741
  %v2753 = vmul.f32 %v2726, %v2745
  %v2754 = vadd.f32 %v2710, %v2750
  %v2755 = vadd.f32 %v2711, %v2751
  %v2756 = vadd.f32 %v2712, %v2752
  %v2757 = vadd.f32 %v2713, %v2753
  %2758 = vrot.lane.b32.xlu0 %v1088, 96
  %v2759 = vpop.permute.xlu0 %2758
  %2760 = vrot.lane.b32.xlu0 %v1089, 96
  %v2761 = vpop.permute.xlu0 %2760
  %2762 = vrot.lane.b32.xlu0 %v1096, 96
  %v2763 = vpop.permute.xlu0 %2762
  %2764 = vrot.lane.b32.xlu0 %v1097, 96
  %v2765 = vpop.permute.xlu0 %2764
  %vm2766 = vcmp.lt.s32.totalorder %v59, 96
  %v2767 = vsel %vm2766, %v2763, %v2765
  %v2768 = vsel %vm2766, %v2761, %v2763
  %v2769 = vsel %vm2766, %v2759, %v2761
  %v2770 = vsel %vm2766, %v2765, %v2759
  %s2771 = scalar_lea.vmem %s3, 134
  %v2772 = vld [vmem:[%s2771] ss:$8 sm:$0xf]
  %v2774 = vlaneseq
  %v2775 = vshrl.u32 %v2774, 7
  %v2776 = vsub.s32 0, %v2775
  %v2777 = vrot.slane %v2772, %v2776
  %v2778 = vlaneseq
  %v2779 = vshrl.u32 %v2778, 7
  %v2780 = vsub.s32 1, %v2779
  %v2781 = vrot.slane %v2772, %v2780
  %v2782 = vlaneseq
  %v2783 = vshrl.u32 %v2782, 7
  %v2784 = vsub.s32 2, %v2783
  %v2785 = vrot.slane %v2772, %v2784
  %v2786 = vlaneseq
  %v2787 = vshrl.u32 %v2786, 7
  %v2788 = vsub.s32 3, %v2787
  %v2789 = vrot.slane %v2772, %v2788
  %v2794 = vmul.f32 %v2769, %v2777
  %v2795 = vmul.f32 %v2768, %v2781
  %v2796 = vmul.f32 %v2767, %v2785
  %v2797 = vmul.f32 %v2770, %v2789
  %v2798 = vadd.f32 %v2754, %v2794
  %v2799 = vadd.f32 %v2755, %v2795
  %v2800 = vadd.f32 %v2756, %v2796
  %v2801 = vadd.f32 %v2757, %v2797
  %2802 = vrot.lane.b32.xlu0 %v1088, 95
  %v2803 = vpop.permute.xlu0 %2802
  %2804 = vrot.lane.b32.xlu0 %v1089, 95
  %v2805 = vpop.permute.xlu0 %2804
  %2806 = vrot.lane.b32.xlu0 %v1096, 95
  %v2807 = vpop.permute.xlu0 %2806
  %2808 = vrot.lane.b32.xlu0 %v1097, 95
  %v2809 = vpop.permute.xlu0 %2808
  %vm2810 = vcmp.lt.s32.totalorder %v59, 95
  %v2811 = vsel %vm2810, %v2807, %v2809
  %v2812 = vsel %vm2810, %v2805, %v2807
  %v2813 = vsel %vm2810, %v2803, %v2805
  %v2814 = vsel %vm2810, %v2809, %v2803
  %s2815 = scalar_lea.vmem %s3, 135
  %v2816 = vld [vmem:[%s2815] ss:$8 sm:$0xf]
  %v2818 = vlaneseq
  %v2819 = vshrl.u32 %v2818, 7
  %v2820 = vsub.s32 0, %v2819
  %v2821 = vrot.slane %v2816, %v2820
  %v2822 = vlaneseq
  %v2823 = vshrl.u32 %v2822, 7
  %v2824 = vsub.s32 1, %v2823
  %v2825 = vrot.slane %v2816, %v2824
  %v2826 = vlaneseq
  %v2827 = vshrl.u32 %v2826, 7
  %v2828 = vsub.s32 2, %v2827
  %v2829 = vrot.slane %v2816, %v2828
  %v2830 = vlaneseq
  %v2831 = vshrl.u32 %v2830, 7
  %v2832 = vsub.s32 3, %v2831
  %v2833 = vrot.slane %v2816, %v2832
  %v2838 = vmul.f32 %v2813, %v2821
  %v2839 = vmul.f32 %v2812, %v2825
  %v2840 = vmul.f32 %v2811, %v2829
  %v2841 = vmul.f32 %v2814, %v2833
  %v2842 = vadd.f32 %v2798, %v2838
  %v2843 = vadd.f32 %v2799, %v2839
  %v2844 = vadd.f32 %v2800, %v2840
  %v2845 = vadd.f32 %v2801, %v2841
  %2846 = vrot.lane.b32.xlu0 %v1088, 94
  %v2847 = vpop.permute.xlu0 %2846
  %2848 = vrot.lane.b32.xlu0 %v1089, 94
  %v2849 = vpop.permute.xlu0 %2848
  %2850 = vrot.lane.b32.xlu0 %v1096, 94
  %v2851 = vpop.permute.xlu0 %2850
  %2852 = vrot.lane.b32.xlu0 %v1097, 94
  %v2853 = vpop.permute.xlu0 %2852
  %vm2854 = vcmp.lt.s32.totalorder %v59, 94
  %v2855 = vsel %vm2854, %v2851, %v2853
  %v2856 = vsel %vm2854, %v2849, %v2851
  %v2857 = vsel %vm2854, %v2847, %v2849
  %v2858 = vsel %vm2854, %v2853, %v2847
  %s2859 = scalar_lea.vmem %s3, 160
  %v2860 = vld [vmem:[%s2859] ss:$8 sm:$0xf]
  %v2862 = vlaneseq
  %v2863 = vshrl.u32 %v2862, 7
  %v2864 = vsub.s32 0, %v2863
  %v2865 = vrot.slane %v2860, %v2864
  %v2866 = vlaneseq
  %v2867 = vshrl.u32 %v2866, 7
  %v2868 = vsub.s32 1, %v2867
  %v2869 = vrot.slane %v2860, %v2868
  %v2870 = vlaneseq
  %v2871 = vshrl.u32 %v2870, 7
  %v2872 = vsub.s32 2, %v2871
  %v2873 = vrot.slane %v2860, %v2872
  %v2874 = vlaneseq
  %v2875 = vshrl.u32 %v2874, 7
  %v2876 = vsub.s32 3, %v2875
  %v2877 = vrot.slane %v2860, %v2876
  %v2882 = vmul.f32 %v2857, %v2865
  %v2883 = vmul.f32 %v2856, %v2869
  %v2884 = vmul.f32 %v2855, %v2873
  %v2885 = vmul.f32 %v2858, %v2877
  %v2886 = vadd.f32 %v2842, %v2882
  %v2887 = vadd.f32 %v2843, %v2883
  %v2888 = vadd.f32 %v2844, %v2884
  %v2889 = vadd.f32 %v2845, %v2885
  %2890 = vrot.lane.b32.xlu0 %v1088, 93
  %v2891 = vpop.permute.xlu0 %2890
  %2892 = vrot.lane.b32.xlu0 %v1089, 93
  %v2893 = vpop.permute.xlu0 %2892
  %2894 = vrot.lane.b32.xlu0 %v1096, 93
  %v2895 = vpop.permute.xlu0 %2894
  %2896 = vrot.lane.b32.xlu0 %v1097, 93
  %v2897 = vpop.permute.xlu0 %2896
  %vm2898 = vcmp.lt.s32.totalorder %v59, 93
  %v2899 = vsel %vm2898, %v2895, %v2897
  %v2900 = vsel %vm2898, %v2893, %v2895
  %v2901 = vsel %vm2898, %v2891, %v2893
  %v2902 = vsel %vm2898, %v2897, %v2891
  %s2903 = scalar_lea.vmem %s3, 161
  %v2904 = vld [vmem:[%s2903] ss:$8 sm:$0xf]
  %v2906 = vlaneseq
  %v2907 = vshrl.u32 %v2906, 7
  %v2908 = vsub.s32 0, %v2907
  %v2909 = vrot.slane %v2904, %v2908
  %v2910 = vlaneseq
  %v2911 = vshrl.u32 %v2910, 7
  %v2912 = vsub.s32 1, %v2911
  %v2913 = vrot.slane %v2904, %v2912
  %v2914 = vlaneseq
  %v2915 = vshrl.u32 %v2914, 7
  %v2916 = vsub.s32 2, %v2915
  %v2917 = vrot.slane %v2904, %v2916
  %v2918 = vlaneseq
  %v2919 = vshrl.u32 %v2918, 7
  %v2920 = vsub.s32 3, %v2919
  %v2921 = vrot.slane %v2904, %v2920
  %v2926 = vmul.f32 %v2901, %v2909
  %v2927 = vmul.f32 %v2900, %v2913
  %v2928 = vmul.f32 %v2899, %v2917
  %v2929 = vmul.f32 %v2902, %v2921
  %v2930 = vadd.f32 %v2886, %v2926
  %v2931 = vadd.f32 %v2887, %v2927
  %v2932 = vadd.f32 %v2888, %v2928
  %v2933 = vadd.f32 %v2889, %v2929
  %2934 = vrot.lane.b32.xlu0 %v1088, 83
  %v2935 = vpop.permute.xlu0 %2934
  %2936 = vrot.lane.b32.xlu0 %v1089, 83
  %v2937 = vpop.permute.xlu0 %2936
  %2938 = vrot.lane.b32.xlu0 %v1096, 83
  %v2939 = vpop.permute.xlu0 %2938
  %2940 = vrot.lane.b32.xlu0 %v1097, 83
  %v2941 = vpop.permute.xlu0 %2940
  %vm2942 = vcmp.lt.s32.totalorder %v59, 83
  %v2943 = vsel %vm2942, %v2939, %v2941
  %v2944 = vsel %vm2942, %v2937, %v2939
  %v2945 = vsel %vm2942, %v2935, %v2937
  %v2946 = vsel %vm2942, %v2941, %v2935
  %s2947 = scalar_lea.vmem %s3, 162
  %v2948 = vld [vmem:[%s2947] ss:$8 sm:$0xf]
  %v2950 = vlaneseq
  %v2951 = vshrl.u32 %v2950, 7
  %v2952 = vsub.s32 0, %v2951
  %v2953 = vrot.slane %v2948, %v2952
  %v2954 = vlaneseq
  %v2955 = vshrl.u32 %v2954, 7
  %v2956 = vsub.s32 1, %v2955
  %v2957 = vrot.slane %v2948, %v2956
  %v2958 = vlaneseq
  %v2959 = vshrl.u32 %v2958, 7
  %v2960 = vsub.s32 2, %v2959
  %v2961 = vrot.slane %v2948, %v2960
  %v2962 = vlaneseq
  %v2963 = vshrl.u32 %v2962, 7
  %v2964 = vsub.s32 3, %v2963
  %v2965 = vrot.slane %v2948, %v2964
  %v2970 = vmul.f32 %v2945, %v2953
  %v2971 = vmul.f32 %v2944, %v2957
  %v2972 = vmul.f32 %v2943, %v2961
  %v2973 = vmul.f32 %v2946, %v2965
  %v2974 = vadd.f32 %v2930, %v2970
  %v2975 = vadd.f32 %v2931, %v2971
  %v2976 = vadd.f32 %v2932, %v2972
  %v2977 = vadd.f32 %v2933, %v2973
  %2978 = vrot.lane.b32.xlu0 %v1088, 82
  %v2979 = vpop.permute.xlu0 %2978
  %2980 = vrot.lane.b32.xlu0 %v1089, 82
  %v2981 = vpop.permute.xlu0 %2980
  %2982 = vrot.lane.b32.xlu0 %v1096, 82
  %v2983 = vpop.permute.xlu0 %2982
  %2984 = vrot.lane.b32.xlu0 %v1097, 82
  %v2985 = vpop.permute.xlu0 %2984
  %vm2986 = vcmp.lt.s32.totalorder %v59, 82
  %v2987 = vsel %vm2986, %v2983, %v2985
  %v2988 = vsel %vm2986, %v2981, %v2983
  %v2989 = vsel %vm2986, %v2979, %v2981
  %v2990 = vsel %vm2986, %v2985, %v2979
  %s2991 = scalar_lea.vmem %s3, 163
  %v2992 = vld [vmem:[%s2991] ss:$8 sm:$0xf]
  %v2994 = vlaneseq
  %v2995 = vshrl.u32 %v2994, 7
  %v2996 = vsub.s32 0, %v2995
  %v2997 = vrot.slane %v2992, %v2996
  %v2998 = vlaneseq
  %v2999 = vshrl.u32 %v2998, 7
  %v3000 = vsub.s32 1, %v2999
  %v3001 = vrot.slane %v2992, %v3000
  %v3002 = vlaneseq
  %v3003 = vshrl.u32 %v3002, 7
  %v3004 = vsub.s32 2, %v3003
  %v3005 = vrot.slane %v2992, %v3004
  %v3006 = vlaneseq
  %v3007 = vshrl.u32 %v3006, 7
  %v3008 = vsub.s32 3, %v3007
  %v3009 = vrot.slane %v2992, %v3008
  %v3014 = vmul.f32 %v2989, %v2997
  %v3015 = vmul.f32 %v2988, %v3001
  %v3016 = vmul.f32 %v2987, %v3005
  %v3017 = vmul.f32 %v2990, %v3009
  %v3018 = vadd.f32 %v2974, %v3014
  %v3019 = vadd.f32 %v2975, %v3015
  %v3020 = vadd.f32 %v2976, %v3016
  %v3021 = vadd.f32 %v2977, %v3017
  %3022 = vrot.lane.b32.xlu0 %v1088, 81
  %v3023 = vpop.permute.xlu0 %3022
  %3024 = vrot.lane.b32.xlu0 %v1089, 81
  %v3025 = vpop.permute.xlu0 %3024
  %3026 = vrot.lane.b32.xlu0 %v1096, 81
  %v3027 = vpop.permute.xlu0 %3026
  %3028 = vrot.lane.b32.xlu0 %v1097, 81
  %v3029 = vpop.permute.xlu0 %3028
  %vm3030 = vcmp.lt.s32.totalorder %v59, 81
  %v3031 = vsel %vm3030, %v3027, %v3029
  %v3032 = vsel %vm3030, %v3025, %v3027
  %v3033 = vsel %vm3030, %v3023, %v3025
  %v3034 = vsel %vm3030, %v3029, %v3023
  %s3035 = scalar_lea.vmem %s3, 164
  %v3036 = vld [vmem:[%s3035] ss:$8 sm:$0xf]
  %v3038 = vlaneseq
  %v3039 = vshrl.u32 %v3038, 7
  %v3040 = vsub.s32 0, %v3039
  %v3041 = vrot.slane %v3036, %v3040
  %v3042 = vlaneseq
  %v3043 = vshrl.u32 %v3042, 7
  %v3044 = vsub.s32 1, %v3043
  %v3045 = vrot.slane %v3036, %v3044
  %v3046 = vlaneseq
  %v3047 = vshrl.u32 %v3046, 7
  %v3048 = vsub.s32 2, %v3047
  %v3049 = vrot.slane %v3036, %v3048
  %v3050 = vlaneseq
  %v3051 = vshrl.u32 %v3050, 7
  %v3052 = vsub.s32 3, %v3051
  %v3053 = vrot.slane %v3036, %v3052
  %v3058 = vmul.f32 %v3033, %v3041
  %v3059 = vmul.f32 %v3032, %v3045
  %v3060 = vmul.f32 %v3031, %v3049
  %v3061 = vmul.f32 %v3034, %v3053
  %v3062 = vadd.f32 %v3018, %v3058
  %v3063 = vadd.f32 %v3019, %v3059
  %v3064 = vadd.f32 %v3020, %v3060
  %v3065 = vadd.f32 %v3021, %v3061
  %3066 = vrot.lane.b32.xlu0 %v1088, 80
  %v3067 = vpop.permute.xlu0 %3066
  %3068 = vrot.lane.b32.xlu0 %v1089, 80
  %v3069 = vpop.permute.xlu0 %3068
  %3070 = vrot.lane.b32.xlu0 %v1096, 80
  %v3071 = vpop.permute.xlu0 %3070
  %3072 = vrot.lane.b32.xlu0 %v1097, 80
  %v3073 = vpop.permute.xlu0 %3072
  %vm3074 = vcmp.lt.s32.totalorder %v59, 80
  %v3075 = vsel %vm3074, %v3071, %v3073
  %v3076 = vsel %vm3074, %v3069, %v3071
  %v3077 = vsel %vm3074, %v3067, %v3069
  %v3078 = vsel %vm3074, %v3073, %v3067
  %s3079 = scalar_lea.vmem %s3, 165
  %v3080 = vld [vmem:[%s3079] ss:$8 sm:$0xf]
  %v3082 = vlaneseq
  %v3083 = vshrl.u32 %v3082, 7
  %v3084 = vsub.s32 0, %v3083
  %v3085 = vrot.slane %v3080, %v3084
  %v3086 = vlaneseq
  %v3087 = vshrl.u32 %v3086, 7
  %v3088 = vsub.s32 1, %v3087
  %v3089 = vrot.slane %v3080, %v3088
  %v3090 = vlaneseq
  %v3091 = vshrl.u32 %v3090, 7
  %v3092 = vsub.s32 2, %v3091
  %v3093 = vrot.slane %v3080, %v3092
  %v3094 = vlaneseq
  %v3095 = vshrl.u32 %v3094, 7
  %v3096 = vsub.s32 3, %v3095
  %v3097 = vrot.slane %v3080, %v3096
  %v3102 = vmul.f32 %v3077, %v3085
  %v3103 = vmul.f32 %v3076, %v3089
  %v3104 = vmul.f32 %v3075, %v3093
  %v3105 = vmul.f32 %v3078, %v3097
  %v3106 = vadd.f32 %v3062, %v3102
  %v3107 = vadd.f32 %v3063, %v3103
  %v3108 = vadd.f32 %v3064, %v3104
  %v3109 = vadd.f32 %v3065, %v3105
  %3110 = vrot.lane.b32.xlu0 %v1088, 79
  %v3111 = vpop.permute.xlu0 %3110
  %3112 = vrot.lane.b32.xlu0 %v1089, 79
  %v3113 = vpop.permute.xlu0 %3112
  %3114 = vrot.lane.b32.xlu0 %v1096, 79
  %v3115 = vpop.permute.xlu0 %3114
  %3116 = vrot.lane.b32.xlu0 %v1097, 79
  %v3117 = vpop.permute.xlu0 %3116
  %vm3118 = vcmp.lt.s32.totalorder %v59, 79
  %v3119 = vsel %vm3118, %v3115, %v3117
  %v3120 = vsel %vm3118, %v3113, %v3115
  %v3121 = vsel %vm3118, %v3111, %v3113
  %v3122 = vsel %vm3118, %v3117, %v3111
  %s3123 = scalar_lea.vmem %s3, 166
  %v3124 = vld [vmem:[%s3123] ss:$8 sm:$0xf]
  %v3126 = vlaneseq
  %v3127 = vshrl.u32 %v3126, 7
  %v3128 = vsub.s32 0, %v3127
  %v3129 = vrot.slane %v3124, %v3128
  %v3130 = vlaneseq
  %v3131 = vshrl.u32 %v3130, 7
  %v3132 = vsub.s32 1, %v3131
  %v3133 = vrot.slane %v3124, %v3132
  %v3134 = vlaneseq
  %v3135 = vshrl.u32 %v3134, 7
  %v3136 = vsub.s32 2, %v3135
  %v3137 = vrot.slane %v3124, %v3136
  %v3138 = vlaneseq
  %v3139 = vshrl.u32 %v3138, 7
  %v3140 = vsub.s32 3, %v3139
  %v3141 = vrot.slane %v3124, %v3140
  %v3146 = vmul.f32 %v3121, %v3129
  %v3147 = vmul.f32 %v3120, %v3133
  %v3148 = vmul.f32 %v3119, %v3137
  %v3149 = vmul.f32 %v3122, %v3141
  %v3150 = vadd.f32 %v3106, %v3146
  %v3151 = vadd.f32 %v3107, %v3147
  %v3152 = vadd.f32 %v3108, %v3148
  %v3153 = vadd.f32 %v3109, %v3149
  %3154 = vrot.lane.b32.xlu0 %v1088, 78
  %v3155 = vpop.permute.xlu0 %3154
  %3156 = vrot.lane.b32.xlu0 %v1089, 78
  %v3157 = vpop.permute.xlu0 %3156
  %3158 = vrot.lane.b32.xlu0 %v1096, 78
  %v3159 = vpop.permute.xlu0 %3158
  %3160 = vrot.lane.b32.xlu0 %v1097, 78
  %v3161 = vpop.permute.xlu0 %3160
  %vm3162 = vcmp.lt.s32.totalorder %v59, 78
  %v3163 = vsel %vm3162, %v3159, %v3161
  %v3164 = vsel %vm3162, %v3157, %v3159
  %v3165 = vsel %vm3162, %v3155, %v3157
  %v3166 = vsel %vm3162, %v3161, %v3155
  %s3167 = scalar_lea.vmem %s3, 167
  %v3168 = vld [vmem:[%s3167] ss:$8 sm:$0xf]
  %v3170 = vlaneseq
  %v3171 = vshrl.u32 %v3170, 7
  %v3172 = vsub.s32 0, %v3171
  %v3173 = vrot.slane %v3168, %v3172
  %v3174 = vlaneseq
  %v3175 = vshrl.u32 %v3174, 7
  %v3176 = vsub.s32 1, %v3175
  %v3177 = vrot.slane %v3168, %v3176
  %v3178 = vlaneseq
  %v3179 = vshrl.u32 %v3178, 7
  %v3180 = vsub.s32 2, %v3179
  %v3181 = vrot.slane %v3168, %v3180
  %v3182 = vlaneseq
  %v3183 = vshrl.u32 %v3182, 7
  %v3184 = vsub.s32 3, %v3183
  %v3185 = vrot.slane %v3168, %v3184
  %v3190 = vmul.f32 %v3165, %v3173
  %v3191 = vmul.f32 %v3164, %v3177
  %v3192 = vmul.f32 %v3163, %v3181
  %v3193 = vmul.f32 %v3166, %v3185
  %v3194 = vadd.f32 %v3150, %v3190
  %v3195 = vadd.f32 %v3151, %v3191
  %v3196 = vadd.f32 %v3152, %v3192
  %v3197 = vadd.f32 %v3153, %v3193
  %3198 = vrot.lane.b32.xlu0 %v1088, 77
  %v3199 = vpop.permute.xlu0 %3198
  %3200 = vrot.lane.b32.xlu0 %v1089, 77
  %v3201 = vpop.permute.xlu0 %3200
  %3202 = vrot.lane.b32.xlu0 %v1096, 77
  %v3203 = vpop.permute.xlu0 %3202
  %3204 = vrot.lane.b32.xlu0 %v1097, 77
  %v3205 = vpop.permute.xlu0 %3204
  %vm3206 = vcmp.lt.s32.totalorder %v59, 77
  %v3207 = vsel %vm3206, %v3203, %v3205
  %v3208 = vsel %vm3206, %v3201, %v3203
  %v3209 = vsel %vm3206, %v3199, %v3201
  %v3210 = vsel %vm3206, %v3205, %v3199
  %s3211 = scalar_lea.vmem %s3, 192
  %v3212 = vld [vmem:[%s3211] ss:$8 sm:$0xf]
  %v3214 = vlaneseq
  %v3215 = vshrl.u32 %v3214, 7
  %v3216 = vsub.s32 0, %v3215
  %v3217 = vrot.slane %v3212, %v3216
  %v3218 = vlaneseq
  %v3219 = vshrl.u32 %v3218, 7
  %v3220 = vsub.s32 1, %v3219
  %v3221 = vrot.slane %v3212, %v3220
  %v3222 = vlaneseq
  %v3223 = vshrl.u32 %v3222, 7
  %v3224 = vsub.s32 2, %v3223
  %v3225 = vrot.slane %v3212, %v3224
  %v3226 = vlaneseq
  %v3227 = vshrl.u32 %v3226, 7
  %v3228 = vsub.s32 3, %v3227
  %v3229 = vrot.slane %v3212, %v3228
  %v3234 = vmul.f32 %v3209, %v3217
  %v3235 = vmul.f32 %v3208, %v3221
  %v3236 = vmul.f32 %v3207, %v3225
  %v3237 = vmul.f32 %v3210, %v3229
  %v3238 = vadd.f32 %v3194, %v3234
  %v3239 = vadd.f32 %v3195, %v3235
  %v3240 = vadd.f32 %v3196, %v3236
  %v3241 = vadd.f32 %v3197, %v3237
  %v3242 = vadd.f32 %v3238, %v3240
  %v3243 = vadd.f32 %v3239, %v3241
  %v3244 = vxor.u32 %v3242, 2147483648
  %v3245 = vxor.u32 %v3243, 2147483648
  %v3246 = vmul.f32 %v3244, 1.442695
  %v3247 = vpow.pop %v3246
  %v3248 = vmul.f32 %v3245, 1.442695
  %v3249 = vpow.pop %v3248
  %v3250 = vadd.f32 %v3247, 1.0
  %v3251 = vadd.f32 %v3249, 1.0
  %v3252 = vrcp.pop %v3250
  %v3253 = vmul.f32 1.0, %v3252
  %v3254 = vrcp.pop %v3251
  %v3255 = vmul.f32 1.0, %v3254
  %v3256 = vld [vmem:[%s4] sm:$0xff]
  %v3257 = vld [vmem:[%s4 + $0x8] sm:$0xff]
  %v3258 = vld [vmem:[%s4 + $0x10] sm:$0xff]
  %v3259 = vld [vmem:[%s4 + $0x18] sm:$0xff]
  %v3260 = vld [vmem:[%s4 + $0x20] sm:$0xff]
  %v3261 = vld [vmem:[%s4 + $0x28] sm:$0xff]
  %v3262 = vld [vmem:[%s4 + $0x30] sm:$0xff]
  %v3263 = vld [vmem:[%s4 + $0x38] sm:$0xff]
  %v3266 = vcombine.low %v3253, %v3255
  %v3268 = vunpack.c.l.s4 1966171168
  %v3269 = vunpack.c.0.s8 %v3268
  %v3270 = vlaneseq
  %v3271 = vshrl.u32 %v3270, 7
  %v3272 = vsub.s32 %v3269, %v3271
  %v3273 = vrot.slane %v3266, %v3272
  %v3274 = vcombine.high %v3273, %v3273
  %v3276 = vunpack.c.l.s4 1966171168
  %v3277 = vunpack.c.0.s8 %v3276
  %v3278 = vlaneseq
  %v3279 = vshrl.u32 %v3278, 7
  %v3280 = vsub.s32 %v3277, %v3279
  %v3281 = vrot.slane %v3273, %v3280
  %v3283 = vunpack.c.l.s4 1966171168
  %v3284 = vunpack.c.0.s8 %v3283
  %v3285 = vlaneseq
  %v3286 = vshrl.u32 %v3285, 7
  %v3287 = vsub.s32 %v3284, %v3286
  %v3288 = vrot.slane %v3274, %v3287
  %v3289 = vlaneseq
  %v3290 = vshrl.u32 %v3289, 7
  %v3291 = vsub.s32 0, %v3290
  %v3292 = vrot.slane %v3281, %v3291
  %v3293 = vlaneseq
  %v3294 = vshrl.u32 %v3293, 7
  %v3295 = vsub.s32 1, %v3294
  %v3296 = vrot.slane %v3281, %v3295
  %v3297 = vlaneseq
  %v3298 = vshrl.u32 %v3297, 7
  %v3299 = vsub.s32 0, %v3298
  %v3300 = vrot.slane %v3288, %v3299
  %v3301 = vlaneseq
  %v3302 = vshrl.u32 %v3301, 7
  %v3303 = vsub.s32 1, %v3302
  %v3304 = vrot.slane %v3288, %v3303
  %v3309 = vmul.f32 %v3256, %v3292
  %v3310 = vmul.f32 %v3257, %v3296
  %v3311 = vmul.f32 %v3258, %v3292
  %v3312 = vmul.f32 %v3259, %v3296
  %v3313 = vmul.f32 %v3260, %v3300
  %v3314 = vmul.f32 %v3261, %v3304
  %v3315 = vmul.f32 %v3262, %v3300
  %v3316 = vmul.f32 %v3263, %v3304
  %3317 = vst [vmem:[%s4] sm:$0xff] %v3309
  %3318 = vst [vmem:[%s4 + $0x8] sm:$0xff] %v3310
  %3319 = vst [vmem:[%s4 + $0x10] sm:$0xff] %v3311
  %3320 = vst [vmem:[%s4 + $0x18] sm:$0xff] %v3312
  %3321 = vst [vmem:[%s4 + $0x20] sm:$0xff] %v3313
  %3322 = vst [vmem:[%s4 + $0x28] sm:$0xff] %v3314
  %3323 = vst [vmem:[%s4 + $0x30] sm:$0xff] %v3315
  %3324 = vst [vmem:[%s4 + $0x38] sm:$0xff] %v3316
  // Predicated region
  $region18: #{cbam_block_pallas.1} parent=0 // pred_check
    _
  $region19: #{cbam_block_pallas.1} parent=0 // pred_check_branch
    %3326 = sbr.rel (0) target = $region21
  $region20: #{cbam_block_pallas.1} parent=0 // pred_region
    _
  $region21: #{cbam_block_pallas.1} parent=0 // pred_fallthru
    _
  // Predicated region
  $region22: #{cbam_block_pallas.1} parent=0 // pred_check
    _
  $region23: #{cbam_block_pallas.1} parent=0 // pred_check_branch
    %3328 = sbr.rel (0) target = $region25
  $region24: #{cbam_block_pallas.1} parent=0 // pred_region
    _
  $region25: #{cbam_block_pallas.1} parent=0 // pred_fallthru
    _

</llo_original>
